<compile_context>
chip_gen: v7x
topology: tpu7x:2x2x1
jax: 0.10.0
libtpu: 0.0.40
codegen_flags: <defaults>
</compile_context>

<pallas_src>
import math
import functools

import jax
import jax.numpy as jnp
from jax.experimental import pallas as pl
from jax.experimental.pallas import tpu as pltpu


# ---------------------------------------------------------------------------
# Kernel
# ---------------------------------------------------------------------------
def _multihead_kernel(q_ref, k_ref, v_ref,
                      wq_ref, bq_ref, wk_ref, bk_ref, wv_ref, bv_ref,
                      o_ref, *, heads):
    # q_ref: (Bt, Lq, Cin); k_ref/v_ref: (Bt, Lk, Cin)
    # w*_ref: dense block-diagonal (Cin, Cout); b*_ref: (1, Cout)
    Bt, Lq, Cin = q_ref.shape
    _, Lk, _ = k_ref.shape
    Cout = o_ref.shape[-1]
    d = Cout // heads
    in_dtype = q_ref.dtype

    # Flatten batch*seq so each projection is ONE MXU matmul (f32 accumulation).
    q2 = q_ref[...].reshape(Bt * Lq, Cin)
    k2 = k_ref[...].reshape(Bt * Lk, Cin)
    v2 = v_ref[...].reshape(Bt * Lk, Cin)

    def proj(x, w_ref, b_ref):
        y = jnp.dot(x, w_ref[...], preferred_element_type=jnp.float32)
        return y + b_ref[...].astype(jnp.float32)

    # Note: 1/sqrt(d) is already folded into wq/bq on the host side.
    Q = proj(q2, wq_ref, bq_ref).reshape(Bt, Lq, Cout)
    K = proj(k2, wk_ref, bk_ref).reshape(Bt, Lk, Cout)
    V = proj(v2, wv_ref, bv_ref).reshape(Bt, Lk, Cout)

    # Keep MXU operands in the input dtype (bf16-native on v6e/v7x); softmax stays f32.
    if in_dtype == jnp.float32:
        Qc, Kc, Vc = Q, K, V
        cast_p = lambda x: x
    else:
        Qc, Kc, Vc = Q.astype(in_dtype), K.astype(in_dtype), V.astype(in_dtype)
        cast_p = lambda x: x.astype(in_dtype)

    # Static unroll over heads; contexts are collected and stored once (lane-dense).
    ctxs = []
    for h in range(heads):
        qh = Qc[:, :, h * d:(h + 1) * d]          # (Bt, Lq, d)
        kh = Kc[:, :, h * d:(h + 1) * d]          # (Bt, Lk, d)
        vh = Vc[:, :, h * d:(h + 1) * d]          # (Bt, Lk, d)

        # Batched score over the batch tile; scale already folded into Q.
        s = jnp.einsum('bqd,bkd->bqk', qh, kh,
                       preferred_element_type=jnp.float32)   # (Bt, Lq, Lk)

        # restricted_softmax (margin = 0):
        #   src_max = clamp(max(score), min=0)
        #   e = exp(score - src_max); e / (sum(e) + exp(0 - src_max))
        smax = jnp.maximum(jnp.max(s, axis=-1, keepdims=True), 0.0)
        e = jnp.exp(s - smax)
        denom = jnp.sum(e, axis=-1, keepdims=True) + jnp.exp(-smax)
        attn = e * pl.reciprocal(denom, approx=True)          # EUP reciprocal
        # dropout: p = 0 by default -> identity

        ctx = jnp.einsum('bqk,bkd->bqd', cast_p(attn), vh,
                         preferred_element_type=jnp.float32)  # (Bt, Lq, d)
        ctxs.append(ctx)

    # Single full-width store (no per-head lane-masked partial stores).
    out_full = ctxs[0] if heads == 1 else jnp.concatenate(ctxs, axis=-1)
    o_ref[...] = out_full.astype(o_ref.dtype)


# ---------------------------------------------------------------------------
# Wrapper helpers
# ---------------------------------------------------------------------------
def _dense_weight(w):
    """(G, Cin/G, Cout/G) grouped weight -> dense block-diagonal (Cin, Cout)."""
    G, cin_g, cout_g = w.shape
    if G == 1:
        return w[0]
    dense = jnp.zeros((G * cin_g, G * cout_g), w.dtype)
    for g in range(G):
        dense = dense.at[g * cin_g:(g + 1) * cin_g,
                         g * cout_g:(g + 1) * cout_g].set(w[g])
    return dense


def _choose_block_b(B, Lq, Lk, Cin, Cout, itemsize, budget_bytes=24 << 20):
    """Largest divisor of B whose blocks (double-buffered) fit a conservative
    VMEM budget (safe on v7x's smaller VMEM), keeping >=2 grid steps when possible
    so v7x's two TensorCores both get work."""
    per_b = 2 * ((Lq + 2 * Lk) * Cin + Lq * Cout) * itemsize      # double-buffered blocks
    per_b += 4 * ((Lq + 2 * Lk) * Cout + 2 * Lq * Lk)             # f32 intermediates
    cap = max(1, budget_bytes // max(per_b, 1))
    if B >= 2:
        cap = min(cap, B // 2)
    bt = 1
    for c in range(1, min(B, cap) + 1):
        if B % c == 0:
            bt = c
    return bt


def _vmem_estimate(block_b, Lq, Lk, Cin, Cout, itemsize):
    seq_in = block_b * (Lq + 2 * Lk) * Cin * itemsize
    out_b = block_b * Lq * Cout * itemsize
    weights = 3 * (Cin * Cout + Cout) * itemsize
    interm = 4 * block_b * ((Lq + 2 * Lk) * Cout + 2 * Lq * Lk)
    return 2 * (seq_in + out_b + weights) + interm


# ---------------------------------------------------------------------------
# Public forward
# ---------------------------------------------------------------------------
def multihead_forward(query, key, value, params, *, heads, groups, block_b=None):
    """query: (B, Lq, Cin); key/value: (B, Lk, Cin). Returns (B, Lq, Cout)."""
    wq, bq, wk, bk, wv, bv = params
    B, Lq, Cin = query.shape
    Bk, Lk, Cink = key.shape
    Bv, Lv, Cinv = value.shape
    G, cin_g, cout_g = wq.shape
    Cout = G * cout_g

    # Fail loudly on bad configs instead of producing wrong slices.
    assert Bk == B and Bv == B and Lv == Lk
    assert Cink == Cin and Cinv == Cin
    assert G == groups and cin_g * G == Cin
    assert Cin % groups == 0 and Cout % groups == 0
    assert Cin % heads == 0 and Cout % heads == 0
    assert max(groups, heads) % min(groups, heads) == 0

    d = Cout // heads
    scale = 1.0 / math.sqrt(d)
    dtype = query.dtype

    # Dense block-diagonal weights; fold the softmax scale into the Q projection.
    wq_d = (_dense_weight(wq) * scale).astype(dtype)
    bq_s = (bq * scale).astype(dtype)
    wk_d = _dense_weight(wk).astype(dtype)
    wv_d = _dense_weight(wv).astype(dtype)
    bk_c = bk.astype(dtype)
    bv_c = bv.astype(dtype)

    itemsize = jnp.dtype(dtype).itemsize
    if block_b is None:
        block_b = _choose_block_b(B, Lq, Lk, Cin, Cout, itemsize)
    assert B % block_b == 0, "block_b must divide batch"
    grid = (B // block_b,)

    est = _vmem_estimate(block_b, Lq, Lk, Cin, Cout, itemsize)
    # Explicit scoped-VMEM limit; stays within v7x's 64 MiB physical per TC.
    vmem_limit = int(min(48 << 20, max(32 << 20, 2 * est)))

    kernel = functools.partial(_multihead_kernel, heads=heads)

    seq_spec = lambda L, C: pl.BlockSpec((block_b, L, C), lambda b: (b, 0, 0))
    w_spec = pl.BlockSpec((Cin, Cout), lambda b: (0, 0))
    b_spec = pl.BlockSpec((1, Cout), lambda b: (0, 0))

    return pl.pallas_call(
        kernel,
        out_shape=jax.ShapeDtypeStruct((B, Lq, Cout), dtype),
        grid_spec=pltpu.PrefetchScalarGridSpec(
            num_scalar_prefetch=0,
            grid=grid,
            in_specs=[seq_spec(Lq, Cin), seq_spec(Lk, Cin), seq_spec(Lk, Cin),
                      w_spec, b_spec, w_spec, b_spec, w_spec, b_spec],
            out_specs=pl.BlockSpec((block_b, Lq, Cout), lambda b: (b, 0, 0)),
        ),
        compiler_params=pltpu.CompilerParams(
            dimension_semantics=("parallel",),
            vmem_limit_bytes=vmem_limit),
    )(query, key, value, wq_d, bq_s, wk_d, bk_c, wv_d, bv_c)


# ---------------------------------------------------------------------------
# Pure-JAX reference (mirrors the PyTorch MultiHead.forward)
# ---------------------------------------------------------------------------
def multihead_reference(query, key, value, params, *, heads, groups):
    wq, bq, wk, bk, wv, bv = params

    def lin(x, w, b):
        G = w.shape[0]
        if G == 1:
            out = x @ w[0]
        else:
            cin_g = x.shape[-1] // G
            xs = x.reshape(x.shape[:-1] + (G, cin_g))
            out = jnp.einsum('blgi,gio->blgo', xs, w)
            out = out.reshape(x.shape[:-1] + (G * w.shape[2],))
        return out + b[0]

    Q, K, V = lin(query, wq, bq), lin(key, wk, bk), lin(value, wv, bv)
    B, Lq, Cout = Q.shape
    d = Cout // heads
    Qh = Q.reshape(B, Lq, heads, d).transpose(0, 2, 1, 3)
    Kh = K.reshape(B, K.shape[1], heads, d).transpose(0, 2, 1, 3)
    Vh = V.reshape(B, V.shape[1], heads, d).transpose(0, 2, 1, 3)
    score = jnp.einsum('bhqd,bhkd->bhqk', Qh, Kh) / math.sqrt(d)
    smax = jnp.maximum(jnp.max(score, axis=-1, keepdims=True), 0.0)
    e = jnp.exp(score - smax)
    attn = e / (jnp.sum(e, axis=-1, keepdims=True) + jnp.exp(-smax))
    out = jnp.einsum('bhqk,bhkd->bhqd', attn, Vh)
    return out.transpose(0, 2, 1, 3).reshape(B, Lq, Cout)


# ---------------------------------------------------------------------------
# Test
# ---------------------------------------------------------------------------
if __name__ == "__main__":
    def run_case(case_key, B, Lq, Lk, Cin, Cout, heads, groups):
        ks = jax.random.split(case_key, 9)
        fan = Cin // groups
        wb = math.sqrt(1.0 / fan)     # kaiming_uniform(fan, a=sqrt(5)) bound
        bb = 1.0 / math.sqrt(fan)     # uniform(fan) bias bound

        def make_w(k):
            return jax.random.uniform(k, (groups, Cin // groups, Cout // groups),
                                      jnp.float32, -wb, wb)

        def make_b(k):
            return jax.random.uniform(k, (1, Cout), jnp.float32, -bb, bb)

        params = (make_w(ks[0]), make_b(ks[1]),
                  make_w(ks[2]), make_b(ks[3]),
                  make_w(ks[4]), make_b(ks[5]))

        query = jax.random.normal(ks[6], (B, Lq, Cin), jnp.float32)
        key_in = jax.random.normal(ks[7], (B, Lk, Cin), jnp.float32)
        value = jax.random.normal(ks[8], (B, Lk, Cin), jnp.float32)

        out = multihead_forward(query, key_in, value, params,
                                heads=heads, groups=groups)
        out = jax.block_until_ready(out)
        ref = multihead_reference(query, key_in, value, params,
                                  heads=heads, groups=groups)
        assert out.shape == (B, Lq, Cout)
        # tolerance relaxed slightly for the approximate (EUP) reciprocal
        assert jnp.allclose(out, ref, atol=2e-3, rtol=2e-3), \
            f"mismatch vs reference (B={B}, heads={heads}, groups={groups})"

    root = jax.random.PRNGKey(0)
    k1, k2 = jax.random.split(root, 2)

    # MultiHead(in_channels=32, out_channels=32, heads=4, groups=1)
    run_case(k1, B=8, Lq=8, Lk=8, Cin=32, Cout=32, heads=4, groups=1)
    # MultiHead(in_channels=32, out_channels=32, heads=2, groups=2), Lq != Lk
    run_case(k2, B=8, Lq=8, Lk=16, Cin=32, Cout=32, heads=2, groups=2)

    print("KERNEL_OK")
</pallas_src>

<mosaic_0001>
module attributes {stable_mosaic.version = 11 : i64} {
  func.func @_multihead_kernel(%arg0: i32, %arg1: memref<4x8x32xf32, #tpu.memory_space<vmem>>, %arg2: memref<4x8x32xf32, #tpu.memory_space<vmem>>, %arg3: memref<4x8x32xf32, #tpu.memory_space<vmem>>, %arg4: memref<32x32xf32, #tpu.memory_space<vmem>>, %arg5: memref<1x32xf32, #tpu.memory_space<vmem>>, %arg6: memref<32x32xf32, #tpu.memory_space<vmem>>, %arg7: memref<1x32xf32, #tpu.memory_space<vmem>>, %arg8: memref<32x32xf32, #tpu.memory_space<vmem>>, %arg9: memref<1x32xf32, #tpu.memory_space<vmem>>, %arg10: memref<4x8x32xf32, #tpu.memory_space<vmem>>) attributes {dimension_semantics = [#tpu.dimension_semantics<parallel>], iteration_bounds = array<i64: 2>, scalar_prefetch = 0 : i64, scratch_operands = 0 : i64, tpu.core_type = #tpu.core_type<tc>, window_params = [{transform_indices = @transform_0, window_bounds = array<i64: 4, 8, 32>}, {transform_indices = @transform_1, window_bounds = array<i64: 4, 8, 32>}, {transform_indices = @transform_2, window_bounds = array<i64: 4, 8, 32>}, {pipeline_mode = #tpu.pipeline_mode<synchronous>, transform_indices = @transform_3, window_bounds = array<i64: 32, 32>}, {pipeline_mode = #tpu.pipeline_mode<synchronous>, transform_indices = @transform_4, window_bounds = array<i64: 1, 32>}, {pipeline_mode = #tpu.pipeline_mode<synchronous>, transform_indices = @transform_5, window_bounds = array<i64: 32, 32>}, {pipeline_mode = #tpu.pipeline_mode<synchronous>, transform_indices = @transform_6, window_bounds = array<i64: 1, 32>}, {pipeline_mode = #tpu.pipeline_mode<synchronous>, transform_indices = @transform_7, window_bounds = array<i64: 32, 32>}, {pipeline_mode = #tpu.pipeline_mode<synchronous>, transform_indices = @transform_8, window_bounds = array<i64: 1, 32>}, {transform_indices = @transform_9, window_bounds = array<i64: 4, 8, 32>}]} {
    %c0 = arith.constant 0 : index
    %c0_0 = arith.constant 0 : index
    %c0_1 = arith.constant 0 : index
    %0 = vector.load %arg1[%c0, %c0_0, %c0_1] : memref<4x8x32xf32, #tpu.memory_space<vmem>>, vector<4x8x32xf32>
    %1 = vector.shape_cast %0 : vector<4x8x32xf32> to vector<32x32xf32>
    %c0_2 = arith.constant 0 : index
    %c0_3 = arith.constant 0 : index
    %c0_4 = arith.constant 0 : index
    %2 = vector.load %arg2[%c0_2, %c0_3, %c0_4] : memref<4x8x32xf32, #tpu.memory_space<vmem>>, vector<4x8x32xf32>
    %3 = vector.shape_cast %2 : vector<4x8x32xf32> to vector<32x32xf32>
    %c0_5 = arith.constant 0 : index
    %c0_6 = arith.constant 0 : index
    %c0_7 = arith.constant 0 : index
    %4 = vector.load %arg3[%c0_5, %c0_6, %c0_7] : memref<4x8x32xf32, #tpu.memory_space<vmem>>, vector<4x8x32xf32>
    %5 = vector.shape_cast %4 : vector<4x8x32xf32> to vector<32x32xf32>
    %c0_8 = arith.constant 0 : index
    %c0_9 = arith.constant 0 : index
    %6 = vector.load %arg4[%c0_8, %c0_9] : memref<32x32xf32, #tpu.memory_space<vmem>>, vector<32x32xf32>
    %cst = arith.constant dense<0.000000e+00> : vector<32x32xf32>
    %7 = tpu.matmul %1, %6, %cst {dimension_numbers = #tpu.dot_dimension_numbers<[1], [0], [0], [1], [0, 0, 1, 1], [], []>} : vector<32x32xf32>, vector<32x32xf32>, vector<32x32xf32> -> vector<32x32xf32>
    %c0_10 = arith.constant 0 : index
    %c0_11 = arith.constant 0 : index
    %8 = vector.load %arg5[%c0_10, %c0_11] : memref<1x32xf32, #tpu.memory_space<vmem>>, vector<1x32xf32>
    %9 = vector.broadcast %8 : vector<1x32xf32> to vector<32x32xf32>
    %10 = arith.addf %7, %9 : vector<32x32xf32>
    %11 = vector.shape_cast %10 : vector<32x32xf32> to vector<4x8x32xf32>
    %c0_12 = arith.constant 0 : index
    %c0_13 = arith.constant 0 : index
    %12 = vector.load %arg6[%c0_12, %c0_13] : memref<32x32xf32, #tpu.memory_space<vmem>>, vector<32x32xf32>
    %cst_14 = arith.constant dense<0.000000e+00> : vector<32x32xf32>
    %13 = tpu.matmul %3, %12, %cst_14 {dimension_numbers = #tpu.dot_dimension_numbers<[1], [0], [0], [1], [0, 0, 1, 1], [], []>} : vector<32x32xf32>, vector<32x32xf32>, vector<32x32xf32> -> vector<32x32xf32>
    %c0_15 = arith.constant 0 : index
    %c0_16 = arith.constant 0 : index
    %14 = vector.load %arg7[%c0_15, %c0_16] : memref<1x32xf32, #tpu.memory_space<vmem>>, vector<1x32xf32>
    %15 = vector.broadcast %14 : vector<1x32xf32> to vector<32x32xf32>
    %16 = arith.addf %13, %15 : vector<32x32xf32>
    %17 = vector.shape_cast %16 : vector<32x32xf32> to vector<4x8x32xf32>
    %c0_17 = arith.constant 0 : index
    %c0_18 = arith.constant 0 : index
    %18 = vector.load %arg8[%c0_17, %c0_18] : memref<32x32xf32, #tpu.memory_space<vmem>>, vector<32x32xf32>
    %cst_19 = arith.constant dense<0.000000e+00> : vector<32x32xf32>
    %19 = tpu.matmul %5, %18, %cst_19 {dimension_numbers = #tpu.dot_dimension_numbers<[1], [0], [0], [1], [0, 0, 1, 1], [], []>} : vector<32x32xf32>, vector<32x32xf32>, vector<32x32xf32> -> vector<32x32xf32>
    %c0_20 = arith.constant 0 : index
    %c0_21 = arith.constant 0 : index
    %20 = vector.load %arg9[%c0_20, %c0_21] : memref<1x32xf32, #tpu.memory_space<vmem>>, vector<1x32xf32>
    %21 = vector.broadcast %20 : vector<1x32xf32> to vector<32x32xf32>
    %22 = arith.addf %19, %21 : vector<32x32xf32>
    %23 = vector.shape_cast %22 : vector<32x32xf32> to vector<4x8x32xf32>
    %24 = vector.extract_strided_slice %11 {offsets = [0, 0, 0], sizes = [4, 8, 8], strides = [1, 1, 1]} : vector<4x8x32xf32> to vector<4x8x8xf32>
    %25 = vector.extract_strided_slice %17 {offsets = [0, 0, 0], sizes = [4, 8, 8], strides = [1, 1, 1]} : vector<4x8x32xf32> to vector<4x8x8xf32>
    %26 = vector.extract_strided_slice %23 {offsets = [0, 0, 0], sizes = [4, 8, 8], strides = [1, 1, 1]} : vector<4x8x32xf32> to vector<4x8x8xf32>
    "tpu.trace_start"() <{level = 10 : i32, message = "bqd,bkd->bqk"}> : () -> ()
    %cst_22 = arith.constant dense<0.000000e+00> : vector<4x8x8xf32>
    %27 = tpu.matmul %24, %25, %cst_22 {dimension_numbers = #tpu.dot_dimension_numbers<[2], [2], [1], [1], [0, 0, 0, 1, 1, 1], [0], [0]>} : vector<4x8x8xf32>, vector<4x8x8xf32>, vector<4x8x8xf32> -> vector<4x8x8xf32>
    "tpu.trace_stop"() : () -> ()
    %cst_23 = arith.constant dense<0xFF800000> : vector<4x8xf32>
    %28 = vector.multi_reduction <maximumf>, %27, %cst_23 [2] : vector<4x8x8xf32> to vector<4x8xf32>
    %29 = vector.shape_cast %28 : vector<4x8xf32> to vector<4x8x1xf32>
    %cst_24 = arith.constant 0.000000e+00 : f32
    %30 = vector.broadcast %cst_24 : f32 to vector<4x8x1xf32>
    %31 = arith.maximumf %29, %30 : vector<4x8x1xf32>
    %32 = vector.broadcast %31 : vector<4x8x1xf32> to vector<4x8x8xf32>
    %33 = arith.subf %27, %32 : vector<4x8x8xf32>
    %34 = math.exp %33 : vector<4x8x8xf32>
    %cst_25 = arith.constant dense<0.000000e+00> : vector<4x8xf32>
    %35 = vector.multi_reduction <add>, %34, %cst_25 [2] : vector<4x8x8xf32> to vector<4x8xf32>
    %36 = vector.shape_cast %35 : vector<4x8xf32> to vector<4x8x1xf32>
    %cst_26 = arith.constant 0.000000e+00 : f32
    %37 = vector.broadcast %cst_26 : f32 to vector<4x8x1xf32>
    %38 = arith.subf %37, %31 : vector<4x8x1xf32>
    %39 = math.exp %38 : vector<4x8x1xf32>
    %40 = arith.addf %36, %39 : vector<4x8x1xf32>
    %41 = tpu.reciprocal %40 {approx = true} : vector<4x8x1xf32> -> vector<4x8x1xf32>
    %42 = vector.broadcast %41 : vector<4x8x1xf32> to vector<4x8x8xf32>
    %43 = arith.mulf %34, %42 : vector<4x8x8xf32>
    "tpu.trace_start"() <{level = 10 : i32, message = "bqk,bkd->bqd"}> : () -> ()
    %cst_27 = arith.constant dense<0.000000e+00> : vector<4x8x8xf32>
    %44 = tpu.matmul %43, %26, %cst_27 {dimension_numbers = #tpu.dot_dimension_numbers<[2], [1], [1], [2], [0, 0, 0, 1, 1, 2], [0], [0]>} : vector<4x8x8xf32>, vector<4x8x8xf32>, vector<4x8x8xf32> -> vector<4x8x8xf32>
    "tpu.trace_stop"() : () -> ()
    %45 = vector.extract_strided_slice %11 {offsets = [0, 0, 8], sizes = [4, 8, 8], strides = [1, 1, 1]} : vector<4x8x32xf32> to vector<4x8x8xf32>
    %46 = vector.extract_strided_slice %17 {offsets = [0, 0, 8], sizes = [4, 8, 8], strides = [1, 1, 1]} : vector<4x8x32xf32> to vector<4x8x8xf32>
    %47 = vector.extract_strided_slice %23 {offsets = [0, 0, 8], sizes = [4, 8, 8], strides = [1, 1, 1]} : vector<4x8x32xf32> to vector<4x8x8xf32>
    "tpu.trace_start"() <{level = 10 : i32, message = "bqd,bkd->bqk"}> : () -> ()
    %cst_28 = arith.constant dense<0.000000e+00> : vector<4x8x8xf32>
    %48 = tpu.matmul %45, %46, %cst_28 {dimension_numbers = #tpu.dot_dimension_numbers<[2], [2], [1], [1], [0, 0, 0, 1, 1, 1], [0], [0]>} : vector<4x8x8xf32>, vector<4x8x8xf32>, vector<4x8x8xf32> -> vector<4x8x8xf32>
    "tpu.trace_stop"() : () -> ()
    %cst_29 = arith.constant dense<0xFF800000> : vector<4x8xf32>
    %49 = vector.multi_reduction <maximumf>, %48, %cst_29 [2] : vector<4x8x8xf32> to vector<4x8xf32>
    %50 = vector.shape_cast %49 : vector<4x8xf32> to vector<4x8x1xf32>
    %cst_30 = arith.constant 0.000000e+00 : f32
    %51 = vector.broadcast %cst_30 : f32 to vector<4x8x1xf32>
    %52 = arith.maximumf %50, %51 : vector<4x8x1xf32>
    %53 = vector.broadcast %52 : vector<4x8x1xf32> to vector<4x8x8xf32>
    %54 = arith.subf %48, %53 : vector<4x8x8xf32>
    %55 = math.exp %54 : vector<4x8x8xf32>
    %cst_31 = arith.constant dense<0.000000e+00> : vector<4x8xf32>
    %56 = vector.multi_reduction <add>, %55, %cst_31 [2] : vector<4x8x8xf32> to vector<4x8xf32>
    %57 = vector.shape_cast %56 : vector<4x8xf32> to vector<4x8x1xf32>
    %cst_32 = arith.constant 0.000000e+00 : f32
    %58 = vector.broadcast %cst_32 : f32 to vector<4x8x1xf32>
    %59 = arith.subf %58, %52 : vector<4x8x1xf32>
    %60 = math.exp %59 : vector<4x8x1xf32>
    %61 = arith.addf %57, %60 : vector<4x8x1xf32>
    %62 = tpu.reciprocal %61 {approx = true} : vector<4x8x1xf32> -> vector<4x8x1xf32>
    %63 = vector.broadcast %62 : vector<4x8x1xf32> to vector<4x8x8xf32>
    %64 = arith.mulf %55, %63 : vector<4x8x8xf32>
    "tpu.trace_start"() <{level = 10 : i32, message = "bqk,bkd->bqd"}> : () -> ()
    %cst_33 = arith.constant dense<0.000000e+00> : vector<4x8x8xf32>
    %65 = tpu.matmul %64, %47, %cst_33 {dimension_numbers = #tpu.dot_dimension_numbers<[2], [1], [1], [2], [0, 0, 0, 1, 1, 2], [0], [0]>} : vector<4x8x8xf32>, vector<4x8x8xf32>, vector<4x8x8xf32> -> vector<4x8x8xf32>
    "tpu.trace_stop"() : () -> ()
    %66 = vector.extract_strided_slice %11 {offsets = [0, 0, 16], sizes = [4, 8, 8], strides = [1, 1, 1]} : vector<4x8x32xf32> to vector<4x8x8xf32>
    %67 = vector.extract_strided_slice %17 {offsets = [0, 0, 16], sizes = [4, 8, 8], strides = [1, 1, 1]} : vector<4x8x32xf32> to vector<4x8x8xf32>
    %68 = vector.extract_strided_slice %23 {offsets = [0, 0, 16], sizes = [4, 8, 8], strides = [1, 1, 1]} : vector<4x8x32xf32> to vector<4x8x8xf32>
    "tpu.trace_start"() <{level = 10 : i32, message = "bqd,bkd->bqk"}> : () -> ()
    %cst_34 = arith.constant dense<0.000000e+00> : vector<4x8x8xf32>
    %69 = tpu.matmul %66, %67, %cst_34 {dimension_numbers = #tpu.dot_dimension_numbers<[2], [2], [1], [1], [0, 0, 0, 1, 1, 1], [0], [0]>} : vector<4x8x8xf32>, vector<4x8x8xf32>, vector<4x8x8xf32> -> vector<4x8x8xf32>
    "tpu.trace_stop"() : () -> ()
    %cst_35 = arith.constant dense<0xFF800000> : vector<4x8xf32>
    %70 = vector.multi_reduction <maximumf>, %69, %cst_35 [2] : vector<4x8x8xf32> to vector<4x8xf32>
    %71 = vector.shape_cast %70 : vector<4x8xf32> to vector<4x8x1xf32>
    %cst_36 = arith.constant 0.000000e+00 : f32
    %72 = vector.broadcast %cst_36 : f32 to vector<4x8x1xf32>
    %73 = arith.maximumf %71, %72 : vector<4x8x1xf32>
    %74 = vector.broadcast %73 : vector<4x8x1xf32> to vector<4x8x8xf32>
    %75 = arith.subf %69, %74 : vector<4x8x8xf32>
    %76 = math.exp %75 : vector<4x8x8xf32>
    %cst_37 = arith.constant dense<0.000000e+00> : vector<4x8xf32>
    %77 = vector.multi_reduction <add>, %76, %cst_37 [2] : vector<4x8x8xf32> to vector<4x8xf32>
    %78 = vector.shape_cast %77 : vector<4x8xf32> to vector<4x8x1xf32>
    %cst_38 = arith.constant 0.000000e+00 : f32
    %79 = vector.broadcast %cst_38 : f32 to vector<4x8x1xf32>
    %80 = arith.subf %79, %73 : vector<4x8x1xf32>
    %81 = math.exp %80 : vector<4x8x1xf32>
    %82 = arith.addf %78, %81 : vector<4x8x1xf32>
    %83 = tpu.reciprocal %82 {approx = true} : vector<4x8x1xf32> -> vector<4x8x1xf32>
    %84 = vector.broadcast %83 : vector<4x8x1xf32> to vector<4x8x8xf32>
    %85 = arith.mulf %76, %84 : vector<4x8x8xf32>
    "tpu.trace_start"() <{level = 10 : i32, message = "bqk,bkd->bqd"}> : () -> ()
    %cst_39 = arith.constant dense<0.000000e+00> : vector<4x8x8xf32>
    %86 = tpu.matmul %85, %68, %cst_39 {dimension_numbers = #tpu.dot_dimension_numbers<[2], [1], [1], [2], [0, 0, 0, 1, 1, 2], [0], [0]>} : vector<4x8x8xf32>, vector<4x8x8xf32>, vector<4x8x8xf32> -> vector<4x8x8xf32>
    "tpu.trace_stop"() : () -> ()
    %87 = vector.extract_strided_slice %11 {offsets = [0, 0, 24], sizes = [4, 8, 8], strides = [1, 1, 1]} : vector<4x8x32xf32> to vector<4x8x8xf32>
    %88 = vector.extract_strided_slice %17 {offsets = [0, 0, 24], sizes = [4, 8, 8], strides = [1, 1, 1]} : vector<4x8x32xf32> to vector<4x8x8xf32>
    %89 = vector.extract_strided_slice %23 {offsets = [0, 0, 24], sizes = [4, 8, 8], strides = [1, 1, 1]} : vector<4x8x32xf32> to vector<4x8x8xf32>
    "tpu.trace_start"() <{level = 10 : i32, message = "bqd,bkd->bqk"}> : () -> ()
    %cst_40 = arith.constant dense<0.000000e+00> : vector<4x8x8xf32>
    %90 = tpu.matmul %87, %88, %cst_40 {dimension_numbers = #tpu.dot_dimension_numbers<[2], [2], [1], [1], [0, 0, 0, 1, 1, 1], [0], [0]>} : vector<4x8x8xf32>, vector<4x8x8xf32>, vector<4x8x8xf32> -> vector<4x8x8xf32>
    "tpu.trace_stop"() : () -> ()
    %cst_41 = arith.constant dense<0xFF800000> : vector<4x8xf32>
    %91 = vector.multi_reduction <maximumf>, %90, %cst_41 [2] : vector<4x8x8xf32> to vector<4x8xf32>
    %92 = vector.shape_cast %91 : vector<4x8xf32> to vector<4x8x1xf32>
    %cst_42 = arith.constant 0.000000e+00 : f32
    %93 = vector.broadcast %cst_42 : f32 to vector<4x8x1xf32>
    %94 = arith.maximumf %92, %93 : vector<4x8x1xf32>
    %95 = vector.broadcast %94 : vector<4x8x1xf32> to vector<4x8x8xf32>
    %96 = arith.subf %90, %95 : vector<4x8x8xf32>
    %97 = math.exp %96 : vector<4x8x8xf32>
    %cst_43 = arith.constant dense<0.000000e+00> : vector<4x8xf32>
    %98 = vector.multi_reduction <add>, %97, %cst_43 [2] : vector<4x8x8xf32> to vector<4x8xf32>
    %99 = vector.shape_cast %98 : vector<4x8xf32> to vector<4x8x1xf32>
    %cst_44 = arith.constant 0.000000e+00 : f32
    %100 = vector.broadcast %cst_44 : f32 to vector<4x8x1xf32>
    %101 = arith.subf %100, %94 : vector<4x8x1xf32>
    %102 = math.exp %101 : vector<4x8x1xf32>
    %103 = arith.addf %99, %102 : vector<4x8x1xf32>
    %104 = tpu.reciprocal %103 {approx = true} : vector<4x8x1xf32> -> vector<4x8x1xf32>
    %105 = vector.broadcast %104 : vector<4x8x1xf32> to vector<4x8x8xf32>
    %106 = arith.mulf %97, %105 : vector<4x8x8xf32>
    "tpu.trace_start"() <{level = 10 : i32, message = "bqk,bkd->bqd"}> : () -> ()
    %cst_45 = arith.constant dense<0.000000e+00> : vector<4x8x8xf32>
    %107 = tpu.matmul %106, %89, %cst_45 {dimension_numbers = #tpu.dot_dimension_numbers<[2], [1], [1], [2], [0, 0, 0, 1, 1, 2], [0], [0]>} : vector<4x8x8xf32>, vector<4x8x8xf32>, vector<4x8x8xf32> -> vector<4x8x8xf32>
    "tpu.trace_stop"() : () -> ()
    %108 = tpu.concatenate %44, %65, %86, %107 in 2 : vector<4x8x8xf32>, vector<4x8x8xf32>, vector<4x8x8xf32>, vector<4x8x8xf32> -> vector<4x8x32xf32>
    %c0_46 = arith.constant 0 : index
    %c0_47 = arith.constant 0 : index
    %c0_48 = arith.constant 0 : index
    %109 = vector.load %arg10[%c0_46, %c0_47, %c0_48] : memref<4x8x32xf32, #tpu.memory_space<vmem>>, vector<4x8x32xf32>
    tpu.vector_store %arg10[%c0_46, %c0_47, %c0_48], %108 {strides = array<i32>} : memref<4x8x32xf32, #tpu.memory_space<vmem>>, vector<4x8x32xf32>,
    return
  }
  func.func @transform_0(%arg0: i32) -> (i32, i32, i32) {
    %c0_i32 = arith.constant 0 : i32
    %c0_i32_0 = arith.constant 0 : i32
    %c0_i32_1 = arith.constant 0 : i32
    return %arg0, %c0_i32, %c0_i32_0 : i32, i32, i32
  }
  func.func @transform_1(%arg0: i32) -> (i32, i32, i32) {
    %c0_i32 = arith.constant 0 : i32
    %c0_i32_0 = arith.constant 0 : i32
    %c0_i32_1 = arith.constant 0 : i32
    return %arg0, %c0_i32, %c0_i32_0 : i32, i32, i32
  }
  func.func @transform_2(%arg0: i32) -> (i32, i32, i32) {
    %c0_i32 = arith.constant 0 : i32
    %c0_i32_0 = arith.constant 0 : i32
    %c0_i32_1 = arith.constant 0 : i32
    return %arg0, %c0_i32, %c0_i32_0 : i32, i32, i32
  }
  func.func @transform_3(%arg0: i32) -> (i32, i32) {
    %c0_i32 = arith.constant 0 : i32
    %c0_i32_0 = arith.constant 0 : i32
    %c0_i32_1 = arith.constant 0 : i32
    return %c0_i32, %c0_i32_0 : i32, i32
  }
  func.func @transform_4(%arg0: i32) -> (i32, i32) {
    %c0_i32 = arith.constant 0 : i32
    %c0_i32_0 = arith.constant 0 : i32
    %c0_i32_1 = arith.constant 0 : i32
    return %c0_i32, %c0_i32_0 : i32, i32
  }
  func.func @transform_5(%arg0: i32) -> (i32, i32) {
    %c0_i32 = arith.constant 0 : i32
    %c0_i32_0 = arith.constant 0 : i32
    %c0_i32_1 = arith.constant 0 : i32
    return %c0_i32, %c0_i32_0 : i32, i32
  }
  func.func @transform_6(%arg0: i32) -> (i32, i32) {
    %c0_i32 = arith.constant 0 : i32
    %c0_i32_0 = arith.constant 0 : i32
    %c0_i32_1 = arith.constant 0 : i32
    return %c0_i32, %c0_i32_0 : i32, i32
  }
  func.func @transform_7(%arg0: i32) -> (i32, i32) {
    %c0_i32 = arith.constant 0 : i32
    %c0_i32_0 = arith.constant 0 : i32
    %c0_i32_1 = arith.constant 0 : i32
    return %c0_i32, %c0_i32_0 : i32, i32
  }
  func.func @transform_8(%arg0: i32) -> (i32, i32) {
    %c0_i32 = arith.constant 0 : i32
    %c0_i32_0 = arith.constant 0 : i32
    %c0_i32_1 = arith.constant 0 : i32
    return %c0_i32, %c0_i32_0 : i32, i32
  }
  func.func @transform_9(%arg0: i32) -> (i32, i32, i32) {
    %c0_i32 = arith.constant 0 : i32
    %c0_i32_0 = arith.constant 0 : i32
    %c0_i32_1 = arith.constant 0 : i32
    return %arg0, %c0_i32, %c0_i32_0 : i32, i32, i32
  }
}

</mosaic_0001>

<llo_original>
// kernel: tpu_custom_call.1
$region0: #{tpu_custom_call.1}
  #allocation0 [shape = 'u32[]', space=smem, size = 0x4, offset = 0x4, fixed_abs, tag = 'smem constant byte address 0x4 - core index']
  #allocation1 [shape = 'u32[144,128]{1,0:T(1,128)}', space=vmem, size = 0x12000, scoped, tag = 'internal scratch']
  %s0 = inlined_call_operand.hbm [shape: f32[8,8,32], index: 0, kind: input, shape index: {}]
  %s1 = inlined_call_operand.hbm [shape: f32[8,8,32], index: 1, kind: input, shape index: {}]
  %s2 = inlined_call_operand.hbm [shape: f32[8,8,32], index: 2, kind: input, shape index: {}]
  %s3 = inlined_call_operand.hbm [shape: f32[32,32], index: 3, kind: input, shape index: {}]
  %s4 = inlined_call_operand.vmem [shape: f32[1,32], index: 4, kind: input, shape index: {}]
  %s5 = inlined_call_operand.hbm [shape: f32[32,32], index: 5, kind: input, shape index: {}]
  %s6 = inlined_call_operand.vmem [shape: f32[1,32], index: 6, kind: input, shape index: {}]
  %s7 = inlined_call_operand.hbm [shape: f32[32,32], index: 7, kind: input, shape index: {}]
  %s8 = inlined_call_operand.vmem [shape: f32[1,32], index: 8, kind: input, shape index: {}]
  %s9 = inlined_call_operand.hbm [shape: f32[8,8,32], index: 9, kind: output, shape index: {}]
  %s10 = sld [smem:[#allocation0]]
  $region93: #{tpu_custom_call.1} parent=0
    _
  %s12 = ssub.s32 1, %s10
  %s13 = scalar_select 0, %s12, %s10
  $region1: #{tpu_custom_call.1} parent=0
    #allocation2 [shape = 'u8[32768]{0}', space=vmem, size = 0x8000, scoped, tag = 'input window, operand 0']
    #allocation3 [shape = 's32[2]{0}', space=sflag, size = 0x8, scoped, tag = 'scoped memory for tpu_custom_call.1']
    #allocation4 [shape = 's32[2]{0}', space=sflag, size = 0x8, scoped, tag = 'scoped memory for tpu_custom_call.1']
    #allocation5 [shape = 'u8[32768]{0}', space=vmem, size = 0x8000, scoped, tag = 'input window, operand 1']
    #allocation6 [shape = 's32[2]{0}', space=sflag, size = 0x8, scoped, tag = 'scoped memory for tpu_custom_call.1']
    #allocation7 [shape = 'u8[32768]{0}', space=vmem, size = 0x8000, scoped, tag = 'input window, operand 2']
    #allocation8 [shape = 'u8[16384]{0}', space=vmem, size = 0x4000, scoped, tag = 'input window, operand 3, single buffered']
    #allocation9 [shape = 's32[1]{0}', space=sflag, size = 0x4, scoped, tag = 'scoped memory for tpu_custom_call.1']
    #allocation10 [shape = 'u8[16384]{0}', space=vmem, size = 0x4000, scoped, tag = 'input window, operand 5, single buffered']
    #allocation11 [shape = 'u8[16384]{0}', space=vmem, size = 0x4000, scoped, tag = 'input window, operand 7, single buffered']
    #allocation12 [shape = 's32[1]{0}', space=sflag, size = 0x4, scoped, tag = 'scoped memory for tpu_custom_call.1']
    #allocation13 [shape = 'u8[32768]{0}', space=vmem, size = 0x8000, scoped, tag = 'output window, operand 0']
    %14 = vsyncpa [#allocation3], 0
    %s15 = scalar_lea.sflag [#allocation3], 1
    %16 = vsyncpa %s15, 0
    %17 = vsyncpa [#allocation6], 0
    %s18 = scalar_lea.sflag [#allocation6], 1
    %19 = vsyncpa %s18, 0
    %20 = vsyncpa [#allocation9], 0
    %21 = vsyncpa [#allocation12], 0
    %22 = vsyncpa [#allocation4], 0
    %s23 = scalar_lea.sflag [#allocation4], 1
    %24 = vsyncpa %s23, 0
    loop: start=0, step=1, limit=4
    $region2: #{tpu_custom_call.1} parent=1 // loop_pre_header
      _
    $region3: #{tpu_custom_call.1} parent=1 // loop_header
      %s26 = sphi 0, %s30
      %p27 = scmp.ge.s32.totalorder %s26, 4
      %s36 = sphi 0, %s38
      %s39 = sphi 0, %s36
      %s40 = sphi 0, %s39
      %s56 = sphi 0, %s40
      %s62 = sphi 0, %s64
      %s65 = sphi 0, %s62
      %s66 = sphi 0, %s65
      %s82 = sphi 0, %s66
      %s88 = sphi 0, %s90
      %s91 = sphi 0, %s88
      %s92 = sphi 0, %s91
      %s108 = sphi 0, %s92
      %s112 = sphi 0, %s112
      %s114 = sphi 0, %s112
      %s115 = sphi 0, %s114
      %s129 = sphi 0, %s115
      %s133 = sphi 0, %s133
      %s135 = sphi 0, %s133
      %s136 = sphi 0, %s135
      %s150 = sphi 0, %s136
      %s154 = sphi 0, %s154
      %s156 = sphi 0, %s154
      %s157 = sphi 0, %s156
      %s171 = sphi 0, %s157
      %s175 = sphi 0, %s175
      %s177 = sphi 0, %s175
      %s178 = sphi 0, %s177
      %s192 = sphi 0, %s178
      %s196 = sphi 0, %s196
      %s198 = sphi 0, %s196
      %s199 = sphi 0, %s198
      %s213 = sphi 0, %s199
      %s217 = sphi 0, %s217
      %s219 = sphi 0, %s217
      %s220 = sphi 0, %s219
      %s234 = sphi 0, %s220
      %s240 = sphi 0, %s242
      %s243 = sphi 0, %s240
      %s244 = sphi 0, %s243
      %s260 = sphi 0, %s244
    $region4: #{tpu_custom_call.1} parent=1 // loop_header_branch
      %29 = sbr.rel (%p27) target = $region8
    $region5: #{tpu_custom_call.1} parent=1 // loop_body
      %s31 = ssub.s32 %s26, 1
      %s32 = ssub.s32 %s26, 2
      %s33 = sadd.s32 %s26, 1
      %s34 = ssub.s32 %s26, %s33
      %p35 = scmp.eq.s32.totalorder %s34, 0
      %s37 = sadd.s32 %s36, 1
      %s38 = scalar_select %p35, %s36, %s37
      %p41 = pneg %p35
      %p42 = scmp.eq.s32.totalorder %s26, 1
      %p43 = por %p41, %p42
      %p44 = scmp.ne.s32.totalorder %s36, %s39
      %p45 = scmp.eq.s32.totalorder %s26, 0
      %p46 = por %p44, %p45
      %p47 = scmp.ne.s32.totalorder %s36, %s39
      %p48 = scmp.eq.s32.totalorder %s31, 1
      %p49 = por %p47, %p48
      %p50 = scmp.ne.s32.totalorder %s39, %s40
      %p51 = scmp.eq.s32.totalorder %s31, 0
      %p52 = por %p50, %p51
      %p53 = scmp.ne.s32.totalorder %s39, %s40
      %p54 = scmp.eq.s32.totalorder %s32, 1
      %p55 = por %p53, %p54
      %p57 = scmp.ne.s32.totalorder %s40, %s56
      %p58 = scmp.eq.s32.totalorder %s32, 0
      %p59 = por %p57, %p58
      %s60 = ssub.s32 %s26, %s33
      %p61 = scmp.eq.s32.totalorder %s60, 0
      %s63 = sadd.s32 %s62, 1
      %s64 = scalar_select %p61, %s62, %s63
      %p67 = pneg %p61
      %p68 = scmp.eq.s32.totalorder %s26, 1
      %p69 = por %p67, %p68
      %p70 = scmp.ne.s32.totalorder %s62, %s65
      %p71 = scmp.eq.s32.totalorder %s26, 0
      %p72 = por %p70, %p71
      %p73 = scmp.ne.s32.totalorder %s62, %s65
      %p74 = scmp.eq.s32.totalorder %s31, 1
      %p75 = por %p73, %p74
      %p76 = scmp.ne.s32.totalorder %s65, %s66
      %p77 = scmp.eq.s32.totalorder %s31, 0
      %p78 = por %p76, %p77
      %p79 = scmp.ne.s32.totalorder %s65, %s66
      %p80 = scmp.eq.s32.totalorder %s32, 1
      %p81 = por %p79, %p80
      %p83 = scmp.ne.s32.totalorder %s66, %s82
      %p84 = scmp.eq.s32.totalorder %s32, 0
      %p85 = por %p83, %p84
      %s86 = ssub.s32 %s26, %s33
      %p87 = scmp.eq.s32.totalorder %s86, 0
      %s89 = sadd.s32 %s88, 1
      %s90 = scalar_select %p87, %s88, %s89
      %p93 = pneg %p87
      %p94 = scmp.eq.s32.totalorder %s26, 1
      %p95 = por %p93, %p94
      %p96 = scmp.ne.s32.totalorder %s88, %s91
      %p97 = scmp.eq.s32.totalorder %s26, 0
      %p98 = por %p96, %p97
      %p99 = scmp.ne.s32.totalorder %s88, %s91
      %p100 = scmp.eq.s32.totalorder %s31, 1
      %p101 = por %p99, %p100
      %p102 = scmp.ne.s32.totalorder %s91, %s92
      %p103 = scmp.eq.s32.totalorder %s31, 0
      %p104 = por %p102, %p103
      %p105 = scmp.ne.s32.totalorder %s91, %s92
      %p106 = scmp.eq.s32.totalorder %s32, 1
      %p107 = por %p105, %p106
      %p109 = scmp.ne.s32.totalorder %s92, %s108
      %p110 = scmp.eq.s32.totalorder %s32, 0
      %p111 = por %p109, %p110
      %s113 = sadd.s32 %s112, 1
      %p116 = scmp.eq.s32.totalorder %s26, 1
      %p117 = scmp.ne.s32.totalorder %s112, %s114
      %p118 = scmp.eq.s32.totalorder %s26, 0
      %p119 = por %p117, %p118
      %p120 = scmp.ne.s32.totalorder %s112, %s114
      %p121 = scmp.eq.s32.totalorder %s31, 1
      %p122 = por %p120, %p121
      %p123 = scmp.ne.s32.totalorder %s114, %s115
      %p124 = scmp.eq.s32.totalorder %s31, 0
      %p125 = por %p123, %p124
      %p126 = scmp.ne.s32.totalorder %s114, %s115
      %p127 = scmp.eq.s32.totalorder %s32, 1
      %p128 = por %p126, %p127
      %p130 = scmp.ne.s32.totalorder %s115, %s129
      %p131 = scmp.eq.s32.totalorder %s32, 0
      %p132 = por %p130, %p131
      %s134 = sadd.s32 %s133, 1
      %p137 = scmp.eq.s32.totalorder %s26, 1
      %p138 = scmp.ne.s32.totalorder %s133, %s135
      %p139 = scmp.eq.s32.totalorder %s26, 0
      %p140 = por %p138, %p139
      %p141 = scmp.ne.s32.totalorder %s133, %s135
      %p142 = scmp.eq.s32.totalorder %s31, 1
      %p143 = por %p141, %p142
      %p144 = scmp.ne.s32.totalorder %s135, %s136
      %p145 = scmp.eq.s32.totalorder %s31, 0
      %p146 = por %p144, %p145
      %p147 = scmp.ne.s32.totalorder %s135, %s136
      %p148 = scmp.eq.s32.totalorder %s32, 1
      %p149 = por %p147, %p148
      %p151 = scmp.ne.s32.totalorder %s136, %s150
      %p152 = scmp.eq.s32.totalorder %s32, 0
      %p153 = por %p151, %p152
      %s155 = sadd.s32 %s154, 1
      %p158 = scmp.eq.s32.totalorder %s26, 1
      %p159 = scmp.ne.s32.totalorder %s154, %s156
      %p160 = scmp.eq.s32.totalorder %s26, 0
      %p161 = por %p159, %p160
      %p162 = scmp.ne.s32.totalorder %s154, %s156
      %p163 = scmp.eq.s32.totalorder %s31, 1
      %p164 = por %p162, %p163
      %p165 = scmp.ne.s32.totalorder %s156, %s157
      %p166 = scmp.eq.s32.totalorder %s31, 0
      %p167 = por %p165, %p166
      %p168 = scmp.ne.s32.totalorder %s156, %s157
      %p169 = scmp.eq.s32.totalorder %s32, 1
      %p170 = por %p168, %p169
      %p172 = scmp.ne.s32.totalorder %s157, %s171
      %p173 = scmp.eq.s32.totalorder %s32, 0
      %p174 = por %p172, %p173
      %s176 = sadd.s32 %s175, 1
      %p179 = scmp.eq.s32.totalorder %s26, 1
      %p180 = scmp.ne.s32.totalorder %s175, %s177
      %p181 = scmp.eq.s32.totalorder %s26, 0
      %p182 = por %p180, %p181
      %p183 = scmp.ne.s32.totalorder %s175, %s177
      %p184 = scmp.eq.s32.totalorder %s31, 1
      %p185 = por %p183, %p184
      %p186 = scmp.ne.s32.totalorder %s177, %s178
      %p187 = scmp.eq.s32.totalorder %s31, 0
      %p188 = por %p186, %p187
      %p189 = scmp.ne.s32.totalorder %s177, %s178
      %p190 = scmp.eq.s32.totalorder %s32, 1
      %p191 = por %p189, %p190
      %p193 = scmp.ne.s32.totalorder %s178, %s192
      %p194 = scmp.eq.s32.totalorder %s32, 0
      %p195 = por %p193, %p194
      %s197 = sadd.s32 %s196, 1
      %p200 = scmp.eq.s32.totalorder %s26, 1
      %p201 = scmp.ne.s32.totalorder %s196, %s198
      %p202 = scmp.eq.s32.totalorder %s26, 0
      %p203 = por %p201, %p202
      %p204 = scmp.ne.s32.totalorder %s196, %s198
      %p205 = scmp.eq.s32.totalorder %s31, 1
      %p206 = por %p204, %p205
      %p207 = scmp.ne.s32.totalorder %s198, %s199
      %p208 = scmp.eq.s32.totalorder %s31, 0
      %p209 = por %p207, %p208
      %p210 = scmp.ne.s32.totalorder %s198, %s199
      %p211 = scmp.eq.s32.totalorder %s32, 1
      %p212 = por %p210, %p211
      %p214 = scmp.ne.s32.totalorder %s199, %s213
      %p215 = scmp.eq.s32.totalorder %s32, 0
      %p216 = por %p214, %p215
      %s218 = sadd.s32 %s217, 1
      %p221 = scmp.eq.s32.totalorder %s26, 1
      %p222 = scmp.ne.s32.totalorder %s217, %s219
      %p223 = scmp.eq.s32.totalorder %s26, 0
      %p224 = por %p222, %p223
      %p225 = scmp.ne.s32.totalorder %s217, %s219
      %p226 = scmp.eq.s32.totalorder %s31, 1
      %p227 = por %p225, %p226
      %p228 = scmp.ne.s32.totalorder %s219, %s220
      %p229 = scmp.eq.s32.totalorder %s31, 0
      %p230 = por %p228, %p229
      %p231 = scmp.ne.s32.totalorder %s219, %s220
      %p232 = scmp.eq.s32.totalorder %s32, 1
      %p233 = por %p231, %p232
      %p235 = scmp.ne.s32.totalorder %s220, %s234
      %p236 = scmp.eq.s32.totalorder %s32, 0
      %p237 = por %p235, %p236
      %s238 = ssub.s32 %s26, %s33
      %p239 = scmp.eq.s32.totalorder %s238, 0
      %s241 = sadd.s32 %s240, 1
      %s242 = scalar_select %p239, %s240, %s241
      %p245 = pneg %p239
      %p246 = scmp.eq.s32.totalorder %s26, 1
      %p247 = por %p245, %p246
      %p248 = scmp.ne.s32.totalorder %s240, %s243
      %p249 = scmp.eq.s32.totalorder %s26, 0
      %p250 = por %p248, %p249
      %p251 = scmp.ne.s32.totalorder %s240, %s243
      %p252 = scmp.eq.s32.totalorder %s31, 1
      %p253 = por %p251, %p252
      %p254 = scmp.ne.s32.totalorder %s243, %s244
      %p255 = scmp.eq.s32.totalorder %s31, 0
      %p256 = por %p254, %p255
      %p257 = scmp.ne.s32.totalorder %s243, %s244
      %p258 = scmp.eq.s32.totalorder %s32, 1
      %p259 = por %p257, %p258
      %p261 = scmp.ne.s32.totalorder %s244, %s260
      %p262 = scmp.eq.s32.totalorder %s32, 0
      %p263 = por %p261, %p262
      %p264 = scmp.le.s32.totalorder 1, %s26
      %p265 = scmp.lt.s32.totalorder %s26, 3
      %p266 = pnand %p264, %p265
      %p267 = pneg %p266
      // Predicated region
      $region9: #{tpu_custom_call.1} parent=5 // pred_check
        _
      $region10: #{tpu_custom_call.1} parent=5 // pred_check_branch
        %269 = sbr.rel (%p266) target = $region12
      $region11: #{tpu_custom_call.1} parent=5 // pred_region
        %s270 = ssub.s32 %s26, 1
        // Predicated region
        $region13: #{tpu_custom_call.1} parent=11 // pred_check
          %p271 = pneg %p125
        $region14: #{tpu_custom_call.1} parent=11 // pred_check_branch
          %273 = sbr.rel (%p271) target = $region16
        $region15: #{tpu_custom_call.1} parent=11 // pred_region
          %s275 = ssub.s32 512, 512
          %276 = vsyncadd [#allocation9], %s275
          %s277 = sshll.u32 [#allocation8], 4
          %s278 = int_to_ptr.vmem [resolvable:$true] %s277
          %283 = dma.hbm_to_vmem [thread:$0]  %s3, 512, %s278, [#allocation9], 128, 128, 8
        $region16: #{tpu_custom_call.1} parent=11 // pred_fallthru
          _
        // Predicated region
        $region17: #{tpu_custom_call.1} parent=11 // pred_check
          %p284 = pneg %p146
        $region18: #{tpu_custom_call.1} parent=11 // pred_check_branch
          %286 = sbr.rel (%p284) target = $region20
        $region19: #{tpu_custom_call.1} parent=11 // pred_region
          _
        $region20: #{tpu_custom_call.1} parent=11 // pred_fallthru
          _
        // Predicated region
        $region21: #{tpu_custom_call.1} parent=11 // pred_check
          %p287 = pneg %p167
        $region22: #{tpu_custom_call.1} parent=11 // pred_check_branch
          %289 = sbr.rel (%p287) target = $region24
        $region23: #{tpu_custom_call.1} parent=11 // pred_region
          %s291 = ssub.s32 512, 512
          %292 = vsyncadd [#allocation9], %s291
          %s293 = sshll.u32 [#allocation10], 4
          %s294 = int_to_ptr.vmem [resolvable:$true] %s293
          %299 = dma.hbm_to_vmem [thread:$0]  %s5, 512, %s294, [#allocation9], 128, 128, 8
        $region24: #{tpu_custom_call.1} parent=11 // pred_fallthru
          _
        // Predicated region
        $region25: #{tpu_custom_call.1} parent=11 // pred_check
          %p300 = pneg %p188
        $region26: #{tpu_custom_call.1} parent=11 // pred_check_branch
          %302 = sbr.rel (%p300) target = $region28
        $region27: #{tpu_custom_call.1} parent=11 // pred_region
          _
        $region28: #{tpu_custom_call.1} parent=11 // pred_fallthru
          _
        // Predicated region
        $region29: #{tpu_custom_call.1} parent=11 // pred_check
          %p303 = pneg %p209
        $region30: #{tpu_custom_call.1} parent=11 // pred_check_branch
          %305 = sbr.rel (%p303) target = $region32
        $region31: #{tpu_custom_call.1} parent=11 // pred_region
          %s307 = ssub.s32 512, 512
          %308 = vsyncadd [#allocation12], %s307
          %s309 = sshll.u32 [#allocation11], 4
          %s310 = int_to_ptr.vmem [resolvable:$true] %s309
          %315 = dma.hbm_to_vmem [thread:$0]  %s7, 512, %s310, [#allocation12], 128, 128, 8
        $region32: #{tpu_custom_call.1} parent=11 // pred_fallthru
          _
        // Predicated region
        $region33: #{tpu_custom_call.1} parent=11 // pred_check
          %p316 = pneg %p230
        $region34: #{tpu_custom_call.1} parent=11 // pred_check_branch
          %318 = sbr.rel (%p316) target = $region36
        $region35: #{tpu_custom_call.1} parent=11 // pred_region
          _
        $region36: #{tpu_custom_call.1} parent=11 // pred_fallthru
          _
      $region12: #{tpu_custom_call.1} parent=5 // pred_fallthru
        _
      %p319 = scmp.lt.s32.totalorder %s26, 2
      // Predicated region
      $region37: #{tpu_custom_call.1} parent=5 // pred_check
        %p320 = pneg %p319
      $region38: #{tpu_custom_call.1} parent=5 // pred_check_branch
        %322 = sbr.rel (%p320) target = $region40
      $region39: #{tpu_custom_call.1} parent=5 // pred_region
        // Predicated region
        $region41: #{tpu_custom_call.1} parent=39 // pred_check
          %p323 = pneg %p46
        $region42: #{tpu_custom_call.1} parent=39 // pred_check_branch
          %325 = sbr.rel (%p323) target = $region44
        $region43: #{tpu_custom_call.1} parent=39 // pred_region
          %s326 = sand.u32 %s36, 1
          %s327 = scalar_lea.sflag [#allocation3], %s326
          %s328 = sand.u32 %s36, 1
          %s329 = smul.addr %s328, 32
          %s330 = scalar_lea.vmem [#allocation2], %s329
          %s331 = smul.u32 4, %s26
          %s333 = ssub.s32 512, 512
          %334 = vsyncadd %s327, %s333
          %s335 = smul.addr %s331, 128
          %s336 = scalar_lea.hbm %s0, %s335
          %s337 = sshll.u32 %s330, 4
          %s338 = int_to_ptr.vmem [resolvable:$true] %s337
          %343 = dma.hbm_to_vmem [thread:$0]  %s336, 512, %s338, %s327, 128, 128, 8
        $region44: #{tpu_custom_call.1} parent=39 // pred_fallthru
          _
        // Predicated region
        $region45: #{tpu_custom_call.1} parent=39 // pred_check
          %p344 = pneg %p72
        $region46: #{tpu_custom_call.1} parent=39 // pred_check_branch
          %346 = sbr.rel (%p344) target = $region48
        $region47: #{tpu_custom_call.1} parent=39 // pred_region
          %s347 = sand.u32 %s26, 1
          %s348 = scalar_lea.sflag [#allocation6], %s347
          %s349 = sand.u32 %s62, 1
          %s350 = smul.addr %s349, 32
          %s351 = scalar_lea.vmem [#allocation5], %s350
          %s352 = smul.u32 4, %s26
          %s354 = ssub.s32 512, 512
          %355 = vsyncadd %s348, %s354
          %s356 = smul.addr %s352, 128
          %s357 = scalar_lea.hbm %s1, %s356
          %s358 = sshll.u32 %s351, 4
          %s359 = int_to_ptr.vmem [resolvable:$true] %s358
          %364 = dma.hbm_to_vmem [thread:$0]  %s357, 512, %s359, %s348, 128, 128, 8
        $region48: #{tpu_custom_call.1} parent=39 // pred_fallthru
          _
        // Predicated region
        $region49: #{tpu_custom_call.1} parent=39 // pred_check
          %p365 = pneg %p98
        $region50: #{tpu_custom_call.1} parent=39 // pred_check_branch
          %367 = sbr.rel (%p365) target = $region52
        $region51: #{tpu_custom_call.1} parent=39 // pred_region
          %s368 = sand.u32 %s26, 1
          %s369 = scalar_lea.sflag [#allocation6], %s368
          %s370 = sand.u32 %s88, 1
          %s371 = smul.addr %s370, 32
          %s372 = scalar_lea.vmem [#allocation7], %s371
          %s373 = smul.u32 4, %s26
          %s375 = ssub.s32 512, 512
          %376 = vsyncadd %s369, %s375
          %s377 = smul.addr %s373, 128
          %s378 = scalar_lea.hbm %s2, %s377
          %s379 = sshll.u32 %s372, 4
          %s380 = int_to_ptr.vmem [resolvable:$true] %s379
          %385 = dma.hbm_to_vmem [thread:$0]  %s378, 512, %s380, %s369, 128, 128, 8
        $region52: #{tpu_custom_call.1} parent=39 // pred_fallthru
          _
      $region40: #{tpu_custom_call.1} parent=5 // pred_fallthru
        _
      %p386 = scmp.le.s32.totalorder 1, %s26
      %p387 = scmp.lt.s32.totalorder %s26, 3
      %p388 = pnand %p386, %p387
      %p389 = pneg %p388
      // Predicated region
      $region53: #{tpu_custom_call.1} parent=5 // pred_check
        _
      $region54: #{tpu_custom_call.1} parent=5 // pred_check_branch
        %391 = sbr.rel (%p388) target = $region56
      $region55: #{tpu_custom_call.1} parent=5 // pred_region
        %s392 = ssub.s32 %s26, 1
        %s393 = sand.u32 %s39, 1
        %s394 = scalar_lea.sflag [#allocation3], %s393
        %s395 = sand.u32 %s39, 1
        %s396 = smul.addr %s395, 32
        %s397 = scalar_lea.vmem [#allocation2], %s396
        // Predicated region
        $region57: #{tpu_custom_call.1} parent=55 // pred_check
          %p398 = pneg %p52
        $region58: #{tpu_custom_call.1} parent=55 // pred_check_branch
          %400 = sbr.rel (%p398) target = $region60
        $region59: #{tpu_custom_call.1} parent=55 // pred_region
          %401 = dma.done %s394, 512
        $region60: #{tpu_custom_call.1} parent=55 // pred_fallthru
          _
        %s402 = sand.u32 %s31, 1
        %s403 = scalar_lea.sflag [#allocation6], %s402
        %s404 = sand.u32 %s65, 1
        %s405 = smul.addr %s404, 32
        %s406 = scalar_lea.vmem [#allocation5], %s405
        // Predicated region
        $region61: #{tpu_custom_call.1} parent=55 // pred_check
          %p407 = pneg %p78
        $region62: #{tpu_custom_call.1} parent=55 // pred_check_branch
          %409 = sbr.rel (%p407) target = $region64
        $region63: #{tpu_custom_call.1} parent=55 // pred_region
          %410 = dma.done %s403, 512
        $region64: #{tpu_custom_call.1} parent=55 // pred_fallthru
          _
        %s411 = sand.u32 %s31, 1
        %s412 = scalar_lea.sflag [#allocation6], %s411
        %s413 = sand.u32 %s91, 1
        %s414 = smul.addr %s413, 32
        %s415 = scalar_lea.vmem [#allocation7], %s414
        // Predicated region
        $region65: #{tpu_custom_call.1} parent=55 // pred_check
          %p416 = pneg %p104
        $region66: #{tpu_custom_call.1} parent=55 // pred_check_branch
          %418 = sbr.rel (%p416) target = $region68
        $region67: #{tpu_custom_call.1} parent=55 // pred_region
          %419 = dma.done %s412, 512
        $region68: #{tpu_custom_call.1} parent=55 // pred_fallthru
          _
        // Predicated region
        $region69: #{tpu_custom_call.1} parent=55 // pred_check
          %p420 = pneg %p125
        $region70: #{tpu_custom_call.1} parent=55 // pred_check_branch
          %422 = sbr.rel (%p420) target = $region72
        $region71: #{tpu_custom_call.1} parent=55 // pred_region
          %423 = dma.done [#allocation9], 512
        $region72: #{tpu_custom_call.1} parent=55 // pred_fallthru
          _
        // Predicated region
        $region73: #{tpu_custom_call.1} parent=55 // pred_check
          %p424 = pneg %p167
        $region74: #{tpu_custom_call.1} parent=55 // pred_check_branch
          %426 = sbr.rel (%p424) target = $region76
        $region75: #{tpu_custom_call.1} parent=55 // pred_region
          %427 = dma.done [#allocation9], 512
        $region76: #{tpu_custom_call.1} parent=55 // pred_fallthru
          _
        // Predicated region
        $region77: #{tpu_custom_call.1} parent=55 // pred_check
          %p428 = pneg %p209
        $region78: #{tpu_custom_call.1} parent=55 // pred_check_branch
          %430 = sbr.rel (%p428) target = $region80
        $region79: #{tpu_custom_call.1} parent=55 // pred_region
          %431 = dma.done [#allocation12], 512
        $region80: #{tpu_custom_call.1} parent=55 // pred_fallthru
          _
        %s432 = sand.u32 %s39, 1
        %s433 = scalar_lea.sflag [#allocation3], %s432
        %s434 = sand.u32 %s39, 1
        %s435 = smul.addr %s434, 32
        %s436 = scalar_lea.vmem [#allocation2], %s435
        %p437 = pneg %p52
        %p438 = pneg %p49
        %s439 = sand.u32 %s31, 1
        %s440 = scalar_lea.sflag [#allocation6], %s439
        %s441 = sand.u32 %s65, 1
        %s442 = smul.addr %s441, 32
        %s443 = scalar_lea.vmem [#allocation5], %s442
        %p444 = pneg %p78
        %p445 = pneg %p75
        %s446 = sand.u32 %s31, 1
        %s447 = scalar_lea.sflag [#allocation6], %s446
        %s448 = sand.u32 %s91, 1
        %s449 = smul.addr %s448, 32
        %s450 = scalar_lea.vmem [#allocation7], %s449
        %p451 = pneg %p104
        %p452 = pneg %p101
        %p453 = pneg %p125
        %p454 = pneg %p122
        %p455 = pneg %p146
        %p456 = pneg %p143
        %p457 = pneg %p167
        %p458 = pneg %p164
        %p459 = pneg %p188
        %p460 = pneg %p185
        %p461 = pneg %p209
        %p462 = pneg %p206
        %p463 = pneg %p230
        %p464 = pneg %p227
        %p465 = pneg %p256
        %p466 = pneg %p253
        %s467 = sand.u32 %s243, 1
        %s468 = scalar_lea.sflag [#allocation4], %s467
        %s469 = sand.u32 %s243, 1
        %s470 = smul.addr %s469, 32
        %s471 = scalar_lea.vmem [#allocation13], %s470
        %s472 = smul.u32 4, %s31
        %s473 = smul.u32 4, %s31
        %s474 = smul.u32 4, %s31
        %s475 = smul.u32 4, %s31
        %v476 = vld [vmem:[%s397] sm:$0xff]
        %v477 = vld [vmem:[%s397 + $0x8] sm:$0xff]
        %v478 = vld [vmem:[%s397 + $0x10] sm:$0xff]
        %v479 = vld [vmem:[%s397 + $0x18] sm:$0xff]
        %v480 = vld [vmem:[%s406] sm:$0xff]
        %v481 = vld [vmem:[%s406 + $0x8] sm:$0xff]
        %v482 = vld [vmem:[%s406 + $0x10] sm:$0xff]
        %v483 = vld [vmem:[%s406 + $0x18] sm:$0xff]
        %v484 = vld [vmem:[%s415] sm:$0xff]
        %v485 = vld [vmem:[%s415 + $0x8] sm:$0xff]
        %v486 = vld [vmem:[%s415 + $0x10] sm:$0xff]
        %v487 = vld [vmem:[%s415 + $0x18] sm:$0xff]
        %v488 = vld [vmem:[#allocation8] sm:$0xff]
        %v489 = vld [vmem:[#allocation8 + $0x8] sm:$0xff]
        %v490 = vld [vmem:[#allocation8 + $0x10] sm:$0xff]
        %v491 = vld [vmem:[#allocation8 + $0x18] sm:$0xff]
        %v492 = vld [vmem:[%s4] sm:$0x1]
        %v494 = vlaneseq
        %v495 = vshrl.u32 %v494, 7
        %v496 = vsub.s32 0, %v495
        %v497 = vrot.slane %v492, %v496
        %vm499 = vcmask 261120
        %v501 = vsel %vm499, %v476, 0
        %v504 = vsel %vm499, %v477, 0
        %v507 = vsel %vm499, %v478, 0
        %v510 = vsel %vm499, %v479, 0
        %512 = vmatprep.subr.mxu0 0.0
        %513 = vmatpush1.msra.mxu0 %v488
        %514 = vmatprep.subr.mxu0 0.0
        %515 = vmatpush1.msra.mxu0 %v489
        %516 = vmatprep.subr.mxu0 0.0
        %517 = vmatpush1.msra.mxu0 %v490
        %518 = vmatprep.subr.mxu0 0.0
        %519 = vmatpush1.msra.mxu0 %v491
        %520 = vmatprep.subr.mxu0 0.0
        %521 = vmatpush1.msra.mxu0 0.0
        %522 = vmatprep.subr.mxu0 0.0
        %523 = vmatpush1.msra.mxu0 0.0
        %524 = vmatprep.subr.mxu0 0.0
        %525 = vmatpush1.msra.mxu0 0.0
        %526 = vmatprep.subr.mxu0 0.0
        %527 = vmatpush1.msra.mxu0 0.0
        %528 = vmatprep.subr.mxu0 0.0
        %529 = vmatpush1.msra.mxu0 0.0
        %530 = vmatprep.subr.mxu0 0.0
        %531 = vmatpush1.msra.mxu0 0.0
        %532 = vmatprep.subr.mxu0 0.0
        %533 = vmatpush1.msra.mxu0 0.0
        %534 = vmatprep.subr.mxu0 0.0
        %535 = vmatpush1.msra.mxu0 0.0
        %536 = vmatprep.subr.mxu0 0.0
        %537 = vmatpush1.msra.mxu0 0.0
        %538 = vmatprep.subr.mxu0 0.0
        %539 = vmatpush1.msra.mxu0 0.0
        %540 = vmatprep.subr.mxu0 0.0
        %541 = vmatpush1.msra.mxu0 0.0
        %542 = vmatprep.subr.mxu0 0.0
        %543 = vmatpush1.msra.mxu0 0.0
        %544 = vmatprep.subr.mxu0 0.0
        %545 = vmatpush1.msra.mxu0 0.0
        %546 = vmatprep.subr.mxu0 0.0
        %547 = vmatpush1.msra.mxu0 0.0
        %548 = vmatprep.subr.mxu0 0.0
        %549 = vmatpush1.msra.mxu0 0.0
        %550 = vmatprep.subr.mxu0 0.0
        %551 = vmatpush1.msra.mxu0 0.0
        %552 = vmatprep.subr.mxu0 0.0
        %553 = vmatpush1.msra.mxu0 0.0
        %554 = vmatprep.subr.mxu0 0.0
        %555 = vmatpush1.msra.mxu0 0.0
        %556 = vmatprep.subr.mxu0 0.0
        %557 = vmatpush1.msra.mxu0 0.0
        %558 = vmatprep.subr.mxu0 0.0
        %559 = vmatpush1.msra.mxu0 0.0
        %560 = vmatprep.subr.mxu0 0.0
        %561 = vmatpush1.msra.mxu0 0.0
        %562 = vmatprep.subr.mxu0 0.0
        %563 = vmatpush1.msra.mxu0 0.0
        %564 = vmatprep.subr.mxu0 0.0
        %565 = vmatpush1.msra.mxu0 0.0
        %566 = vmatprep.subr.mxu0 0.0
        %567 = vmatpush1.msra.mxu0 0.0
        %568 = vmatprep.subr.mxu0 0.0
        %569 = vmatpush1.msra.mxu0 0.0
        %570 = vmatprep.subr.mxu0 0.0
        %571 = vmatpush1.msra.mxu0 0.0
        %572 = vmatprep.subr.mxu0 0.0
        %573 = vmatpush1.msra.mxu0 0.0
        %574 = vmatprep.subr.mxu0 0.0
        %575 = vmatpush1.msra.mxu0 0.0
        %576 = vmatprep.mubr.f32.mxu0 0.0
        %577 = vmatmul.mubr.f32.gmra.mrb[0].mxu0 %v501
        %v578 = vpop.f32.mrb[0].mxu0
        %v579 = vadd.f32 %v497, %v578
        %v580 = vpop.f32.mrb[0].mxu0
        %581 = vmatprep.mubr.f32.mxu0 0.0
        %582 = vmatmul.mubr.f32.gmra.mrb[0].mxu0 %v504
        %v583 = vpop.f32.mrb[0].mxu0
        %v584 = vadd.f32 %v497, %v583
        %v585 = vpop.f32.mrb[0].mxu0
        %586 = vmatprep.mubr.f32.mxu0 0.0
        %587 = vmatmul.mubr.f32.gmra.mrb[0].mxu0 %v507
        %v588 = vpop.f32.mrb[0].mxu0
        %v589 = vadd.f32 %v497, %v588
        %v590 = vpop.f32.mrb[0].mxu0
        %591 = vmatprep.mubr.f32.mxu0 0.0
        %592 = vmatmul.mubr.f32.gmra.mrb[0].mxu0 %v510
        %v593 = vpop.f32.mrb[0].mxu0
        %v594 = vadd.f32 %v497, %v593
        %v595 = vpop.f32.mrb[0].mxu0
        %596 = vdwg.mxu0
        %v597 = vld [vmem:[#allocation10] sm:$0xff]
        %v598 = vld [vmem:[#allocation10 + $0x8] sm:$0xff]
        %v599 = vld [vmem:[#allocation10 + $0x10] sm:$0xff]
        %v600 = vld [vmem:[#allocation10 + $0x18] sm:$0xff]
        %v601 = vld [vmem:[%s6] sm:$0x1]
        %v603 = vlaneseq
        %v604 = vshrl.u32 %v603, 7
        %v605 = vsub.s32 0, %v604
        %v606 = vrot.slane %v601, %v605
        %v609 = vsel %vm499, %v480, 0
        %v612 = vsel %vm499, %v481, 0
        %v615 = vsel %vm499, %v482, 0
        %v618 = vsel %vm499, %v483, 0
        %620 = vmatprep.subr.mxu0 0.0
        %621 = vmatpush1.msra.mxu0 %v597
        %622 = vmatprep.subr.mxu0 0.0
        %623 = vmatpush1.msra.mxu0 %v598
        %624 = vmatprep.subr.mxu0 0.0
        %625 = vmatpush1.msra.mxu0 %v599
        %626 = vmatprep.subr.mxu0 0.0
        %627 = vmatpush1.msra.mxu0 %v600
        %628 = vmatprep.subr.mxu0 0.0
        %629 = vmatpush1.msra.mxu0 0.0
        %630 = vmatprep.subr.mxu0 0.0
        %631 = vmatpush1.msra.mxu0 0.0
        %632 = vmatprep.subr.mxu0 0.0
        %633 = vmatpush1.msra.mxu0 0.0
        %634 = vmatprep.subr.mxu0 0.0
        %635 = vmatpush1.msra.mxu0 0.0
        %636 = vmatprep.subr.mxu0 0.0
        %637 = vmatpush1.msra.mxu0 0.0
        %638 = vmatprep.subr.mxu0 0.0
        %639 = vmatpush1.msra.mxu0 0.0
        %640 = vmatprep.subr.mxu0 0.0
        %641 = vmatpush1.msra.mxu0 0.0
        %642 = vmatprep.subr.mxu0 0.0
        %643 = vmatpush1.msra.mxu0 0.0
        %644 = vmatprep.subr.mxu0 0.0
        %645 = vmatpush1.msra.mxu0 0.0
        %646 = vmatprep.subr.mxu0 0.0
        %647 = vmatpush1.msra.mxu0 0.0
        %648 = vmatprep.subr.mxu0 0.0
        %649 = vmatpush1.msra.mxu0 0.0
        %650 = vmatprep.subr.mxu0 0.0
        %651 = vmatpush1.msra.mxu0 0.0
        %652 = vmatprep.subr.mxu0 0.0
        %653 = vmatpush1.msra.mxu0 0.0
        %654 = vmatprep.subr.mxu0 0.0
        %655 = vmatpush1.msra.mxu0 0.0
        %656 = vmatprep.subr.mxu0 0.0
        %657 = vmatpush1.msra.mxu0 0.0
        %658 = vmatprep.subr.mxu0 0.0
        %659 = vmatpush1.msra.mxu0 0.0
        %660 = vmatprep.subr.mxu0 0.0
        %661 = vmatpush1.msra.mxu0 0.0
        %662 = vmatprep.subr.mxu0 0.0
        %663 = vmatpush1.msra.mxu0 0.0
        %664 = vmatprep.subr.mxu0 0.0
        %665 = vmatpush1.msra.mxu0 0.0
        %666 = vmatprep.subr.mxu0 0.0
        %667 = vmatpush1.msra.mxu0 0.0
        %668 = vmatprep.subr.mxu0 0.0
        %669 = vmatpush1.msra.mxu0 0.0
        %670 = vmatprep.subr.mxu0 0.0
        %671 = vmatpush1.msra.mxu0 0.0
        %672 = vmatprep.subr.mxu0 0.0
        %673 = vmatpush1.msra.mxu0 0.0
        %674 = vmatprep.subr.mxu0 0.0
        %675 = vmatpush1.msra.mxu0 0.0
        %676 = vmatprep.subr.mxu0 0.0
        %677 = vmatpush1.msra.mxu0 0.0
        %678 = vmatprep.subr.mxu0 0.0
        %679 = vmatpush1.msra.mxu0 0.0
        %680 = vmatprep.subr.mxu0 0.0
        %681 = vmatpush1.msra.mxu0 0.0
        %682 = vmatprep.subr.mxu0 0.0
        %683 = vmatpush1.msra.mxu0 0.0
        %684 = vmatprep.mubr.f32.mxu0 0.0
        %685 = vmatmul.mubr.f32.gmra.mrb[0].mxu0 %v609
        %v686 = vpop.f32.mrb[0].mxu0
        %v687 = vadd.f32 %v606, %v686
        %v688 = vpop.f32.mrb[0].mxu0
        %689 = vmatprep.mubr.f32.mxu0 0.0
        %690 = vmatmul.mubr.f32.gmra.mrb[0].mxu0 %v612
        %v691 = vpop.f32.mrb[0].mxu0
        %v692 = vadd.f32 %v606, %v691
        %v693 = vpop.f32.mrb[0].mxu0
        %694 = vmatprep.mubr.f32.mxu0 0.0
        %695 = vmatmul.mubr.f32.gmra.mrb[0].mxu0 %v615
        %v696 = vpop.f32.mrb[0].mxu0
        %v697 = vadd.f32 %v606, %v696
        %v698 = vpop.f32.mrb[0].mxu0
        %699 = vmatprep.mubr.f32.mxu0 0.0
        %700 = vmatmul.mubr.f32.gmra.mrb[0].mxu0 %v618
        %v701 = vpop.f32.mrb[0].mxu0
        %v702 = vadd.f32 %v606, %v701
        %v703 = vpop.f32.mrb[0].mxu0
        %704 = vdwg.mxu0
        %v705 = vld [vmem:[#allocation11] sm:$0xff]
        %v706 = vld [vmem:[#allocation11 + $0x8] sm:$0xff]
        %v707 = vld [vmem:[#allocation11 + $0x10] sm:$0xff]
        %v708 = vld [vmem:[#allocation11 + $0x18] sm:$0xff]
        %v709 = vld [vmem:[%s8] sm:$0x1]
        %v711 = vlaneseq
        %v712 = vshrl.u32 %v711, 7
        %v713 = vsub.s32 0, %v712
        %v714 = vrot.slane %v709, %v713
        %v717 = vsel %vm499, %v484, 0
        %v720 = vsel %vm499, %v485, 0
        %v723 = vsel %vm499, %v486, 0
        %v726 = vsel %vm499, %v487, 0
        %728 = vmatprep.subr.mxu0 0.0
        %729 = vmatpush1.msra.mxu0 %v705
        %730 = vmatprep.subr.mxu0 0.0
        %731 = vmatpush1.msra.mxu0 %v706
        %732 = vmatprep.subr.mxu0 0.0
        %733 = vmatpush1.msra.mxu0 %v707
        %734 = vmatprep.subr.mxu0 0.0
        %735 = vmatpush1.msra.mxu0 %v708
        %736 = vmatprep.subr.mxu0 0.0
        %737 = vmatpush1.msra.mxu0 0.0
        %738 = vmatprep.subr.mxu0 0.0
        %739 = vmatpush1.msra.mxu0 0.0
        %740 = vmatprep.subr.mxu0 0.0
        %741 = vmatpush1.msra.mxu0 0.0
        %742 = vmatprep.subr.mxu0 0.0
        %743 = vmatpush1.msra.mxu0 0.0
        %744 = vmatprep.subr.mxu0 0.0
        %745 = vmatpush1.msra.mxu0 0.0
        %746 = vmatprep.subr.mxu0 0.0
        %747 = vmatpush1.msra.mxu0 0.0
        %748 = vmatprep.subr.mxu0 0.0
        %749 = vmatpush1.msra.mxu0 0.0
        %750 = vmatprep.subr.mxu0 0.0
        %751 = vmatpush1.msra.mxu0 0.0
        %752 = vmatprep.subr.mxu0 0.0
        %753 = vmatpush1.msra.mxu0 0.0
        %754 = vmatprep.subr.mxu0 0.0
        %755 = vmatpush1.msra.mxu0 0.0
        %756 = vmatprep.subr.mxu0 0.0
        %757 = vmatpush1.msra.mxu0 0.0
        %758 = vmatprep.subr.mxu0 0.0
        %759 = vmatpush1.msra.mxu0 0.0
        %760 = vmatprep.subr.mxu0 0.0
        %761 = vmatpush1.msra.mxu0 0.0
        %762 = vmatprep.subr.mxu0 0.0
        %763 = vmatpush1.msra.mxu0 0.0
        %764 = vmatprep.subr.mxu0 0.0
        %765 = vmatpush1.msra.mxu0 0.0
        %766 = vmatprep.subr.mxu0 0.0
        %767 = vmatpush1.msra.mxu0 0.0
        %768 = vmatprep.subr.mxu0 0.0
        %769 = vmatpush1.msra.mxu0 0.0
        %770 = vmatprep.subr.mxu0 0.0
        %771 = vmatpush1.msra.mxu0 0.0
        %772 = vmatprep.subr.mxu0 0.0
        %773 = vmatpush1.msra.mxu0 0.0
        %774 = vmatprep.subr.mxu0 0.0
        %775 = vmatpush1.msra.mxu0 0.0
        %776 = vmatprep.subr.mxu0 0.0
        %777 = vmatpush1.msra.mxu0 0.0
        %778 = vmatprep.subr.mxu0 0.0
        %779 = vmatpush1.msra.mxu0 0.0
        %780 = vmatprep.subr.mxu0 0.0
        %781 = vmatpush1.msra.mxu0 0.0
        %782 = vmatprep.subr.mxu0 0.0
        %783 = vmatpush1.msra.mxu0 0.0
        %784 = vmatprep.subr.mxu0 0.0
        %785 = vmatpush1.msra.mxu0 0.0
        %786 = vmatprep.subr.mxu0 0.0
        %787 = vmatpush1.msra.mxu0 0.0
        %788 = vmatprep.subr.mxu0 0.0
        %789 = vmatpush1.msra.mxu0 0.0
        %790 = vmatprep.subr.mxu0 0.0
        %791 = vmatpush1.msra.mxu0 0.0
        %792 = vmatprep.mubr.f32.mxu0 0.0
        %793 = vmatmul.mubr.f32.gmra.mrb[0].mxu0 %v717
        %v794 = vpop.f32.mrb[0].mxu0
        %v795 = vadd.f32 %v714, %v794
        %v796 = vpop.f32.mrb[0].mxu0
        %797 = vmatprep.mubr.f32.mxu0 0.0
        %798 = vmatmul.mubr.f32.gmra.mrb[0].mxu0 %v720
        %v799 = vpop.f32.mrb[0].mxu0
        %v800 = vadd.f32 %v714, %v799
        %v801 = vpop.f32.mrb[0].mxu0
        %802 = vmatprep.mubr.f32.mxu0 0.0
        %803 = vmatmul.mubr.f32.gmra.mrb[0].mxu0 %v723
        %v804 = vpop.f32.mrb[0].mxu0
        %v805 = vadd.f32 %v714, %v804
        %v806 = vpop.f32.mrb[0].mxu0
        %807 = vmatprep.mubr.f32.mxu0 0.0
        %808 = vmatmul.mubr.f32.gmra.mrb[0].mxu0 %v726
        %v809 = vpop.f32.mrb[0].mxu0
        %v810 = vadd.f32 %v714, %v809
        %v811 = vpop.f32.mrb[0].mxu0
        %812 = vdwg.mxu0
        %vm813 = vcmask 64512
        %v815 = vsel %vm813, %v579, 0
        %v818 = vsel %vm813, %v687, 0
        %820 = vmatprep.subr.mxu0 0.0
        %821 = vmatpush1.xpose.msra.mxu0 %v818
        %822 = vmatprep.subr.mxu0 0.0
        %823 = vmatpush1.xpose.msra.mxu0 0.0
        %824 = vmatprep.subr.mxu0 0.0
        %825 = vmatpush1.xpose.msra.mxu0 0.0
        %826 = vmatprep.subr.mxu0 0.0
        %827 = vmatpush1.xpose.msra.mxu0 0.0
        %828 = vmatprep.subr.mxu0 0.0
        %829 = vmatpush1.xpose.msra.mxu0 0.0
        %830 = vmatprep.subr.mxu0 0.0
        %831 = vmatpush1.xpose.msra.mxu0 0.0
        %832 = vmatprep.subr.mxu0 0.0
        %833 = vmatpush1.xpose.msra.mxu0 0.0
        %834 = vmatprep.subr.mxu0 0.0
        %835 = vmatpush1.xpose.msra.mxu0 0.0
        %836 = vmatprep.subr.mxu0 0.0
        %837 = vmatpush1.xpose.msra.mxu0 0.0
        %838 = vmatprep.subr.mxu0 0.0
        %839 = vmatpush1.xpose.msra.mxu0 0.0
        %840 = vmatprep.subr.mxu0 0.0
        %841 = vmatpush1.xpose.msra.mxu0 0.0
        %842 = vmatprep.subr.mxu0 0.0
        %843 = vmatpush1.xpose.msra.mxu0 0.0
        %844 = vmatprep.subr.mxu0 0.0
        %845 = vmatpush1.xpose.msra.mxu0 0.0
        %846 = vmatprep.subr.mxu0 0.0
        %847 = vmatpush1.xpose.msra.mxu0 0.0
        %848 = vmatprep.subr.mxu0 0.0
        %849 = vmatpush1.xpose.msra.mxu0 0.0
        %850 = vmatprep.subr.mxu0 0.0
        %851 = vmatpush1.xpose.msra.mxu0 0.0
        %852 = vmatprep.subr.mxu0 0.0
        %853 = vmatpush1.xpose.msra.mxu0 0.0
        %854 = vmatprep.subr.mxu0 0.0
        %855 = vmatpush1.xpose.msra.mxu0 0.0
        %856 = vmatprep.subr.mxu0 0.0
        %857 = vmatpush1.xpose.msra.mxu0 0.0
        %858 = vmatprep.subr.mxu0 0.0
        %859 = vmatpush1.xpose.msra.mxu0 0.0
        %860 = vmatprep.subr.mxu0 0.0
        %861 = vmatpush1.xpose.msra.mxu0 0.0
        %862 = vmatprep.subr.mxu0 0.0
        %863 = vmatpush1.xpose.msra.mxu0 0.0
        %864 = vmatprep.subr.mxu0 0.0
        %865 = vmatpush1.xpose.msra.mxu0 0.0
        %866 = vmatprep.subr.mxu0 0.0
        %867 = vmatpush1.xpose.msra.mxu0 0.0
        %868 = vmatprep.subr.mxu0 0.0
        %869 = vmatpush1.xpose.msra.mxu0 0.0
        %870 = vmatprep.subr.mxu0 0.0
        %871 = vmatpush1.xpose.msra.mxu0 0.0
        %872 = vmatprep.subr.mxu0 0.0
        %873 = vmatpush1.xpose.msra.mxu0 0.0
        %874 = vmatprep.subr.mxu0 0.0
        %875 = vmatpush1.xpose.msra.mxu0 0.0
        %876 = vmatprep.subr.mxu0 0.0
        %877 = vmatpush1.xpose.msra.mxu0 0.0
        %878 = vmatprep.subr.mxu0 0.0
        %879 = vmatpush1.xpose.msra.mxu0 0.0
        %880 = vmatprep.subr.mxu0 0.0
        %881 = vmatpush1.xpose.msra.mxu0 0.0
        %882 = vmatprep.subr.mxu0 0.0
        %883 = vmatpush1.xpose.msra.mxu0 0.0
        %884 = vmatprep.mubr.f32.mxu0 0.0
        %885 = vmatmul.mubr.f32.gmra.mrb[0].mxu0 %v815
        %v886 = vpop.f32.mrb[0].mxu0
        %v887 = vadd.f32 0.0, %v886
        %v888 = vpop.f32.mrb[0].mxu0
        %889 = vdwg.mxu0
        %v891 = vsel %vm813, %v584, 0
        %v894 = vsel %vm813, %v692, 0
        %896 = vmatprep.subr.mxu0 0.0
        %897 = vmatpush1.xpose.msra.mxu0 %v894
        %898 = vmatprep.subr.mxu0 0.0
        %899 = vmatpush1.xpose.msra.mxu0 0.0
        %900 = vmatprep.subr.mxu0 0.0
        %901 = vmatpush1.xpose.msra.mxu0 0.0
        %902 = vmatprep.subr.mxu0 0.0
        %903 = vmatpush1.xpose.msra.mxu0 0.0
        %904 = vmatprep.subr.mxu0 0.0
        %905 = vmatpush1.xpose.msra.mxu0 0.0
        %906 = vmatprep.subr.mxu0 0.0
        %907 = vmatpush1.xpose.msra.mxu0 0.0
        %908 = vmatprep.subr.mxu0 0.0
        %909 = vmatpush1.xpose.msra.mxu0 0.0
        %910 = vmatprep.subr.mxu0 0.0
        %911 = vmatpush1.xpose.msra.mxu0 0.0
        %912 = vmatprep.subr.mxu0 0.0
        %913 = vmatpush1.xpose.msra.mxu0 0.0
        %914 = vmatprep.subr.mxu0 0.0
        %915 = vmatpush1.xpose.msra.mxu0 0.0
        %916 = vmatprep.subr.mxu0 0.0
        %917 = vmatpush1.xpose.msra.mxu0 0.0
        %918 = vmatprep.subr.mxu0 0.0
        %919 = vmatpush1.xpose.msra.mxu0 0.0
        %920 = vmatprep.subr.mxu0 0.0
        %921 = vmatpush1.xpose.msra.mxu0 0.0
        %922 = vmatprep.subr.mxu0 0.0
        %923 = vmatpush1.xpose.msra.mxu0 0.0
        %924 = vmatprep.subr.mxu0 0.0
        %925 = vmatpush1.xpose.msra.mxu0 0.0
        %926 = vmatprep.subr.mxu0 0.0
        %927 = vmatpush1.xpose.msra.mxu0 0.0
        %928 = vmatprep.subr.mxu0 0.0
        %929 = vmatpush1.xpose.msra.mxu0 0.0
        %930 = vmatprep.subr.mxu0 0.0
        %931 = vmatpush1.xpose.msra.mxu0 0.0
        %932 = vmatprep.subr.mxu0 0.0
        %933 = vmatpush1.xpose.msra.mxu0 0.0
        %934 = vmatprep.subr.mxu0 0.0
        %935 = vmatpush1.xpose.msra.mxu0 0.0
        %936 = vmatprep.subr.mxu0 0.0
        %937 = vmatpush1.xpose.msra.mxu0 0.0
        %938 = vmatprep.subr.mxu0 0.0
        %939 = vmatpush1.xpose.msra.mxu0 0.0
        %940 = vmatprep.subr.mxu0 0.0
        %941 = vmatpush1.xpose.msra.mxu0 0.0
        %942 = vmatprep.subr.mxu0 0.0
        %943 = vmatpush1.xpose.msra.mxu0 0.0
        %944 = vmatprep.subr.mxu0 0.0
        %945 = vmatpush1.xpose.msra.mxu0 0.0
        %946 = vmatprep.subr.mxu0 0.0
        %947 = vmatpush1.xpose.msra.mxu0 0.0
        %948 = vmatprep.subr.mxu0 0.0
        %949 = vmatpush1.xpose.msra.mxu0 0.0
        %950 = vmatprep.subr.mxu0 0.0
        %951 = vmatpush1.xpose.msra.mxu0 0.0
        %952 = vmatprep.subr.mxu0 0.0
        %953 = vmatpush1.xpose.msra.mxu0 0.0
        %954 = vmatprep.subr.mxu0 0.0
        %955 = vmatpush1.xpose.msra.mxu0 0.0
        %956 = vmatprep.subr.mxu0 0.0
        %957 = vmatpush1.xpose.msra.mxu0 0.0
        %958 = vmatprep.subr.mxu0 0.0
        %959 = vmatpush1.xpose.msra.mxu0 0.0
        %960 = vmatprep.mubr.f32.mxu0 0.0
        %961 = vmatmul.mubr.f32.gmra.mrb[0].mxu0 %v891
        %v962 = vpop.f32.mrb[0].mxu0
        %v963 = vadd.f32 0.0, %v962
        %v964 = vpop.f32.mrb[0].mxu0
        %965 = vdwg.mxu0
        %v967 = vsel %vm813, %v589, 0
        %v970 = vsel %vm813, %v697, 0
        %972 = vmatprep.subr.mxu0 0.0
        %973 = vmatpush1.xpose.msra.mxu0 %v970
        %974 = vmatprep.subr.mxu0 0.0
        %975 = vmatpush1.xpose.msra.mxu0 0.0
        %976 = vmatprep.subr.mxu0 0.0
        %977 = vmatpush1.xpose.msra.mxu0 0.0
        %978 = vmatprep.subr.mxu0 0.0
        %979 = vmatpush1.xpose.msra.mxu0 0.0
        %980 = vmatprep.subr.mxu0 0.0
        %981 = vmatpush1.xpose.msra.mxu0 0.0
        %982 = vmatprep.subr.mxu0 0.0
        %983 = vmatpush1.xpose.msra.mxu0 0.0
        %984 = vmatprep.subr.mxu0 0.0
        %985 = vmatpush1.xpose.msra.mxu0 0.0
        %986 = vmatprep.subr.mxu0 0.0
        %987 = vmatpush1.xpose.msra.mxu0 0.0
        %988 = vmatprep.subr.mxu0 0.0
        %989 = vmatpush1.xpose.msra.mxu0 0.0
        %990 = vmatprep.subr.mxu0 0.0
        %991 = vmatpush1.xpose.msra.mxu0 0.0
        %992 = vmatprep.subr.mxu0 0.0
        %993 = vmatpush1.xpose.msra.mxu0 0.0
        %994 = vmatprep.subr.mxu0 0.0
        %995 = vmatpush1.xpose.msra.mxu0 0.0
        %996 = vmatprep.subr.mxu0 0.0
        %997 = vmatpush1.xpose.msra.mxu0 0.0
        %998 = vmatprep.subr.mxu0 0.0
        %999 = vmatpush1.xpose.msra.mxu0 0.0
        %1000 = vmatprep.subr.mxu0 0.0
        %1001 = vmatpush1.xpose.msra.mxu0 0.0
        %1002 = vmatprep.subr.mxu0 0.0
        %1003 = vmatpush1.xpose.msra.mxu0 0.0
        %1004 = vmatprep.subr.mxu0 0.0
        %1005 = vmatpush1.xpose.msra.mxu0 0.0
        %1006 = vmatprep.subr.mxu0 0.0
        %1007 = vmatpush1.xpose.msra.mxu0 0.0
        %1008 = vmatprep.subr.mxu0 0.0
        %1009 = vmatpush1.xpose.msra.mxu0 0.0
        %1010 = vmatprep.subr.mxu0 0.0
        %1011 = vmatpush1.xpose.msra.mxu0 0.0
        %1012 = vmatprep.subr.mxu0 0.0
        %1013 = vmatpush1.xpose.msra.mxu0 0.0
        %1014 = vmatprep.subr.mxu0 0.0
        %1015 = vmatpush1.xpose.msra.mxu0 0.0
        %1016 = vmatprep.subr.mxu0 0.0
        %1017 = vmatpush1.xpose.msra.mxu0 0.0
        %1018 = vmatprep.subr.mxu0 0.0
        %1019 = vmatpush1.xpose.msra.mxu0 0.0
        %1020 = vmatprep.subr.mxu0 0.0
        %1021 = vmatpush1.xpose.msra.mxu0 0.0
        %1022 = vmatprep.subr.mxu0 0.0
        %1023 = vmatpush1.xpose.msra.mxu0 0.0
        %1024 = vmatprep.subr.mxu0 0.0
        %1025 = vmatpush1.xpose.msra.mxu0 0.0
        %1026 = vmatprep.subr.mxu0 0.0
        %1027 = vmatpush1.xpose.msra.mxu0 0.0
        %1028 = vmatprep.subr.mxu0 0.0
        %1029 = vmatpush1.xpose.msra.mxu0 0.0
        %1030 = vmatprep.subr.mxu0 0.0
        %1031 = vmatpush1.xpose.msra.mxu0 0.0
        %1032 = vmatprep.subr.mxu0 0.0
        %1033 = vmatpush1.xpose.msra.mxu0 0.0
        %1034 = vmatprep.subr.mxu0 0.0
        %1035 = vmatpush1.xpose.msra.mxu0 0.0
        %1036 = vmatprep.mubr.f32.mxu0 0.0
        %1037 = vmatmul.mubr.f32.gmra.mrb[0].mxu0 %v967
        %v1038 = vpop.f32.mrb[0].mxu0
        %v1039 = vadd.f32 0.0, %v1038
        %v1040 = vpop.f32.mrb[0].mxu0
        %1041 = vdwg.mxu0
        %v1043 = vsel %vm813, %v594, 0
        %v1046 = vsel %vm813, %v702, 0
        %1048 = vmatprep.subr.mxu0 0.0
        %1049 = vmatpush1.xpose.msra.mxu0 %v1046
        %1050 = vmatprep.subr.mxu0 0.0
        %1051 = vmatpush1.xpose.msra.mxu0 0.0
        %1052 = vmatprep.subr.mxu0 0.0
        %1053 = vmatpush1.xpose.msra.mxu0 0.0
        %1054 = vmatprep.subr.mxu0 0.0
        %1055 = vmatpush1.xpose.msra.mxu0 0.0
        %1056 = vmatprep.subr.mxu0 0.0
        %1057 = vmatpush1.xpose.msra.mxu0 0.0
        %1058 = vmatprep.subr.mxu0 0.0
        %1059 = vmatpush1.xpose.msra.mxu0 0.0
        %1060 = vmatprep.subr.mxu0 0.0
        %1061 = vmatpush1.xpose.msra.mxu0 0.0
        %1062 = vmatprep.subr.mxu0 0.0
        %1063 = vmatpush1.xpose.msra.mxu0 0.0
        %1064 = vmatprep.subr.mxu0 0.0
        %1065 = vmatpush1.xpose.msra.mxu0 0.0
        %1066 = vmatprep.subr.mxu0 0.0
        %1067 = vmatpush1.xpose.msra.mxu0 0.0
        %1068 = vmatprep.subr.mxu0 0.0
        %1069 = vmatpush1.xpose.msra.mxu0 0.0
        %1070 = vmatprep.subr.mxu0 0.0
        %1071 = vmatpush1.xpose.msra.mxu0 0.0
        %1072 = vmatprep.subr.mxu0 0.0
        %1073 = vmatpush1.xpose.msra.mxu0 0.0
        %1074 = vmatprep.subr.mxu0 0.0
        %1075 = vmatpush1.xpose.msra.mxu0 0.0
        %1076 = vmatprep.subr.mxu0 0.0
        %1077 = vmatpush1.xpose.msra.mxu0 0.0
        %1078 = vmatprep.subr.mxu0 0.0
        %1079 = vmatpush1.xpose.msra.mxu0 0.0
        %1080 = vmatprep.subr.mxu0 0.0
        %1081 = vmatpush1.xpose.msra.mxu0 0.0
        %1082 = vmatprep.subr.mxu0 0.0
        %1083 = vmatpush1.xpose.msra.mxu0 0.0
        %1084 = vmatprep.subr.mxu0 0.0
        %1085 = vmatpush1.xpose.msra.mxu0 0.0
        %1086 = vmatprep.subr.mxu0 0.0
        %1087 = vmatpush1.xpose.msra.mxu0 0.0
        %1088 = vmatprep.subr.mxu0 0.0
        %1089 = vmatpush1.xpose.msra.mxu0 0.0
        %1090 = vmatprep.subr.mxu0 0.0
        %1091 = vmatpush1.xpose.msra.mxu0 0.0
        %1092 = vmatprep.subr.mxu0 0.0
        %1093 = vmatpush1.xpose.msra.mxu0 0.0
        %1094 = vmatprep.subr.mxu0 0.0
        %1095 = vmatpush1.xpose.msra.mxu0 0.0
        %1096 = vmatprep.subr.mxu0 0.0
        %1097 = vmatpush1.xpose.msra.mxu0 0.0
        %1098 = vmatprep.subr.mxu0 0.0
        %1099 = vmatpush1.xpose.msra.mxu0 0.0
        %1100 = vmatprep.subr.mxu0 0.0
        %1101 = vmatpush1.xpose.msra.mxu0 0.0
        %1102 = vmatprep.subr.mxu0 0.0
        %1103 = vmatpush1.xpose.msra.mxu0 0.0
        %1104 = vmatprep.subr.mxu0 0.0
        %1105 = vmatpush1.xpose.msra.mxu0 0.0
        %1106 = vmatprep.subr.mxu0 0.0
        %1107 = vmatpush1.xpose.msra.mxu0 0.0
        %1108 = vmatprep.subr.mxu0 0.0
        %1109 = vmatpush1.xpose.msra.mxu0 0.0
        %1110 = vmatprep.subr.mxu0 0.0
        %1111 = vmatpush1.xpose.msra.mxu0 0.0
        %1112 = vmatprep.mubr.f32.mxu0 0.0
        %1113 = vmatmul.mubr.f32.gmra.mrb[0].mxu0 %v1043
        %v1114 = vpop.f32.mrb[0].mxu0
        %v1115 = vadd.f32 0.0, %v1114
        %v1116 = vpop.f32.mrb[0].mxu0
        %1117 = vdwg.mxu0
        %v1118 = vsel %vm813, %v887, -inf
        %1119 = vmax.xlane.f32.xlu0 %v1118
        %v1120 = vpop.xlane.xlu0 %1119
        %v1121 = vsel %vm813, %v963, -inf
        %1122 = vmax.xlane.f32.xlu0 %v1121
        %v1123 = vpop.xlane.xlu0 %1122
        %v1124 = vsel %vm813, %v1039, -inf
        %1125 = vmax.xlane.f32.xlu0 %v1124
        %v1126 = vpop.xlane.xlu0 %1125
        %v1127 = vsel %vm813, %v1115, -inf
        %1128 = vmax.xlane.f32.xlu0 %v1127
        %v1129 = vpop.xlane.xlu0 %1128
        %v1130 = vmax.f32 %v1120, 0.0
        %v1131 = vmax.f32 %v1123, 0.0
        %v1132 = vmax.f32 %v1126, 0.0
        %v1133 = vmax.f32 %v1129, 0.0
        %v1134 = vsub.f32 %v887, %v1130
        %v1135 = vsub.f32 %v963, %v1131
        %v1136 = vsub.f32 %v1039, %v1132
        %v1137 = vsub.f32 %v1115, %v1133
        %v1138 = vmul.f32 %v1134, 1.442695
        %v1139 = vpow.pop %v1138
        %v1140 = vmul.f32 %v1135, 1.442695
        %v1141 = vpow.pop %v1140
        %v1142 = vmul.f32 %v1136, 1.442695
        %v1143 = vpow.pop %v1142
        %v1144 = vmul.f32 %v1137, 1.442695
        %v1145 = vpow.pop %v1144
        %v1146 = vsel %vm813, %v1139, 0.0
        %1147 = vadd.xlane.f32.xlu0 %v1146
        %v1148 = vpop.xlane.xlu0 %1147
        %v1149 = vsel %vm813, %v1141, 0.0
        %1150 = vadd.xlane.f32.xlu0 %v1149
        %v1151 = vpop.xlane.xlu0 %1150
        %v1152 = vsel %vm813, %v1143, 0.0
        %1153 = vadd.xlane.f32.xlu0 %v1152
        %v1154 = vpop.xlane.xlu0 %1153
        %v1155 = vsel %vm813, %v1145, 0.0
        %1156 = vadd.xlane.f32.xlu0 %v1155
        %v1157 = vpop.xlane.xlu0 %1156
        %v1158 = vsub.f32 0.0, %v1130
        %v1159 = vsub.f32 0.0, %v1131
        %v1160 = vsub.f32 0.0, %v1132
        %v1161 = vsub.f32 0.0, %v1133
        %v1162 = vmul.f32 %v1158, 1.442695
        %v1163 = vpow.pop %v1162
        %v1164 = vmul.f32 %v1159, 1.442695
        %v1165 = vpow.pop %v1164
        %v1166 = vmul.f32 %v1160, 1.442695
        %v1167 = vpow.pop %v1166
        %v1168 = vmul.f32 %v1161, 1.442695
        %v1169 = vpow.pop %v1168
        %v1170 = vadd.f32 %v1148, %v1163
        %v1171 = vadd.f32 %v1151, %v1165
        %v1172 = vadd.f32 %v1154, %v1167
        %v1173 = vadd.f32 %v1157, %v1169
        %v1174 = vrcp.pop %v1170
        %v1175 = vrcp.pop %v1171
        %v1176 = vrcp.pop %v1172
        %v1177 = vrcp.pop %v1173
        %v1178 = vmul.f32 %v1139, %v1174
        %v1179 = vmul.f32 %v1141, %v1175
        %v1180 = vmul.f32 %v1143, %v1176
        %v1181 = vmul.f32 %v1145, %v1177
        %v1183 = vsel %vm813, %v1178, 0
        %1185 = vmatprep.subr.mxu0 0.0
        %1186 = vmatpush1.msra.mxu0 %v795
        %1187 = vmatprep.subr.mxu0 0.0
        %1188 = vmatpush1.msra.mxu0 0.0
        %1189 = vmatprep.subr.mxu0 0.0
        %1190 = vmatpush1.msra.mxu0 0.0
        %1191 = vmatprep.subr.mxu0 0.0
        %1192 = vmatpush1.msra.mxu0 0.0
        %1193 = vmatprep.subr.mxu0 0.0
        %1194 = vmatpush1.msra.mxu0 0.0
        %1195 = vmatprep.subr.mxu0 0.0
        %1196 = vmatpush1.msra.mxu0 0.0
        %1197 = vmatprep.subr.mxu0 0.0
        %1198 = vmatpush1.msra.mxu0 0.0
        %1199 = vmatprep.subr.mxu0 0.0
        %1200 = vmatpush1.msra.mxu0 0.0
        %1201 = vmatprep.subr.mxu0 0.0
        %1202 = vmatpush1.msra.mxu0 0.0
        %1203 = vmatprep.subr.mxu0 0.0
        %1204 = vmatpush1.msra.mxu0 0.0
        %1205 = vmatprep.subr.mxu0 0.0
        %1206 = vmatpush1.msra.mxu0 0.0
        %1207 = vmatprep.subr.mxu0 0.0
        %1208 = vmatpush1.msra.mxu0 0.0
        %1209 = vmatprep.subr.mxu0 0.0
        %1210 = vmatpush1.msra.mxu0 0.0
        %1211 = vmatprep.subr.mxu0 0.0
        %1212 = vmatpush1.msra.mxu0 0.0
        %1213 = vmatprep.subr.mxu0 0.0
        %1214 = vmatpush1.msra.mxu0 0.0
        %1215 = vmatprep.subr.mxu0 0.0
        %1216 = vmatpush1.msra.mxu0 0.0
        %1217 = vmatprep.subr.mxu0 0.0
        %1218 = vmatpush1.msra.mxu0 0.0
        %1219 = vmatprep.subr.mxu0 0.0
        %1220 = vmatpush1.msra.mxu0 0.0
        %1221 = vmatprep.subr.mxu0 0.0
        %1222 = vmatpush1.msra.mxu0 0.0
        %1223 = vmatprep.subr.mxu0 0.0
        %1224 = vmatpush1.msra.mxu0 0.0
        %1225 = vmatprep.subr.mxu0 0.0
        %1226 = vmatpush1.msra.mxu0 0.0
        %1227 = vmatprep.subr.mxu0 0.0
        %1228 = vmatpush1.msra.mxu0 0.0
        %1229 = vmatprep.subr.mxu0 0.0
        %1230 = vmatpush1.msra.mxu0 0.0
        %1231 = vmatprep.subr.mxu0 0.0
        %1232 = vmatpush1.msra.mxu0 0.0
        %1233 = vmatprep.subr.mxu0 0.0
        %1234 = vmatpush1.msra.mxu0 0.0
        %1235 = vmatprep.subr.mxu0 0.0
        %1236 = vmatpush1.msra.mxu0 0.0
        %1237 = vmatprep.subr.mxu0 0.0
        %1238 = vmatpush1.msra.mxu0 0.0
        %1239 = vmatprep.subr.mxu0 0.0
        %1240 = vmatpush1.msra.mxu0 0.0
        %1241 = vmatprep.subr.mxu0 0.0
        %1242 = vmatpush1.msra.mxu0 0.0
        %1243 = vmatprep.subr.mxu0 0.0
        %1244 = vmatpush1.msra.mxu0 0.0
        %1245 = vmatprep.subr.mxu0 0.0
        %1246 = vmatpush1.msra.mxu0 0.0
        %1247 = vmatprep.subr.mxu0 0.0
        %1248 = vmatpush1.msra.mxu0 0.0
        %1249 = vmatprep.mubr.f32.mxu0 0.0
        %1250 = vmatmul.mubr.f32.gmra.mrb[0].mxu0 %v1183
        %v1251 = vpop.f32.mrb[0].mxu0
        %v1252 = vadd.f32 0.0, %v1251
        %v1253 = vpop.f32.mrb[0].mxu0
        %1254 = vdwg.mxu0
        %v1256 = vsel %vm813, %v1179, 0
        %1258 = vmatprep.subr.mxu0 0.0
        %1259 = vmatpush1.msra.mxu0 %v800
        %1260 = vmatprep.subr.mxu0 0.0
        %1261 = vmatpush1.msra.mxu0 0.0
        %1262 = vmatprep.subr.mxu0 0.0
        %1263 = vmatpush1.msra.mxu0 0.0
        %1264 = vmatprep.subr.mxu0 0.0
        %1265 = vmatpush1.msra.mxu0 0.0
        %1266 = vmatprep.subr.mxu0 0.0
        %1267 = vmatpush1.msra.mxu0 0.0
        %1268 = vmatprep.subr.mxu0 0.0
        %1269 = vmatpush1.msra.mxu0 0.0
        %1270 = vmatprep.subr.mxu0 0.0
        %1271 = vmatpush1.msra.mxu0 0.0
        %1272 = vmatprep.subr.mxu0 0.0
        %1273 = vmatpush1.msra.mxu0 0.0
        %1274 = vmatprep.subr.mxu0 0.0
        %1275 = vmatpush1.msra.mxu0 0.0
        %1276 = vmatprep.subr.mxu0 0.0
        %1277 = vmatpush1.msra.mxu0 0.0
        %1278 = vmatprep.subr.mxu0 0.0
        %1279 = vmatpush1.msra.mxu0 0.0
        %1280 = vmatprep.subr.mxu0 0.0
        %1281 = vmatpush1.msra.mxu0 0.0
        %1282 = vmatprep.subr.mxu0 0.0
        %1283 = vmatpush1.msra.mxu0 0.0
        %1284 = vmatprep.subr.mxu0 0.0
        %1285 = vmatpush1.msra.mxu0 0.0
        %1286 = vmatprep.subr.mxu0 0.0
        %1287 = vmatpush1.msra.mxu0 0.0
        %1288 = vmatprep.subr.mxu0 0.0
        %1289 = vmatpush1.msra.mxu0 0.0
        %1290 = vmatprep.subr.mxu0 0.0
        %1291 = vmatpush1.msra.mxu0 0.0
        %1292 = vmatprep.subr.mxu0 0.0
        %1293 = vmatpush1.msra.mxu0 0.0
        %1294 = vmatprep.subr.mxu0 0.0
        %1295 = vmatpush1.msra.mxu0 0.0
        %1296 = vmatprep.subr.mxu0 0.0
        %1297 = vmatpush1.msra.mxu0 0.0
        %1298 = vmatprep.subr.mxu0 0.0
        %1299 = vmatpush1.msra.mxu0 0.0
        %1300 = vmatprep.subr.mxu0 0.0
        %1301 = vmatpush1.msra.mxu0 0.0
        %1302 = vmatprep.subr.mxu0 0.0
        %1303 = vmatpush1.msra.mxu0 0.0
        %1304 = vmatprep.subr.mxu0 0.0
        %1305 = vmatpush1.msra.mxu0 0.0
        %1306 = vmatprep.subr.mxu0 0.0
        %1307 = vmatpush1.msra.mxu0 0.0
        %1308 = vmatprep.subr.mxu0 0.0
        %1309 = vmatpush1.msra.mxu0 0.0
        %1310 = vmatprep.subr.mxu0 0.0
        %1311 = vmatpush1.msra.mxu0 0.0
        %1312 = vmatprep.subr.mxu0 0.0
        %1313 = vmatpush1.msra.mxu0 0.0
        %1314 = vmatprep.subr.mxu0 0.0
        %1315 = vmatpush1.msra.mxu0 0.0
        %1316 = vmatprep.subr.mxu0 0.0
        %1317 = vmatpush1.msra.mxu0 0.0
        %1318 = vmatprep.subr.mxu0 0.0
        %1319 = vmatpush1.msra.mxu0 0.0
        %1320 = vmatprep.subr.mxu0 0.0
        %1321 = vmatpush1.msra.mxu0 0.0
        %1322 = vmatprep.mubr.f32.mxu0 0.0
        %1323 = vmatmul.mubr.f32.gmra.mrb[0].mxu0 %v1256
        %v1324 = vpop.f32.mrb[0].mxu0
        %v1325 = vadd.f32 0.0, %v1324
        %v1326 = vpop.f32.mrb[0].mxu0
        %1327 = vdwg.mxu0
        %v1329 = vsel %vm813, %v1180, 0
        %1331 = vmatprep.subr.mxu0 0.0
        %1332 = vmatpush1.msra.mxu0 %v805
        %1333 = vmatprep.subr.mxu0 0.0
        %1334 = vmatpush1.msra.mxu0 0.0
        %1335 = vmatprep.subr.mxu0 0.0
        %1336 = vmatpush1.msra.mxu0 0.0
        %1337 = vmatprep.subr.mxu0 0.0
        %1338 = vmatpush1.msra.mxu0 0.0
        %1339 = vmatprep.subr.mxu0 0.0
        %1340 = vmatpush1.msra.mxu0 0.0
        %1341 = vmatprep.subr.mxu0 0.0
        %1342 = vmatpush1.msra.mxu0 0.0
        %1343 = vmatprep.subr.mxu0 0.0
        %1344 = vmatpush1.msra.mxu0 0.0
        %1345 = vmatprep.subr.mxu0 0.0
        %1346 = vmatpush1.msra.mxu0 0.0
        %1347 = vmatprep.subr.mxu0 0.0
        %1348 = vmatpush1.msra.mxu0 0.0
        %1349 = vmatprep.subr.mxu0 0.0
        %1350 = vmatpush1.msra.mxu0 0.0
        %1351 = vmatprep.subr.mxu0 0.0
        %1352 = vmatpush1.msra.mxu0 0.0
        %1353 = vmatprep.subr.mxu0 0.0
        %1354 = vmatpush1.msra.mxu0 0.0
        %1355 = vmatprep.subr.mxu0 0.0
        %1356 = vmatpush1.msra.mxu0 0.0
        %1357 = vmatprep.subr.mxu0 0.0
        %1358 = vmatpush1.msra.mxu0 0.0
        %1359 = vmatprep.subr.mxu0 0.0
        %1360 = vmatpush1.msra.mxu0 0.0
        %1361 = vmatprep.subr.mxu0 0.0
        %1362 = vmatpush1.msra.mxu0 0.0
        %1363 = vmatprep.subr.mxu0 0.0
        %1364 = vmatpush1.msra.mxu0 0.0
        %1365 = vmatprep.subr.mxu0 0.0
        %1366 = vmatpush1.msra.mxu0 0.0
        %1367 = vmatprep.subr.mxu0 0.0
        %1368 = vmatpush1.msra.mxu0 0.0
        %1369 = vmatprep.subr.mxu0 0.0
        %1370 = vmatpush1.msra.mxu0 0.0
        %1371 = vmatprep.subr.mxu0 0.0
        %1372 = vmatpush1.msra.mxu0 0.0
        %1373 = vmatprep.subr.mxu0 0.0
        %1374 = vmatpush1.msra.mxu0 0.0
        %1375 = vmatprep.subr.mxu0 0.0
        %1376 = vmatpush1.msra.mxu0 0.0
        %1377 = vmatprep.subr.mxu0 0.0
        %1378 = vmatpush1.msra.mxu0 0.0
        %1379 = vmatprep.subr.mxu0 0.0
        %1380 = vmatpush1.msra.mxu0 0.0
        %1381 = vmatprep.subr.mxu0 0.0
        %1382 = vmatpush1.msra.mxu0 0.0
        %1383 = vmatprep.subr.mxu0 0.0
        %1384 = vmatpush1.msra.mxu0 0.0
        %1385 = vmatprep.subr.mxu0 0.0
        %1386 = vmatpush1.msra.mxu0 0.0
        %1387 = vmatprep.subr.mxu0 0.0
        %1388 = vmatpush1.msra.mxu0 0.0
        %1389 = vmatprep.subr.mxu0 0.0
        %1390 = vmatpush1.msra.mxu0 0.0
        %1391 = vmatprep.subr.mxu0 0.0
        %1392 = vmatpush1.msra.mxu0 0.0
        %1393 = vmatprep.subr.mxu0 0.0
        %1394 = vmatpush1.msra.mxu0 0.0
        %1395 = vmatprep.mubr.f32.mxu0 0.0
        %1396 = vmatmul.mubr.f32.gmra.mrb[0].mxu0 %v1329
        %v1397 = vpop.f32.mrb[0].mxu0
        %v1398 = vadd.f32 0.0, %v1397
        %v1399 = vpop.f32.mrb[0].mxu0
        %1400 = vdwg.mxu0
        %v1402 = vsel %vm813, %v1181, 0
        %1404 = vmatprep.subr.mxu0 0.0
        %1405 = vmatpush1.msra.mxu0 %v810
        %1406 = vmatprep.subr.mxu0 0.0
        %1407 = vmatpush1.msra.mxu0 0.0
        %1408 = vmatprep.subr.mxu0 0.0
        %1409 = vmatpush1.msra.mxu0 0.0
        %1410 = vmatprep.subr.mxu0 0.0
        %1411 = vmatpush1.msra.mxu0 0.0
        %1412 = vmatprep.subr.mxu0 0.0
        %1413 = vmatpush1.msra.mxu0 0.0
        %1414 = vmatprep.subr.mxu0 0.0
        %1415 = vmatpush1.msra.mxu0 0.0
        %1416 = vmatprep.subr.mxu0 0.0
        %1417 = vmatpush1.msra.mxu0 0.0
        %1418 = vmatprep.subr.mxu0 0.0
        %1419 = vmatpush1.msra.mxu0 0.0
        %1420 = vmatprep.subr.mxu0 0.0
        %1421 = vmatpush1.msra.mxu0 0.0
        %1422 = vmatprep.subr.mxu0 0.0
        %1423 = vmatpush1.msra.mxu0 0.0
        %1424 = vmatprep.subr.mxu0 0.0
        %1425 = vmatpush1.msra.mxu0 0.0
        %1426 = vmatprep.subr.mxu0 0.0
        %1427 = vmatpush1.msra.mxu0 0.0
        %1428 = vmatprep.subr.mxu0 0.0
        %1429 = vmatpush1.msra.mxu0 0.0
        %1430 = vmatprep.subr.mxu0 0.0
        %1431 = vmatpush1.msra.mxu0 0.0
        %1432 = vmatprep.subr.mxu0 0.0
        %1433 = vmatpush1.msra.mxu0 0.0
        %1434 = vmatprep.subr.mxu0 0.0
        %1435 = vmatpush1.msra.mxu0 0.0
        %1436 = vmatprep.subr.mxu0 0.0
        %1437 = vmatpush1.msra.mxu0 0.0
        %1438 = vmatprep.subr.mxu0 0.0
        %1439 = vmatpush1.msra.mxu0 0.0
        %1440 = vmatprep.subr.mxu0 0.0
        %1441 = vmatpush1.msra.mxu0 0.0
        %1442 = vmatprep.subr.mxu0 0.0
        %1443 = vmatpush1.msra.mxu0 0.0
        %1444 = vmatprep.subr.mxu0 0.0
        %1445 = vmatpush1.msra.mxu0 0.0
        %1446 = vmatprep.subr.mxu0 0.0
        %1447 = vmatpush1.msra.mxu0 0.0
        %1448 = vmatprep.subr.mxu0 0.0
        %1449 = vmatpush1.msra.mxu0 0.0
        %1450 = vmatprep.subr.mxu0 0.0
        %1451 = vmatpush1.msra.mxu0 0.0
        %1452 = vmatprep.subr.mxu0 0.0
        %1453 = vmatpush1.msra.mxu0 0.0
        %1454 = vmatprep.subr.mxu0 0.0
        %1455 = vmatpush1.msra.mxu0 0.0
        %1456 = vmatprep.subr.mxu0 0.0
        %1457 = vmatpush1.msra.mxu0 0.0
        %1458 = vmatprep.subr.mxu0 0.0
        %1459 = vmatpush1.msra.mxu0 0.0
        %1460 = vmatprep.subr.mxu0 0.0
        %1461 = vmatpush1.msra.mxu0 0.0
        %1462 = vmatprep.subr.mxu0 0.0
        %1463 = vmatpush1.msra.mxu0 0.0
        %1464 = vmatprep.subr.mxu0 0.0
        %1465 = vmatpush1.msra.mxu0 0.0
        %1466 = vmatprep.subr.mxu0 0.0
        %1467 = vmatpush1.msra.mxu0 0.0
        %1468 = vmatprep.mubr.f32.mxu0 0.0
        %1469 = vmatmul.mubr.f32.gmra.mrb[0].mxu0 %v1402
        %v1470 = vpop.f32.mrb[0].mxu0
        %v1471 = vadd.f32 0.0, %v1470
        %v1472 = vpop.f32.mrb[0].mxu0
        %1473 = vdwg.mxu0
        %1474 = vrot.lane.b32.xlu0 %v579, 120
        %v1475 = vpop.permute.xlu0 %1474
        %1476 = vrot.lane.b32.xlu0 %v687, 120
        %v1477 = vpop.permute.xlu0 %1476
        %v1478 = vsel %vm813, %v1475, 0
        %v1480 = vsel %vm813, %v1477, 0
        %1482 = vmatprep.subr.mxu0 0.0
        %1483 = vmatpush1.xpose.msra.mxu0 %v1480
        %1484 = vmatprep.subr.mxu0 0.0
        %1485 = vmatpush1.xpose.msra.mxu0 0.0
        %1486 = vmatprep.subr.mxu0 0.0
        %1487 = vmatpush1.xpose.msra.mxu0 0.0
        %1488 = vmatprep.subr.mxu0 0.0
        %1489 = vmatpush1.xpose.msra.mxu0 0.0
        %1490 = vmatprep.subr.mxu0 0.0
        %1491 = vmatpush1.xpose.msra.mxu0 0.0
        %1492 = vmatprep.subr.mxu0 0.0
        %1493 = vmatpush1.xpose.msra.mxu0 0.0
        %1494 = vmatprep.subr.mxu0 0.0
        %1495 = vmatpush1.xpose.msra.mxu0 0.0
        %1496 = vmatprep.subr.mxu0 0.0
        %1497 = vmatpush1.xpose.msra.mxu0 0.0
        %1498 = vmatprep.subr.mxu0 0.0
        %1499 = vmatpush1.xpose.msra.mxu0 0.0
        %1500 = vmatprep.subr.mxu0 0.0
        %1501 = vmatpush1.xpose.msra.mxu0 0.0
        %1502 = vmatprep.subr.mxu0 0.0
        %1503 = vmatpush1.xpose.msra.mxu0 0.0
        %1504 = vmatprep.subr.mxu0 0.0
        %1505 = vmatpush1.xpose.msra.mxu0 0.0
        %1506 = vmatprep.subr.mxu0 0.0
        %1507 = vmatpush1.xpose.msra.mxu0 0.0
        %1508 = vmatprep.subr.mxu0 0.0
        %1509 = vmatpush1.xpose.msra.mxu0 0.0
        %1510 = vmatprep.subr.mxu0 0.0
        %1511 = vmatpush1.xpose.msra.mxu0 0.0
        %1512 = vmatprep.subr.mxu0 0.0
        %1513 = vmatpush1.xpose.msra.mxu0 0.0
        %1514 = vmatprep.subr.mxu0 0.0
        %1515 = vmatpush1.xpose.msra.mxu0 0.0
        %1516 = vmatprep.subr.mxu0 0.0
        %1517 = vmatpush1.xpose.msra.mxu0 0.0
        %1518 = vmatprep.subr.mxu0 0.0
        %1519 = vmatpush1.xpose.msra.mxu0 0.0
        %1520 = vmatprep.subr.mxu0 0.0
        %1521 = vmatpush1.xpose.msra.mxu0 0.0
        %1522 = vmatprep.subr.mxu0 0.0
        %1523 = vmatpush1.xpose.msra.mxu0 0.0
        %1524 = vmatprep.subr.mxu0 0.0
        %1525 = vmatpush1.xpose.msra.mxu0 0.0
        %1526 = vmatprep.subr.mxu0 0.0
        %1527 = vmatpush1.xpose.msra.mxu0 0.0
        %1528 = vmatprep.subr.mxu0 0.0
        %1529 = vmatpush1.xpose.msra.mxu0 0.0
        %1530 = vmatprep.subr.mxu0 0.0
        %1531 = vmatpush1.xpose.msra.mxu0 0.0
        %1532 = vmatprep.subr.mxu0 0.0
        %1533 = vmatpush1.xpose.msra.mxu0 0.0
        %1534 = vmatprep.subr.mxu0 0.0
        %1535 = vmatpush1.xpose.msra.mxu0 0.0
        %1536 = vmatprep.subr.mxu0 0.0
        %1537 = vmatpush1.xpose.msra.mxu0 0.0
        %1538 = vmatprep.subr.mxu0 0.0
        %1539 = vmatpush1.xpose.msra.mxu0 0.0
        %1540 = vmatprep.subr.mxu0 0.0
        %1541 = vmatpush1.xpose.msra.mxu0 0.0
        %1542 = vmatprep.subr.mxu0 0.0
        %1543 = vmatpush1.xpose.msra.mxu0 0.0
        %1544 = vmatprep.subr.mxu0 0.0
        %1545 = vmatpush1.xpose.msra.mxu0 0.0
        %1546 = vmatprep.mubr.f32.mxu0 0.0
        %1547 = vmatmul.mubr.f32.gmra.mrb[0].mxu0 %v1478
        %v1548 = vpop.f32.mrb[0].mxu0
        %v1549 = vadd.f32 0.0, %v1548
        %v1550 = vpop.f32.mrb[0].mxu0
        %1551 = vdwg.mxu0
        %1552 = vrot.lane.b32.xlu0 %v584, 120
        %v1553 = vpop.permute.xlu0 %1552
        %1554 = vrot.lane.b32.xlu0 %v692, 120
        %v1555 = vpop.permute.xlu0 %1554
        %v1556 = vsel %vm813, %v1553, 0
        %v1558 = vsel %vm813, %v1555, 0
        %1560 = vmatprep.subr.mxu0 0.0
        %1561 = vmatpush1.xpose.msra.mxu0 %v1558
        %1562 = vmatprep.subr.mxu0 0.0
        %1563 = vmatpush1.xpose.msra.mxu0 0.0
        %1564 = vmatprep.subr.mxu0 0.0
        %1565 = vmatpush1.xpose.msra.mxu0 0.0
        %1566 = vmatprep.subr.mxu0 0.0
        %1567 = vmatpush1.xpose.msra.mxu0 0.0
        %1568 = vmatprep.subr.mxu0 0.0
        %1569 = vmatpush1.xpose.msra.mxu0 0.0
        %1570 = vmatprep.subr.mxu0 0.0
        %1571 = vmatpush1.xpose.msra.mxu0 0.0
        %1572 = vmatprep.subr.mxu0 0.0
        %1573 = vmatpush1.xpose.msra.mxu0 0.0
        %1574 = vmatprep.subr.mxu0 0.0
        %1575 = vmatpush1.xpose.msra.mxu0 0.0
        %1576 = vmatprep.subr.mxu0 0.0
        %1577 = vmatpush1.xpose.msra.mxu0 0.0
        %1578 = vmatprep.subr.mxu0 0.0
        %1579 = vmatpush1.xpose.msra.mxu0 0.0
        %1580 = vmatprep.subr.mxu0 0.0
        %1581 = vmatpush1.xpose.msra.mxu0 0.0
        %1582 = vmatprep.subr.mxu0 0.0
        %1583 = vmatpush1.xpose.msra.mxu0 0.0
        %1584 = vmatprep.subr.mxu0 0.0
        %1585 = vmatpush1.xpose.msra.mxu0 0.0
        %1586 = vmatprep.subr.mxu0 0.0
        %1587 = vmatpush1.xpose.msra.mxu0 0.0
        %1588 = vmatprep.subr.mxu0 0.0
        %1589 = vmatpush1.xpose.msra.mxu0 0.0
        %1590 = vmatprep.subr.mxu0 0.0
        %1591 = vmatpush1.xpose.msra.mxu0 0.0
        %1592 = vmatprep.subr.mxu0 0.0
        %1593 = vmatpush1.xpose.msra.mxu0 0.0
        %1594 = vmatprep.subr.mxu0 0.0
        %1595 = vmatpush1.xpose.msra.mxu0 0.0
        %1596 = vmatprep.subr.mxu0 0.0
        %1597 = vmatpush1.xpose.msra.mxu0 0.0
        %1598 = vmatprep.subr.mxu0 0.0
        %1599 = vmatpush1.xpose.msra.mxu0 0.0
        %1600 = vmatprep.subr.mxu0 0.0
        %1601 = vmatpush1.xpose.msra.mxu0 0.0
        %1602 = vmatprep.subr.mxu0 0.0
        %1603 = vmatpush1.xpose.msra.mxu0 0.0
        %1604 = vmatprep.subr.mxu0 0.0
        %1605 = vmatpush1.xpose.msra.mxu0 0.0
        %1606 = vmatprep.subr.mxu0 0.0
        %1607 = vmatpush1.xpose.msra.mxu0 0.0
        %1608 = vmatprep.subr.mxu0 0.0
        %1609 = vmatpush1.xpose.msra.mxu0 0.0
        %1610 = vmatprep.subr.mxu0 0.0
        %1611 = vmatpush1.xpose.msra.mxu0 0.0
        %1612 = vmatprep.subr.mxu0 0.0
        %1613 = vmatpush1.xpose.msra.mxu0 0.0
        %1614 = vmatprep.subr.mxu0 0.0
        %1615 = vmatpush1.xpose.msra.mxu0 0.0
        %1616 = vmatprep.subr.mxu0 0.0
        %1617 = vmatpush1.xpose.msra.mxu0 0.0
        %1618 = vmatprep.subr.mxu0 0.0
        %1619 = vmatpush1.xpose.msra.mxu0 0.0
        %1620 = vmatprep.subr.mxu0 0.0
        %1621 = vmatpush1.xpose.msra.mxu0 0.0
        %1622 = vmatprep.subr.mxu0 0.0
        %1623 = vmatpush1.xpose.msra.mxu0 0.0
        %1624 = vmatprep.mubr.f32.mxu0 0.0
        %1625 = vmatmul.mubr.f32.gmra.mrb[0].mxu0 %v1556
        %v1626 = vpop.f32.mrb[0].mxu0
        %v1627 = vadd.f32 0.0, %v1626
        %v1628 = vpop.f32.mrb[0].mxu0
        %1629 = vdwg.mxu0
        %1630 = vrot.lane.b32.xlu0 %v589, 120
        %v1631 = vpop.permute.xlu0 %1630
        %1632 = vrot.lane.b32.xlu0 %v697, 120
        %v1633 = vpop.permute.xlu0 %1632
        %v1634 = vsel %vm813, %v1631, 0
        %v1636 = vsel %vm813, %v1633, 0
        %1638 = vmatprep.subr.mxu0 0.0
        %1639 = vmatpush1.xpose.msra.mxu0 %v1636
        %1640 = vmatprep.subr.mxu0 0.0
        %1641 = vmatpush1.xpose.msra.mxu0 0.0
        %1642 = vmatprep.subr.mxu0 0.0
        %1643 = vmatpush1.xpose.msra.mxu0 0.0
        %1644 = vmatprep.subr.mxu0 0.0
        %1645 = vmatpush1.xpose.msra.mxu0 0.0
        %1646 = vmatprep.subr.mxu0 0.0
        %1647 = vmatpush1.xpose.msra.mxu0 0.0
        %1648 = vmatprep.subr.mxu0 0.0
        %1649 = vmatpush1.xpose.msra.mxu0 0.0
        %1650 = vmatprep.subr.mxu0 0.0
        %1651 = vmatpush1.xpose.msra.mxu0 0.0
        %1652 = vmatprep.subr.mxu0 0.0
        %1653 = vmatpush1.xpose.msra.mxu0 0.0
        %1654 = vmatprep.subr.mxu0 0.0
        %1655 = vmatpush1.xpose.msra.mxu0 0.0
        %1656 = vmatprep.subr.mxu0 0.0
        %1657 = vmatpush1.xpose.msra.mxu0 0.0
        %1658 = vmatprep.subr.mxu0 0.0
        %1659 = vmatpush1.xpose.msra.mxu0 0.0
        %1660 = vmatprep.subr.mxu0 0.0
        %1661 = vmatpush1.xpose.msra.mxu0 0.0
        %1662 = vmatprep.subr.mxu0 0.0
        %1663 = vmatpush1.xpose.msra.mxu0 0.0
        %1664 = vmatprep.subr.mxu0 0.0
        %1665 = vmatpush1.xpose.msra.mxu0 0.0
        %1666 = vmatprep.subr.mxu0 0.0
        %1667 = vmatpush1.xpose.msra.mxu0 0.0
        %1668 = vmatprep.subr.mxu0 0.0
        %1669 = vmatpush1.xpose.msra.mxu0 0.0
        %1670 = vmatprep.subr.mxu0 0.0
        %1671 = vmatpush1.xpose.msra.mxu0 0.0
        %1672 = vmatprep.subr.mxu0 0.0
        %1673 = vmatpush1.xpose.msra.mxu0 0.0
        %1674 = vmatprep.subr.mxu0 0.0
        %1675 = vmatpush1.xpose.msra.mxu0 0.0
        %1676 = vmatprep.subr.mxu0 0.0
        %1677 = vmatpush1.xpose.msra.mxu0 0.0
        %1678 = vmatprep.subr.mxu0 0.0
        %1679 = vmatpush1.xpose.msra.mxu0 0.0
        %1680 = vmatprep.subr.mxu0 0.0
        %1681 = vmatpush1.xpose.msra.mxu0 0.0
        %1682 = vmatprep.subr.mxu0 0.0
        %1683 = vmatpush1.xpose.msra.mxu0 0.0
        %1684 = vmatprep.subr.mxu0 0.0
        %1685 = vmatpush1.xpose.msra.mxu0 0.0
        %1686 = vmatprep.subr.mxu0 0.0
        %1687 = vmatpush1.xpose.msra.mxu0 0.0
        %1688 = vmatprep.subr.mxu0 0.0
        %1689 = vmatpush1.xpose.msra.mxu0 0.0
        %1690 = vmatprep.subr.mxu0 0.0
        %1691 = vmatpush1.xpose.msra.mxu0 0.0
        %1692 = vmatprep.subr.mxu0 0.0
        %1693 = vmatpush1.xpose.msra.mxu0 0.0
        %1694 = vmatprep.subr.mxu0 0.0
        %1695 = vmatpush1.xpose.msra.mxu0 0.0
        %1696 = vmatprep.subr.mxu0 0.0
        %1697 = vmatpush1.xpose.msra.mxu0 0.0
        %1698 = vmatprep.subr.mxu0 0.0
        %1699 = vmatpush1.xpose.msra.mxu0 0.0
        %1700 = vmatprep.subr.mxu0 0.0
        %1701 = vmatpush1.xpose.msra.mxu0 0.0
        %1702 = vmatprep.mubr.f32.mxu0 0.0
        %1703 = vmatmul.mubr.f32.gmra.mrb[0].mxu0 %v1634
        %v1704 = vpop.f32.mrb[0].mxu0
        %v1705 = vadd.f32 0.0, %v1704
        %v1706 = vpop.f32.mrb[0].mxu0
        %1707 = vdwg.mxu0
        %1708 = vrot.lane.b32.xlu0 %v594, 120
        %v1709 = vpop.permute.xlu0 %1708
        %1710 = vrot.lane.b32.xlu0 %v702, 120
        %v1711 = vpop.permute.xlu0 %1710
        %v1712 = vsel %vm813, %v1709, 0
        %v1714 = vsel %vm813, %v1711, 0
        %1716 = vmatprep.subr.mxu0 0.0
        %1717 = vmatpush1.xpose.msra.mxu0 %v1714
        %1718 = vmatprep.subr.mxu0 0.0
        %1719 = vmatpush1.xpose.msra.mxu0 0.0
        %1720 = vmatprep.subr.mxu0 0.0
        %1721 = vmatpush1.xpose.msra.mxu0 0.0
        %1722 = vmatprep.subr.mxu0 0.0
        %1723 = vmatpush1.xpose.msra.mxu0 0.0
        %1724 = vmatprep.subr.mxu0 0.0
        %1725 = vmatpush1.xpose.msra.mxu0 0.0
        %1726 = vmatprep.subr.mxu0 0.0
        %1727 = vmatpush1.xpose.msra.mxu0 0.0
        %1728 = vmatprep.subr.mxu0 0.0
        %1729 = vmatpush1.xpose.msra.mxu0 0.0
        %1730 = vmatprep.subr.mxu0 0.0
        %1731 = vmatpush1.xpose.msra.mxu0 0.0
        %1732 = vmatprep.subr.mxu0 0.0
        %1733 = vmatpush1.xpose.msra.mxu0 0.0
        %1734 = vmatprep.subr.mxu0 0.0
        %1735 = vmatpush1.xpose.msra.mxu0 0.0
        %1736 = vmatprep.subr.mxu0 0.0
        %1737 = vmatpush1.xpose.msra.mxu0 0.0
        %1738 = vmatprep.subr.mxu0 0.0
        %1739 = vmatpush1.xpose.msra.mxu0 0.0
        %1740 = vmatprep.subr.mxu0 0.0
        %1741 = vmatpush1.xpose.msra.mxu0 0.0
        %1742 = vmatprep.subr.mxu0 0.0
        %1743 = vmatpush1.xpose.msra.mxu0 0.0
        %1744 = vmatprep.subr.mxu0 0.0
        %1745 = vmatpush1.xpose.msra.mxu0 0.0
        %1746 = vmatprep.subr.mxu0 0.0
        %1747 = vmatpush1.xpose.msra.mxu0 0.0
        %1748 = vmatprep.subr.mxu0 0.0
        %1749 = vmatpush1.xpose.msra.mxu0 0.0
        %1750 = vmatprep.subr.mxu0 0.0
        %1751 = vmatpush1.xpose.msra.mxu0 0.0
        %1752 = vmatprep.subr.mxu0 0.0
        %1753 = vmatpush1.xpose.msra.mxu0 0.0
        %1754 = vmatprep.subr.mxu0 0.0
        %1755 = vmatpush1.xpose.msra.mxu0 0.0
        %1756 = vmatprep.subr.mxu0 0.0
        %1757 = vmatpush1.xpose.msra.mxu0 0.0
        %1758 = vmatprep.subr.mxu0 0.0
        %1759 = vmatpush1.xpose.msra.mxu0 0.0
        %1760 = vmatprep.subr.mxu0 0.0
        %1761 = vmatpush1.xpose.msra.mxu0 0.0
        %1762 = vmatprep.subr.mxu0 0.0
        %1763 = vmatpush1.xpose.msra.mxu0 0.0
        %1764 = vmatprep.subr.mxu0 0.0
        %1765 = vmatpush1.xpose.msra.mxu0 0.0
        %1766 = vmatprep.subr.mxu0 0.0
        %1767 = vmatpush1.xpose.msra.mxu0 0.0
        %1768 = vmatprep.subr.mxu0 0.0
        %1769 = vmatpush1.xpose.msra.mxu0 0.0
        %1770 = vmatprep.subr.mxu0 0.0
        %1771 = vmatpush1.xpose.msra.mxu0 0.0
        %1772 = vmatprep.subr.mxu0 0.0
        %1773 = vmatpush1.xpose.msra.mxu0 0.0
        %1774 = vmatprep.subr.mxu0 0.0
        %1775 = vmatpush1.xpose.msra.mxu0 0.0
        %1776 = vmatprep.subr.mxu0 0.0
        %1777 = vmatpush1.xpose.msra.mxu0 0.0
        %1778 = vmatprep.subr.mxu0 0.0
        %1779 = vmatpush1.xpose.msra.mxu0 0.0
        %1780 = vmatprep.mubr.f32.mxu0 0.0
        %1781 = vmatmul.mubr.f32.gmra.mrb[0].mxu0 %v1712
        %v1782 = vpop.f32.mrb[0].mxu0
        %v1783 = vadd.f32 0.0, %v1782
        %v1784 = vpop.f32.mrb[0].mxu0
        %1785 = vdwg.mxu0
        %v1786 = vsel %vm813, %v1549, -inf
        %1787 = vmax.xlane.f32.xlu0 %v1786
        %v1788 = vpop.xlane.xlu0 %1787
        %v1789 = vsel %vm813, %v1627, -inf
        %1790 = vmax.xlane.f32.xlu0 %v1789
        %v1791 = vpop.xlane.xlu0 %1790
        %v1792 = vsel %vm813, %v1705, -inf
        %1793 = vmax.xlane.f32.xlu0 %v1792
        %v1794 = vpop.xlane.xlu0 %1793
        %v1795 = vsel %vm813, %v1783, -inf
        %1796 = vmax.xlane.f32.xlu0 %v1795
        %v1797 = vpop.xlane.xlu0 %1796
        %v1798 = vmax.f32 %v1788, 0.0
        %v1799 = vmax.f32 %v1791, 0.0
        %v1800 = vmax.f32 %v1794, 0.0
        %v1801 = vmax.f32 %v1797, 0.0
        %v1802 = vsub.f32 %v1549, %v1798
        %v1803 = vsub.f32 %v1627, %v1799
        %v1804 = vsub.f32 %v1705, %v1800
        %v1805 = vsub.f32 %v1783, %v1801
        %v1806 = vmul.f32 %v1802, 1.442695
        %v1807 = vpow.pop %v1806
        %v1808 = vmul.f32 %v1803, 1.442695
        %v1809 = vpow.pop %v1808
        %v1810 = vmul.f32 %v1804, 1.442695
        %v1811 = vpow.pop %v1810
        %v1812 = vmul.f32 %v1805, 1.442695
        %v1813 = vpow.pop %v1812
        %v1814 = vsel %vm813, %v1807, 0.0
        %1815 = vadd.xlane.f32.xlu0 %v1814
        %v1816 = vpop.xlane.xlu0 %1815
        %v1817 = vsel %vm813, %v1809, 0.0
        %1818 = vadd.xlane.f32.xlu0 %v1817
        %v1819 = vpop.xlane.xlu0 %1818
        %v1820 = vsel %vm813, %v1811, 0.0
        %1821 = vadd.xlane.f32.xlu0 %v1820
        %v1822 = vpop.xlane.xlu0 %1821
        %v1823 = vsel %vm813, %v1813, 0.0
        %1824 = vadd.xlane.f32.xlu0 %v1823
        %v1825 = vpop.xlane.xlu0 %1824
        %v1826 = vsub.f32 0.0, %v1798
        %v1827 = vsub.f32 0.0, %v1799
        %v1828 = vsub.f32 0.0, %v1800
        %v1829 = vsub.f32 0.0, %v1801
        %v1830 = vmul.f32 %v1826, 1.442695
        %v1831 = vpow.pop %v1830
        %v1832 = vmul.f32 %v1827, 1.442695
        %v1833 = vpow.pop %v1832
        %v1834 = vmul.f32 %v1828, 1.442695
        %v1835 = vpow.pop %v1834
        %v1836 = vmul.f32 %v1829, 1.442695
        %v1837 = vpow.pop %v1836
        %v1838 = vadd.f32 %v1816, %v1831
        %v1839 = vadd.f32 %v1819, %v1833
        %v1840 = vadd.f32 %v1822, %v1835
        %v1841 = vadd.f32 %v1825, %v1837
        %v1842 = vrcp.pop %v1838
        %v1843 = vrcp.pop %v1839
        %v1844 = vrcp.pop %v1840
        %v1845 = vrcp.pop %v1841
        %v1846 = vmul.f32 %v1807, %v1842
        %v1847 = vmul.f32 %v1809, %v1843
        %v1848 = vmul.f32 %v1811, %v1844
        %v1849 = vmul.f32 %v1813, %v1845
        %1851 = vrot.lane.b32.xlu0 %v795, 120
        %v1852 = vpop.permute.xlu0 %1851
        %v1855 = vsel %vm813, %v1846, 0
        %1857 = vmatprep.subr.mxu0 0.0
        %1858 = vmatpush1.msra.mxu0 %v1852
        %1859 = vmatprep.subr.mxu0 0.0
        %1860 = vmatpush1.msra.mxu0 0.0
        %1861 = vmatprep.subr.mxu0 0.0
        %1862 = vmatpush1.msra.mxu0 0.0
        %1863 = vmatprep.subr.mxu0 0.0
        %1864 = vmatpush1.msra.mxu0 0.0
        %1865 = vmatprep.subr.mxu0 0.0
        %1866 = vmatpush1.msra.mxu0 0.0
        %1867 = vmatprep.subr.mxu0 0.0
        %1868 = vmatpush1.msra.mxu0 0.0
        %1869 = vmatprep.subr.mxu0 0.0
        %1870 = vmatpush1.msra.mxu0 0.0
        %1871 = vmatprep.subr.mxu0 0.0
        %1872 = vmatpush1.msra.mxu0 0.0
        %1873 = vmatprep.subr.mxu0 0.0
        %1874 = vmatpush1.msra.mxu0 0.0
        %1875 = vmatprep.subr.mxu0 0.0
        %1876 = vmatpush1.msra.mxu0 0.0
        %1877 = vmatprep.subr.mxu0 0.0
        %1878 = vmatpush1.msra.mxu0 0.0
        %1879 = vmatprep.subr.mxu0 0.0
        %1880 = vmatpush1.msra.mxu0 0.0
        %1881 = vmatprep.subr.mxu0 0.0
        %1882 = vmatpush1.msra.mxu0 0.0
        %1883 = vmatprep.subr.mxu0 0.0
        %1884 = vmatpush1.msra.mxu0 0.0
        %1885 = vmatprep.subr.mxu0 0.0
        %1886 = vmatpush1.msra.mxu0 0.0
        %1887 = vmatprep.subr.mxu0 0.0
        %1888 = vmatpush1.msra.mxu0 0.0
        %1889 = vmatprep.subr.mxu0 0.0
        %1890 = vmatpush1.msra.mxu0 0.0
        %1891 = vmatprep.subr.mxu0 0.0
        %1892 = vmatpush1.msra.mxu0 0.0
        %1893 = vmatprep.subr.mxu0 0.0
        %1894 = vmatpush1.msra.mxu0 0.0
        %1895 = vmatprep.subr.mxu0 0.0
        %1896 = vmatpush1.msra.mxu0 0.0
        %1897 = vmatprep.subr.mxu0 0.0
        %1898 = vmatpush1.msra.mxu0 0.0
        %1899 = vmatprep.subr.mxu0 0.0
        %1900 = vmatpush1.msra.mxu0 0.0
        %1901 = vmatprep.subr.mxu0 0.0
        %1902 = vmatpush1.msra.mxu0 0.0
        %1903 = vmatprep.subr.mxu0 0.0
        %1904 = vmatpush1.msra.mxu0 0.0
        %1905 = vmatprep.subr.mxu0 0.0
        %1906 = vmatpush1.msra.mxu0 0.0
        %1907 = vmatprep.subr.mxu0 0.0
        %1908 = vmatpush1.msra.mxu0 0.0
        %1909 = vmatprep.subr.mxu0 0.0
        %1910 = vmatpush1.msra.mxu0 0.0
        %1911 = vmatprep.subr.mxu0 0.0
        %1912 = vmatpush1.msra.mxu0 0.0
        %1913 = vmatprep.subr.mxu0 0.0
        %1914 = vmatpush1.msra.mxu0 0.0
        %1915 = vmatprep.subr.mxu0 0.0
        %1916 = vmatpush1.msra.mxu0 0.0
        %1917 = vmatprep.subr.mxu0 0.0
        %1918 = vmatpush1.msra.mxu0 0.0
        %1919 = vmatprep.subr.mxu0 0.0
        %1920 = vmatpush1.msra.mxu0 0.0
        %1921 = vmatprep.mubr.f32.mxu0 0.0
        %1922 = vmatmul.mubr.f32.gmra.mrb[0].mxu0 %v1855
        %v1923 = vpop.f32.mrb[0].mxu0
        %v1924 = vadd.f32 0.0, %v1923
        %v1925 = vpop.f32.mrb[0].mxu0
        %1926 = vdwg.mxu0
        %1928 = vrot.lane.b32.xlu0 %v800, 120
        %v1929 = vpop.permute.xlu0 %1928
        %v1932 = vsel %vm813, %v1847, 0
        %1934 = vmatprep.subr.mxu0 0.0
        %1935 = vmatpush1.msra.mxu0 %v1929
        %1936 = vmatprep.subr.mxu0 0.0
        %1937 = vmatpush1.msra.mxu0 0.0
        %1938 = vmatprep.subr.mxu0 0.0
        %1939 = vmatpush1.msra.mxu0 0.0
        %1940 = vmatprep.subr.mxu0 0.0
        %1941 = vmatpush1.msra.mxu0 0.0
        %1942 = vmatprep.subr.mxu0 0.0
        %1943 = vmatpush1.msra.mxu0 0.0
        %1944 = vmatprep.subr.mxu0 0.0
        %1945 = vmatpush1.msra.mxu0 0.0
        %1946 = vmatprep.subr.mxu0 0.0
        %1947 = vmatpush1.msra.mxu0 0.0
        %1948 = vmatprep.subr.mxu0 0.0
        %1949 = vmatpush1.msra.mxu0 0.0
        %1950 = vmatprep.subr.mxu0 0.0
        %1951 = vmatpush1.msra.mxu0 0.0
        %1952 = vmatprep.subr.mxu0 0.0
        %1953 = vmatpush1.msra.mxu0 0.0
        %1954 = vmatprep.subr.mxu0 0.0
        %1955 = vmatpush1.msra.mxu0 0.0
        %1956 = vmatprep.subr.mxu0 0.0
        %1957 = vmatpush1.msra.mxu0 0.0
        %1958 = vmatprep.subr.mxu0 0.0
        %1959 = vmatpush1.msra.mxu0 0.0
        %1960 = vmatprep.subr.mxu0 0.0
        %1961 = vmatpush1.msra.mxu0 0.0
        %1962 = vmatprep.subr.mxu0 0.0
        %1963 = vmatpush1.msra.mxu0 0.0
        %1964 = vmatprep.subr.mxu0 0.0
        %1965 = vmatpush1.msra.mxu0 0.0
        %1966 = vmatprep.subr.mxu0 0.0
        %1967 = vmatpush1.msra.mxu0 0.0
        %1968 = vmatprep.subr.mxu0 0.0
        %1969 = vmatpush1.msra.mxu0 0.0
        %1970 = vmatprep.subr.mxu0 0.0
        %1971 = vmatpush1.msra.mxu0 0.0
        %1972 = vmatprep.subr.mxu0 0.0
        %1973 = vmatpush1.msra.mxu0 0.0
        %1974 = vmatprep.subr.mxu0 0.0
        %1975 = vmatpush1.msra.mxu0 0.0
        %1976 = vmatprep.subr.mxu0 0.0
        %1977 = vmatpush1.msra.mxu0 0.0
        %1978 = vmatprep.subr.mxu0 0.0
        %1979 = vmatpush1.msra.mxu0 0.0
        %1980 = vmatprep.subr.mxu0 0.0
        %1981 = vmatpush1.msra.mxu0 0.0
        %1982 = vmatprep.subr.mxu0 0.0
        %1983 = vmatpush1.msra.mxu0 0.0
        %1984 = vmatprep.subr.mxu0 0.0
        %1985 = vmatpush1.msra.mxu0 0.0
        %1986 = vmatprep.subr.mxu0 0.0
        %1987 = vmatpush1.msra.mxu0 0.0
        %1988 = vmatprep.subr.mxu0 0.0
        %1989 = vmatpush1.msra.mxu0 0.0
        %1990 = vmatprep.subr.mxu0 0.0
        %1991 = vmatpush1.msra.mxu0 0.0
        %1992 = vmatprep.subr.mxu0 0.0
        %1993 = vmatpush1.msra.mxu0 0.0
        %1994 = vmatprep.subr.mxu0 0.0
        %1995 = vmatpush1.msra.mxu0 0.0
        %1996 = vmatprep.subr.mxu0 0.0
        %1997 = vmatpush1.msra.mxu0 0.0
        %1998 = vmatprep.mubr.f32.mxu0 0.0
        %1999 = vmatmul.mubr.f32.gmra.mrb[0].mxu0 %v1932
        %v2000 = vpop.f32.mrb[0].mxu0
        %v2001 = vadd.f32 0.0, %v2000
        %v2002 = vpop.f32.mrb[0].mxu0
        %2003 = vdwg.mxu0
        %2005 = vrot.lane.b32.xlu0 %v805, 120
        %v2006 = vpop.permute.xlu0 %2005
        %v2009 = vsel %vm813, %v1848, 0
        %2011 = vmatprep.subr.mxu0 0.0
        %2012 = vmatpush1.msra.mxu0 %v2006
        %2013 = vmatprep.subr.mxu0 0.0
        %2014 = vmatpush1.msra.mxu0 0.0
        %2015 = vmatprep.subr.mxu0 0.0
        %2016 = vmatpush1.msra.mxu0 0.0
        %2017 = vmatprep.subr.mxu0 0.0
        %2018 = vmatpush1.msra.mxu0 0.0
        %2019 = vmatprep.subr.mxu0 0.0
        %2020 = vmatpush1.msra.mxu0 0.0
        %2021 = vmatprep.subr.mxu0 0.0
        %2022 = vmatpush1.msra.mxu0 0.0
        %2023 = vmatprep.subr.mxu0 0.0
        %2024 = vmatpush1.msra.mxu0 0.0
        %2025 = vmatprep.subr.mxu0 0.0
        %2026 = vmatpush1.msra.mxu0 0.0
        %2027 = vmatprep.subr.mxu0 0.0
        %2028 = vmatpush1.msra.mxu0 0.0
        %2029 = vmatprep.subr.mxu0 0.0
        %2030 = vmatpush1.msra.mxu0 0.0
        %2031 = vmatprep.subr.mxu0 0.0
        %2032 = vmatpush1.msra.mxu0 0.0
        %2033 = vmatprep.subr.mxu0 0.0
        %2034 = vmatpush1.msra.mxu0 0.0
        %2035 = vmatprep.subr.mxu0 0.0
        %2036 = vmatpush1.msra.mxu0 0.0
        %2037 = vmatprep.subr.mxu0 0.0
        %2038 = vmatpush1.msra.mxu0 0.0
        %2039 = vmatprep.subr.mxu0 0.0
        %2040 = vmatpush1.msra.mxu0 0.0
        %2041 = vmatprep.subr.mxu0 0.0
        %2042 = vmatpush1.msra.mxu0 0.0
        %2043 = vmatprep.subr.mxu0 0.0
        %2044 = vmatpush1.msra.mxu0 0.0
        %2045 = vmatprep.subr.mxu0 0.0
        %2046 = vmatpush1.msra.mxu0 0.0
        %2047 = vmatprep.subr.mxu0 0.0
        %2048 = vmatpush1.msra.mxu0 0.0
        %2049 = vmatprep.subr.mxu0 0.0
        %2050 = vmatpush1.msra.mxu0 0.0
        %2051 = vmatprep.subr.mxu0 0.0
        %2052 = vmatpush1.msra.mxu0 0.0
        %2053 = vmatprep.subr.mxu0 0.0
        %2054 = vmatpush1.msra.mxu0 0.0
        %2055 = vmatprep.subr.mxu0 0.0
        %2056 = vmatpush1.msra.mxu0 0.0
        %2057 = vmatprep.subr.mxu0 0.0
        %2058 = vmatpush1.msra.mxu0 0.0
        %2059 = vmatprep.subr.mxu0 0.0
        %2060 = vmatpush1.msra.mxu0 0.0
        %2061 = vmatprep.subr.mxu0 0.0
        %2062 = vmatpush1.msra.mxu0 0.0
        %2063 = vmatprep.subr.mxu0 0.0
        %2064 = vmatpush1.msra.mxu0 0.0
        %2065 = vmatprep.subr.mxu0 0.0
        %2066 = vmatpush1.msra.mxu0 0.0
        %2067 = vmatprep.subr.mxu0 0.0
        %2068 = vmatpush1.msra.mxu0 0.0
        %2069 = vmatprep.subr.mxu0 0.0
        %2070 = vmatpush1.msra.mxu0 0.0
        %2071 = vmatprep.subr.mxu0 0.0
        %2072 = vmatpush1.msra.mxu0 0.0
        %2073 = vmatprep.subr.mxu0 0.0
        %2074 = vmatpush1.msra.mxu0 0.0
        %2075 = vmatprep.mubr.f32.mxu0 0.0
        %2076 = vmatmul.mubr.f32.gmra.mrb[0].mxu0 %v2009
        %v2077 = vpop.f32.mrb[0].mxu0
        %v2078 = vadd.f32 0.0, %v2077
        %v2079 = vpop.f32.mrb[0].mxu0
        %2080 = vdwg.mxu0
        %2082 = vrot.lane.b32.xlu0 %v810, 120
        %v2083 = vpop.permute.xlu0 %2082
        %v2086 = vsel %vm813, %v1849, 0
        %2088 = vmatprep.subr.mxu0 0.0
        %2089 = vmatpush1.msra.mxu0 %v2083
        %2090 = vmatprep.subr.mxu0 0.0
        %2091 = vmatpush1.msra.mxu0 0.0
        %2092 = vmatprep.subr.mxu0 0.0
        %2093 = vmatpush1.msra.mxu0 0.0
        %2094 = vmatprep.subr.mxu0 0.0
        %2095 = vmatpush1.msra.mxu0 0.0
        %2096 = vmatprep.subr.mxu0 0.0
        %2097 = vmatpush1.msra.mxu0 0.0
        %2098 = vmatprep.subr.mxu0 0.0
        %2099 = vmatpush1.msra.mxu0 0.0
        %2100 = vmatprep.subr.mxu0 0.0
        %2101 = vmatpush1.msra.mxu0 0.0
        %2102 = vmatprep.subr.mxu0 0.0
        %2103 = vmatpush1.msra.mxu0 0.0
        %2104 = vmatprep.subr.mxu0 0.0
        %2105 = vmatpush1.msra.mxu0 0.0
        %2106 = vmatprep.subr.mxu0 0.0
        %2107 = vmatpush1.msra.mxu0 0.0
        %2108 = vmatprep.subr.mxu0 0.0
        %2109 = vmatpush1.msra.mxu0 0.0
        %2110 = vmatprep.subr.mxu0 0.0
        %2111 = vmatpush1.msra.mxu0 0.0
        %2112 = vmatprep.subr.mxu0 0.0
        %2113 = vmatpush1.msra.mxu0 0.0
        %2114 = vmatprep.subr.mxu0 0.0
        %2115 = vmatpush1.msra.mxu0 0.0
        %2116 = vmatprep.subr.mxu0 0.0
        %2117 = vmatpush1.msra.mxu0 0.0
        %2118 = vmatprep.subr.mxu0 0.0
        %2119 = vmatpush1.msra.mxu0 0.0
        %2120 = vmatprep.subr.mxu0 0.0
        %2121 = vmatpush1.msra.mxu0 0.0
        %2122 = vmatprep.subr.mxu0 0.0
        %2123 = vmatpush1.msra.mxu0 0.0
        %2124 = vmatprep.subr.mxu0 0.0
        %2125 = vmatpush1.msra.mxu0 0.0
        %2126 = vmatprep.subr.mxu0 0.0
        %2127 = vmatpush1.msra.mxu0 0.0
        %2128 = vmatprep.subr.mxu0 0.0
        %2129 = vmatpush1.msra.mxu0 0.0
        %2130 = vmatprep.subr.mxu0 0.0
        %2131 = vmatpush1.msra.mxu0 0.0
        %2132 = vmatprep.subr.mxu0 0.0
        %2133 = vmatpush1.msra.mxu0 0.0
        %2134 = vmatprep.subr.mxu0 0.0
        %2135 = vmatpush1.msra.mxu0 0.0
        %2136 = vmatprep.subr.mxu0 0.0
        %2137 = vmatpush1.msra.mxu0 0.0
        %2138 = vmatprep.subr.mxu0 0.0
        %2139 = vmatpush1.msra.mxu0 0.0
        %2140 = vmatprep.subr.mxu0 0.0
        %2141 = vmatpush1.msra.mxu0 0.0
        %2142 = vmatprep.subr.mxu0 0.0
        %2143 = vmatpush1.msra.mxu0 0.0
        %2144 = vmatprep.subr.mxu0 0.0
        %2145 = vmatpush1.msra.mxu0 0.0
        %2146 = vmatprep.subr.mxu0 0.0
        %2147 = vmatpush1.msra.mxu0 0.0
        %2148 = vmatprep.subr.mxu0 0.0
        %2149 = vmatpush1.msra.mxu0 0.0
        %2150 = vmatprep.subr.mxu0 0.0
        %2151 = vmatpush1.msra.mxu0 0.0
        %2152 = vmatprep.mubr.f32.mxu0 0.0
        %2153 = vmatmul.mubr.f32.gmra.mrb[0].mxu0 %v2086
        %v2154 = vpop.f32.mrb[0].mxu0
        %v2155 = vadd.f32 0.0, %v2154
        %v2156 = vpop.f32.mrb[0].mxu0
        %2157 = vdwg.mxu0
        %2158 = vrot.lane.b32.xlu0 %v579, 112
        %v2159 = vpop.permute.xlu0 %2158
        %2160 = vrot.lane.b32.xlu0 %v687, 112
        %v2161 = vpop.permute.xlu0 %2160
        %v2162 = vsel %vm813, %v2159, 0
        %v2164 = vsel %vm813, %v2161, 0
        %2166 = vmatprep.subr.mxu0 0.0
        %2167 = vmatpush1.xpose.msra.mxu0 %v2164
        %2168 = vmatprep.subr.mxu0 0.0
        %2169 = vmatpush1.xpose.msra.mxu0 0.0
        %2170 = vmatprep.subr.mxu0 0.0
        %2171 = vmatpush1.xpose.msra.mxu0 0.0
        %2172 = vmatprep.subr.mxu0 0.0
        %2173 = vmatpush1.xpose.msra.mxu0 0.0
        %2174 = vmatprep.subr.mxu0 0.0
        %2175 = vmatpush1.xpose.msra.mxu0 0.0
        %2176 = vmatprep.subr.mxu0 0.0
        %2177 = vmatpush1.xpose.msra.mxu0 0.0
        %2178 = vmatprep.subr.mxu0 0.0
        %2179 = vmatpush1.xpose.msra.mxu0 0.0
        %2180 = vmatprep.subr.mxu0 0.0
        %2181 = vmatpush1.xpose.msra.mxu0 0.0
        %2182 = vmatprep.subr.mxu0 0.0
        %2183 = vmatpush1.xpose.msra.mxu0 0.0
        %2184 = vmatprep.subr.mxu0 0.0
        %2185 = vmatpush1.xpose.msra.mxu0 0.0
        %2186 = vmatprep.subr.mxu0 0.0
        %2187 = vmatpush1.xpose.msra.mxu0 0.0
        %2188 = vmatprep.subr.mxu0 0.0
        %2189 = vmatpush1.xpose.msra.mxu0 0.0
        %2190 = vmatprep.subr.mxu0 0.0
        %2191 = vmatpush1.xpose.msra.mxu0 0.0
        %2192 = vmatprep.subr.mxu0 0.0
        %2193 = vmatpush1.xpose.msra.mxu0 0.0
        %2194 = vmatprep.subr.mxu0 0.0
        %2195 = vmatpush1.xpose.msra.mxu0 0.0
        %2196 = vmatprep.subr.mxu0 0.0
        %2197 = vmatpush1.xpose.msra.mxu0 0.0
        %2198 = vmatprep.subr.mxu0 0.0
        %2199 = vmatpush1.xpose.msra.mxu0 0.0
        %2200 = vmatprep.subr.mxu0 0.0
        %2201 = vmatpush1.xpose.msra.mxu0 0.0
        %2202 = vmatprep.subr.mxu0 0.0
        %2203 = vmatpush1.xpose.msra.mxu0 0.0
        %2204 = vmatprep.subr.mxu0 0.0
        %2205 = vmatpush1.xpose.msra.mxu0 0.0
        %2206 = vmatprep.subr.mxu0 0.0
        %2207 = vmatpush1.xpose.msra.mxu0 0.0
        %2208 = vmatprep.subr.mxu0 0.0
        %2209 = vmatpush1.xpose.msra.mxu0 0.0
        %2210 = vmatprep.subr.mxu0 0.0
        %2211 = vmatpush1.xpose.msra.mxu0 0.0
        %2212 = vmatprep.subr.mxu0 0.0
        %2213 = vmatpush1.xpose.msra.mxu0 0.0
        %2214 = vmatprep.subr.mxu0 0.0
        %2215 = vmatpush1.xpose.msra.mxu0 0.0
        %2216 = vmatprep.subr.mxu0 0.0
        %2217 = vmatpush1.xpose.msra.mxu0 0.0
        %2218 = vmatprep.subr.mxu0 0.0
        %2219 = vmatpush1.xpose.msra.mxu0 0.0
        %2220 = vmatprep.subr.mxu0 0.0
        %2221 = vmatpush1.xpose.msra.mxu0 0.0
        %2222 = vmatprep.subr.mxu0 0.0
        %2223 = vmatpush1.xpose.msra.mxu0 0.0
        %2224 = vmatprep.subr.mxu0 0.0
        %2225 = vmatpush1.xpose.msra.mxu0 0.0
        %2226 = vmatprep.subr.mxu0 0.0
        %2227 = vmatpush1.xpose.msra.mxu0 0.0
        %2228 = vmatprep.subr.mxu0 0.0
        %2229 = vmatpush1.xpose.msra.mxu0 0.0
        %2230 = vmatprep.mubr.f32.mxu0 0.0
        %2231 = vmatmul.mubr.f32.gmra.mrb[0].mxu0 %v2162
        %v2232 = vpop.f32.mrb[0].mxu0
        %v2233 = vadd.f32 0.0, %v2232
        %v2234 = vpop.f32.mrb[0].mxu0
        %2235 = vdwg.mxu0
        %2236 = vrot.lane.b32.xlu0 %v584, 112
        %v2237 = vpop.permute.xlu0 %2236
        %2238 = vrot.lane.b32.xlu0 %v692, 112
        %v2239 = vpop.permute.xlu0 %2238
        %v2240 = vsel %vm813, %v2237, 0
        %v2242 = vsel %vm813, %v2239, 0
        %2244 = vmatprep.subr.mxu0 0.0
        %2245 = vmatpush1.xpose.msra.mxu0 %v2242
        %2246 = vmatprep.subr.mxu0 0.0
        %2247 = vmatpush1.xpose.msra.mxu0 0.0
        %2248 = vmatprep.subr.mxu0 0.0
        %2249 = vmatpush1.xpose.msra.mxu0 0.0
        %2250 = vmatprep.subr.mxu0 0.0
        %2251 = vmatpush1.xpose.msra.mxu0 0.0
        %2252 = vmatprep.subr.mxu0 0.0
        %2253 = vmatpush1.xpose.msra.mxu0 0.0
        %2254 = vmatprep.subr.mxu0 0.0
        %2255 = vmatpush1.xpose.msra.mxu0 0.0
        %2256 = vmatprep.subr.mxu0 0.0
        %2257 = vmatpush1.xpose.msra.mxu0 0.0
        %2258 = vmatprep.subr.mxu0 0.0
        %2259 = vmatpush1.xpose.msra.mxu0 0.0
        %2260 = vmatprep.subr.mxu0 0.0
        %2261 = vmatpush1.xpose.msra.mxu0 0.0
        %2262 = vmatprep.subr.mxu0 0.0
        %2263 = vmatpush1.xpose.msra.mxu0 0.0
        %2264 = vmatprep.subr.mxu0 0.0
        %2265 = vmatpush1.xpose.msra.mxu0 0.0
        %2266 = vmatprep.subr.mxu0 0.0
        %2267 = vmatpush1.xpose.msra.mxu0 0.0
        %2268 = vmatprep.subr.mxu0 0.0
        %2269 = vmatpush1.xpose.msra.mxu0 0.0
        %2270 = vmatprep.subr.mxu0 0.0
        %2271 = vmatpush1.xpose.msra.mxu0 0.0
        %2272 = vmatprep.subr.mxu0 0.0
        %2273 = vmatpush1.xpose.msra.mxu0 0.0
        %2274 = vmatprep.subr.mxu0 0.0
        %2275 = vmatpush1.xpose.msra.mxu0 0.0
        %2276 = vmatprep.subr.mxu0 0.0
        %2277 = vmatpush1.xpose.msra.mxu0 0.0
        %2278 = vmatprep.subr.mxu0 0.0
        %2279 = vmatpush1.xpose.msra.mxu0 0.0
        %2280 = vmatprep.subr.mxu0 0.0
        %2281 = vmatpush1.xpose.msra.mxu0 0.0
        %2282 = vmatprep.subr.mxu0 0.0
        %2283 = vmatpush1.xpose.msra.mxu0 0.0
        %2284 = vmatprep.subr.mxu0 0.0
        %2285 = vmatpush1.xpose.msra.mxu0 0.0
        %2286 = vmatprep.subr.mxu0 0.0
        %2287 = vmatpush1.xpose.msra.mxu0 0.0
        %2288 = vmatprep.subr.mxu0 0.0
        %2289 = vmatpush1.xpose.msra.mxu0 0.0
        %2290 = vmatprep.subr.mxu0 0.0
        %2291 = vmatpush1.xpose.msra.mxu0 0.0
        %2292 = vmatprep.subr.mxu0 0.0
        %2293 = vmatpush1.xpose.msra.mxu0 0.0
        %2294 = vmatprep.subr.mxu0 0.0
        %2295 = vmatpush1.xpose.msra.mxu0 0.0
        %2296 = vmatprep.subr.mxu0 0.0
        %2297 = vmatpush1.xpose.msra.mxu0 0.0
        %2298 = vmatprep.subr.mxu0 0.0
        %2299 = vmatpush1.xpose.msra.mxu0 0.0
        %2300 = vmatprep.subr.mxu0 0.0
        %2301 = vmatpush1.xpose.msra.mxu0 0.0
        %2302 = vmatprep.subr.mxu0 0.0
        %2303 = vmatpush1.xpose.msra.mxu0 0.0
        %2304 = vmatprep.subr.mxu0 0.0
        %2305 = vmatpush1.xpose.msra.mxu0 0.0
        %2306 = vmatprep.subr.mxu0 0.0
        %2307 = vmatpush1.xpose.msra.mxu0 0.0
        %2308 = vmatprep.mubr.f32.mxu0 0.0
        %2309 = vmatmul.mubr.f32.gmra.mrb[0].mxu0 %v2240
        %v2310 = vpop.f32.mrb[0].mxu0
        %v2311 = vadd.f32 0.0, %v2310
        %v2312 = vpop.f32.mrb[0].mxu0
        %2313 = vdwg.mxu0
        %2314 = vrot.lane.b32.xlu0 %v589, 112
        %v2315 = vpop.permute.xlu0 %2314
        %2316 = vrot.lane.b32.xlu0 %v697, 112
        %v2317 = vpop.permute.xlu0 %2316
        %v2318 = vsel %vm813, %v2315, 0
        %v2320 = vsel %vm813, %v2317, 0
        %2322 = vmatprep.subr.mxu0 0.0
        %2323 = vmatpush1.xpose.msra.mxu0 %v2320
        %2324 = vmatprep.subr.mxu0 0.0
        %2325 = vmatpush1.xpose.msra.mxu0 0.0
        %2326 = vmatprep.subr.mxu0 0.0
        %2327 = vmatpush1.xpose.msra.mxu0 0.0
        %2328 = vmatprep.subr.mxu0 0.0
        %2329 = vmatpush1.xpose.msra.mxu0 0.0
        %2330 = vmatprep.subr.mxu0 0.0
        %2331 = vmatpush1.xpose.msra.mxu0 0.0
        %2332 = vmatprep.subr.mxu0 0.0
        %2333 = vmatpush1.xpose.msra.mxu0 0.0
        %2334 = vmatprep.subr.mxu0 0.0
        %2335 = vmatpush1.xpose.msra.mxu0 0.0
        %2336 = vmatprep.subr.mxu0 0.0
        %2337 = vmatpush1.xpose.msra.mxu0 0.0
        %2338 = vmatprep.subr.mxu0 0.0
        %2339 = vmatpush1.xpose.msra.mxu0 0.0
        %2340 = vmatprep.subr.mxu0 0.0
        %2341 = vmatpush1.xpose.msra.mxu0 0.0
        %2342 = vmatprep.subr.mxu0 0.0
        %2343 = vmatpush1.xpose.msra.mxu0 0.0
        %2344 = vmatprep.subr.mxu0 0.0
        %2345 = vmatpush1.xpose.msra.mxu0 0.0
        %2346 = vmatprep.subr.mxu0 0.0
        %2347 = vmatpush1.xpose.msra.mxu0 0.0
        %2348 = vmatprep.subr.mxu0 0.0
        %2349 = vmatpush1.xpose.msra.mxu0 0.0
        %2350 = vmatprep.subr.mxu0 0.0
        %2351 = vmatpush1.xpose.msra.mxu0 0.0
        %2352 = vmatprep.subr.mxu0 0.0
        %2353 = vmatpush1.xpose.msra.mxu0 0.0
        %2354 = vmatprep.subr.mxu0 0.0
        %2355 = vmatpush1.xpose.msra.mxu0 0.0
        %2356 = vmatprep.subr.mxu0 0.0
        %2357 = vmatpush1.xpose.msra.mxu0 0.0
        %2358 = vmatprep.subr.mxu0 0.0
        %2359 = vmatpush1.xpose.msra.mxu0 0.0
        %2360 = vmatprep.subr.mxu0 0.0
        %2361 = vmatpush1.xpose.msra.mxu0 0.0
        %2362 = vmatprep.subr.mxu0 0.0
        %2363 = vmatpush1.xpose.msra.mxu0 0.0
        %2364 = vmatprep.subr.mxu0 0.0
        %2365 = vmatpush1.xpose.msra.mxu0 0.0
        %2366 = vmatprep.subr.mxu0 0.0
        %2367 = vmatpush1.xpose.msra.mxu0 0.0
        %2368 = vmatprep.subr.mxu0 0.0
        %2369 = vmatpush1.xpose.msra.mxu0 0.0
        %2370 = vmatprep.subr.mxu0 0.0
        %2371 = vmatpush1.xpose.msra.mxu0 0.0
        %2372 = vmatprep.subr.mxu0 0.0
        %2373 = vmatpush1.xpose.msra.mxu0 0.0
        %2374 = vmatprep.subr.mxu0 0.0
        %2375 = vmatpush1.xpose.msra.mxu0 0.0
        %2376 = vmatprep.subr.mxu0 0.0
        %2377 = vmatpush1.xpose.msra.mxu0 0.0
        %2378 = vmatprep.subr.mxu0 0.0
        %2379 = vmatpush1.xpose.msra.mxu0 0.0
        %2380 = vmatprep.subr.mxu0 0.0
        %2381 = vmatpush1.xpose.msra.mxu0 0.0
        %2382 = vmatprep.subr.mxu0 0.0
        %2383 = vmatpush1.xpose.msra.mxu0 0.0
        %2384 = vmatprep.subr.mxu0 0.0
        %2385 = vmatpush1.xpose.msra.mxu0 0.0
        %2386 = vmatprep.mubr.f32.mxu0 0.0
        %2387 = vmatmul.mubr.f32.gmra.mrb[0].mxu0 %v2318
        %v2388 = vpop.f32.mrb[0].mxu0
        %v2389 = vadd.f32 0.0, %v2388
        %v2390 = vpop.f32.mrb[0].mxu0
        %2391 = vdwg.mxu0
        %2392 = vrot.lane.b32.xlu0 %v594, 112
        %v2393 = vpop.permute.xlu0 %2392
        %2394 = vrot.lane.b32.xlu0 %v702, 112
        %v2395 = vpop.permute.xlu0 %2394
        %v2396 = vsel %vm813, %v2393, 0
        %v2398 = vsel %vm813, %v2395, 0
        %2400 = vmatprep.subr.mxu0 0.0
        %2401 = vmatpush1.xpose.msra.mxu0 %v2398
        %2402 = vmatprep.subr.mxu0 0.0
        %2403 = vmatpush1.xpose.msra.mxu0 0.0
        %2404 = vmatprep.subr.mxu0 0.0
        %2405 = vmatpush1.xpose.msra.mxu0 0.0
        %2406 = vmatprep.subr.mxu0 0.0
        %2407 = vmatpush1.xpose.msra.mxu0 0.0
        %2408 = vmatprep.subr.mxu0 0.0
        %2409 = vmatpush1.xpose.msra.mxu0 0.0
        %2410 = vmatprep.subr.mxu0 0.0
        %2411 = vmatpush1.xpose.msra.mxu0 0.0
        %2412 = vmatprep.subr.mxu0 0.0
        %2413 = vmatpush1.xpose.msra.mxu0 0.0
        %2414 = vmatprep.subr.mxu0 0.0
        %2415 = vmatpush1.xpose.msra.mxu0 0.0
        %2416 = vmatprep.subr.mxu0 0.0
        %2417 = vmatpush1.xpose.msra.mxu0 0.0
        %2418 = vmatprep.subr.mxu0 0.0
        %2419 = vmatpush1.xpose.msra.mxu0 0.0
        %2420 = vmatprep.subr.mxu0 0.0
        %2421 = vmatpush1.xpose.msra.mxu0 0.0
        %2422 = vmatprep.subr.mxu0 0.0
        %2423 = vmatpush1.xpose.msra.mxu0 0.0
        %2424 = vmatprep.subr.mxu0 0.0
        %2425 = vmatpush1.xpose.msra.mxu0 0.0
        %2426 = vmatprep.subr.mxu0 0.0
        %2427 = vmatpush1.xpose.msra.mxu0 0.0
        %2428 = vmatprep.subr.mxu0 0.0
        %2429 = vmatpush1.xpose.msra.mxu0 0.0
        %2430 = vmatprep.subr.mxu0 0.0
        %2431 = vmatpush1.xpose.msra.mxu0 0.0
        %2432 = vmatprep.subr.mxu0 0.0
        %2433 = vmatpush1.xpose.msra.mxu0 0.0
        %2434 = vmatprep.subr.mxu0 0.0
        %2435 = vmatpush1.xpose.msra.mxu0 0.0
        %2436 = vmatprep.subr.mxu0 0.0
        %2437 = vmatpush1.xpose.msra.mxu0 0.0
        %2438 = vmatprep.subr.mxu0 0.0
        %2439 = vmatpush1.xpose.msra.mxu0 0.0
        %2440 = vmatprep.subr.mxu0 0.0
        %2441 = vmatpush1.xpose.msra.mxu0 0.0
        %2442 = vmatprep.subr.mxu0 0.0
        %2443 = vmatpush1.xpose.msra.mxu0 0.0
        %2444 = vmatprep.subr.mxu0 0.0
        %2445 = vmatpush1.xpose.msra.mxu0 0.0
        %2446 = vmatprep.subr.mxu0 0.0
        %2447 = vmatpush1.xpose.msra.mxu0 0.0
        %2448 = vmatprep.subr.mxu0 0.0
        %2449 = vmatpush1.xpose.msra.mxu0 0.0
        %2450 = vmatprep.subr.mxu0 0.0
        %2451 = vmatpush1.xpose.msra.mxu0 0.0
        %2452 = vmatprep.subr.mxu0 0.0
        %2453 = vmatpush1.xpose.msra.mxu0 0.0
        %2454 = vmatprep.subr.mxu0 0.0
        %2455 = vmatpush1.xpose.msra.mxu0 0.0
        %2456 = vmatprep.subr.mxu0 0.0
        %2457 = vmatpush1.xpose.msra.mxu0 0.0
        %2458 = vmatprep.subr.mxu0 0.0
        %2459 = vmatpush1.xpose.msra.mxu0 0.0
        %2460 = vmatprep.subr.mxu0 0.0
        %2461 = vmatpush1.xpose.msra.mxu0 0.0
        %2462 = vmatprep.subr.mxu0 0.0
        %2463 = vmatpush1.xpose.msra.mxu0 0.0
        %2464 = vmatprep.mubr.f32.mxu0 0.0
        %2465 = vmatmul.mubr.f32.gmra.mrb[0].mxu0 %v2396
        %v2466 = vpop.f32.mrb[0].mxu0
        %v2467 = vadd.f32 0.0, %v2466
        %v2468 = vpop.f32.mrb[0].mxu0
        %2469 = vdwg.mxu0
        %v2470 = vsel %vm813, %v2233, -inf
        %2471 = vmax.xlane.f32.xlu0 %v2470
        %v2472 = vpop.xlane.xlu0 %2471
        %v2473 = vsel %vm813, %v2311, -inf
        %2474 = vmax.xlane.f32.xlu0 %v2473
        %v2475 = vpop.xlane.xlu0 %2474
        %v2476 = vsel %vm813, %v2389, -inf
        %2477 = vmax.xlane.f32.xlu0 %v2476
        %v2478 = vpop.xlane.xlu0 %2477
        %v2479 = vsel %vm813, %v2467, -inf
        %2480 = vmax.xlane.f32.xlu0 %v2479
        %v2481 = vpop.xlane.xlu0 %2480
        %v2482 = vmax.f32 %v2472, 0.0
        %v2483 = vmax.f32 %v2475, 0.0
        %v2484 = vmax.f32 %v2478, 0.0
        %v2485 = vmax.f32 %v2481, 0.0
        %v2486 = vsub.f32 %v2233, %v2482
        %v2487 = vsub.f32 %v2311, %v2483
        %v2488 = vsub.f32 %v2389, %v2484
        %v2489 = vsub.f32 %v2467, %v2485
        %v2490 = vmul.f32 %v2486, 1.442695
        %v2491 = vpow.pop %v2490
        %v2492 = vmul.f32 %v2487, 1.442695
        %v2493 = vpow.pop %v2492
        %v2494 = vmul.f32 %v2488, 1.442695
        %v2495 = vpow.pop %v2494
        %v2496 = vmul.f32 %v2489, 1.442695
        %v2497 = vpow.pop %v2496
        %v2498 = vsel %vm813, %v2491, 0.0
        %2499 = vadd.xlane.f32.xlu0 %v2498
        %v2500 = vpop.xlane.xlu0 %2499
        %v2501 = vsel %vm813, %v2493, 0.0
        %2502 = vadd.xlane.f32.xlu0 %v2501
        %v2503 = vpop.xlane.xlu0 %2502
        %v2504 = vsel %vm813, %v2495, 0.0
        %2505 = vadd.xlane.f32.xlu0 %v2504
        %v2506 = vpop.xlane.xlu0 %2505
        %v2507 = vsel %vm813, %v2497, 0.0
        %2508 = vadd.xlane.f32.xlu0 %v2507
        %v2509 = vpop.xlane.xlu0 %2508
        %v2510 = vsub.f32 0.0, %v2482
        %v2511 = vsub.f32 0.0, %v2483
        %v2512 = vsub.f32 0.0, %v2484
        %v2513 = vsub.f32 0.0, %v2485
        %v2514 = vmul.f32 %v2510, 1.442695
        %v2515 = vpow.pop %v2514
        %v2516 = vmul.f32 %v2511, 1.442695
        %v2517 = vpow.pop %v2516
        %v2518 = vmul.f32 %v2512, 1.442695
        %v2519 = vpow.pop %v2518
        %v2520 = vmul.f32 %v2513, 1.442695
        %v2521 = vpow.pop %v2520
        %v2522 = vadd.f32 %v2500, %v2515
        %v2523 = vadd.f32 %v2503, %v2517
        %v2524 = vadd.f32 %v2506, %v2519
        %v2525 = vadd.f32 %v2509, %v2521
        %v2526 = vrcp.pop %v2522
        %v2527 = vrcp.pop %v2523
        %v2528 = vrcp.pop %v2524
        %v2529 = vrcp.pop %v2525
        %v2530 = vmul.f32 %v2491, %v2526
        %v2531 = vmul.f32 %v2493, %v2527
        %v2532 = vmul.f32 %v2495, %v2528
        %v2533 = vmul.f32 %v2497, %v2529
        %2534 = vrot.lane.b32.xlu0 %v795, 112
        %v2535 = vpop.permute.xlu0 %2534
        %v2538 = vsel %vm813, %v2530, 0
        %2540 = vmatprep.subr.mxu0 0.0
        %2541 = vmatpush1.msra.mxu0 %v2535
        %2542 = vmatprep.subr.mxu0 0.0
        %2543 = vmatpush1.msra.mxu0 0.0
        %2544 = vmatprep.subr.mxu0 0.0
        %2545 = vmatpush1.msra.mxu0 0.0
        %2546 = vmatprep.subr.mxu0 0.0
        %2547 = vmatpush1.msra.mxu0 0.0
        %2548 = vmatprep.subr.mxu0 0.0
        %2549 = vmatpush1.msra.mxu0 0.0
        %2550 = vmatprep.subr.mxu0 0.0
        %2551 = vmatpush1.msra.mxu0 0.0
        %2552 = vmatprep.subr.mxu0 0.0
        %2553 = vmatpush1.msra.mxu0 0.0
        %2554 = vmatprep.subr.mxu0 0.0
        %2555 = vmatpush1.msra.mxu0 0.0
        %2556 = vmatprep.subr.mxu0 0.0
        %2557 = vmatpush1.msra.mxu0 0.0
        %2558 = vmatprep.subr.mxu0 0.0
        %2559 = vmatpush1.msra.mxu0 0.0
        %2560 = vmatprep.subr.mxu0 0.0
        %2561 = vmatpush1.msra.mxu0 0.0
        %2562 = vmatprep.subr.mxu0 0.0
        %2563 = vmatpush1.msra.mxu0 0.0
        %2564 = vmatprep.subr.mxu0 0.0
        %2565 = vmatpush1.msra.mxu0 0.0
        %2566 = vmatprep.subr.mxu0 0.0
        %2567 = vmatpush1.msra.mxu0 0.0
        %2568 = vmatprep.subr.mxu0 0.0
        %2569 = vmatpush1.msra.mxu0 0.0
        %2570 = vmatprep.subr.mxu0 0.0
        %2571 = vmatpush1.msra.mxu0 0.0
        %2572 = vmatprep.subr.mxu0 0.0
        %2573 = vmatpush1.msra.mxu0 0.0
        %2574 = vmatprep.subr.mxu0 0.0
        %2575 = vmatpush1.msra.mxu0 0.0
        %2576 = vmatprep.subr.mxu0 0.0
        %2577 = vmatpush1.msra.mxu0 0.0
        %2578 = vmatprep.subr.mxu0 0.0
        %2579 = vmatpush1.msra.mxu0 0.0
        %2580 = vmatprep.subr.mxu0 0.0
        %2581 = vmatpush1.msra.mxu0 0.0
        %2582 = vmatprep.subr.mxu0 0.0
        %2583 = vmatpush1.msra.mxu0 0.0
        %2584 = vmatprep.subr.mxu0 0.0
        %2585 = vmatpush1.msra.mxu0 0.0
        %2586 = vmatprep.subr.mxu0 0.0
        %2587 = vmatpush1.msra.mxu0 0.0
        %2588 = vmatprep.subr.mxu0 0.0
        %2589 = vmatpush1.msra.mxu0 0.0
        %2590 = vmatprep.subr.mxu0 0.0
        %2591 = vmatpush1.msra.mxu0 0.0
        %2592 = vmatprep.subr.mxu0 0.0
        %2593 = vmatpush1.msra.mxu0 0.0
        %2594 = vmatprep.subr.mxu0 0.0
        %2595 = vmatpush1.msra.mxu0 0.0
        %2596 = vmatprep.subr.mxu0 0.0
        %2597 = vmatpush1.msra.mxu0 0.0
        %2598 = vmatprep.subr.mxu0 0.0
        %2599 = vmatpush1.msra.mxu0 0.0
        %2600 = vmatprep.subr.mxu0 0.0
        %2601 = vmatpush1.msra.mxu0 0.0
        %2602 = vmatprep.subr.mxu0 0.0
        %2603 = vmatpush1.msra.mxu0 0.0
        %2604 = vmatprep.mubr.f32.mxu0 0.0
        %2605 = vmatmul.mubr.f32.gmra.mrb[0].mxu0 %v2538
        %v2606 = vpop.f32.mrb[0].mxu0
        %v2607 = vadd.f32 0.0, %v2606
        %v2608 = vpop.f32.mrb[0].mxu0
        %2609 = vdwg.mxu0
        %2610 = vrot.lane.b32.xlu0 %v800, 112
        %v2611 = vpop.permute.xlu0 %2610
        %v2614 = vsel %vm813, %v2531, 0
        %2616 = vmatprep.subr.mxu0 0.0
        %2617 = vmatpush1.msra.mxu0 %v2611
        %2618 = vmatprep.subr.mxu0 0.0
        %2619 = vmatpush1.msra.mxu0 0.0
        %2620 = vmatprep.subr.mxu0 0.0
        %2621 = vmatpush1.msra.mxu0 0.0
        %2622 = vmatprep.subr.mxu0 0.0
        %2623 = vmatpush1.msra.mxu0 0.0
        %2624 = vmatprep.subr.mxu0 0.0
        %2625 = vmatpush1.msra.mxu0 0.0
        %2626 = vmatprep.subr.mxu0 0.0
        %2627 = vmatpush1.msra.mxu0 0.0
        %2628 = vmatprep.subr.mxu0 0.0
        %2629 = vmatpush1.msra.mxu0 0.0
        %2630 = vmatprep.subr.mxu0 0.0
        %2631 = vmatpush1.msra.mxu0 0.0
        %2632 = vmatprep.subr.mxu0 0.0
        %2633 = vmatpush1.msra.mxu0 0.0
        %2634 = vmatprep.subr.mxu0 0.0
        %2635 = vmatpush1.msra.mxu0 0.0
        %2636 = vmatprep.subr.mxu0 0.0
        %2637 = vmatpush1.msra.mxu0 0.0
        %2638 = vmatprep.subr.mxu0 0.0
        %2639 = vmatpush1.msra.mxu0 0.0
        %2640 = vmatprep.subr.mxu0 0.0
        %2641 = vmatpush1.msra.mxu0 0.0
        %2642 = vmatprep.subr.mxu0 0.0
        %2643 = vmatpush1.msra.mxu0 0.0
        %2644 = vmatprep.subr.mxu0 0.0
        %2645 = vmatpush1.msra.mxu0 0.0
        %2646 = vmatprep.subr.mxu0 0.0
        %2647 = vmatpush1.msra.mxu0 0.0
        %2648 = vmatprep.subr.mxu0 0.0
        %2649 = vmatpush1.msra.mxu0 0.0
        %2650 = vmatprep.subr.mxu0 0.0
        %2651 = vmatpush1.msra.mxu0 0.0
        %2652 = vmatprep.subr.mxu0 0.0
        %2653 = vmatpush1.msra.mxu0 0.0
        %2654 = vmatprep.subr.mxu0 0.0
        %2655 = vmatpush1.msra.mxu0 0.0
        %2656 = vmatprep.subr.mxu0 0.0
        %2657 = vmatpush1.msra.mxu0 0.0
        %2658 = vmatprep.subr.mxu0 0.0
        %2659 = vmatpush1.msra.mxu0 0.0
        %2660 = vmatprep.subr.mxu0 0.0
        %2661 = vmatpush1.msra.mxu0 0.0
        %2662 = vmatprep.subr.mxu0 0.0
        %2663 = vmatpush1.msra.mxu0 0.0
        %2664 = vmatprep.subr.mxu0 0.0
        %2665 = vmatpush1.msra.mxu0 0.0
        %2666 = vmatprep.subr.mxu0 0.0
        %2667 = vmatpush1.msra.mxu0 0.0
        %2668 = vmatprep.subr.mxu0 0.0
        %2669 = vmatpush1.msra.mxu0 0.0
        %2670 = vmatprep.subr.mxu0 0.0
        %2671 = vmatpush1.msra.mxu0 0.0
        %2672 = vmatprep.subr.mxu0 0.0
        %2673 = vmatpush1.msra.mxu0 0.0
        %2674 = vmatprep.subr.mxu0 0.0
        %2675 = vmatpush1.msra.mxu0 0.0
        %2676 = vmatprep.subr.mxu0 0.0
        %2677 = vmatpush1.msra.mxu0 0.0
        %2678 = vmatprep.subr.mxu0 0.0
        %2679 = vmatpush1.msra.mxu0 0.0
        %2680 = vmatprep.mubr.f32.mxu0 0.0
        %2681 = vmatmul.mubr.f32.gmra.mrb[0].mxu0 %v2614
        %v2682 = vpop.f32.mrb[0].mxu0
        %v2683 = vadd.f32 0.0, %v2682
        %v2684 = vpop.f32.mrb[0].mxu0
        %2685 = vdwg.mxu0
        %2686 = vrot.lane.b32.xlu0 %v805, 112
        %v2687 = vpop.permute.xlu0 %2686
        %v2690 = vsel %vm813, %v2532, 0
        %2692 = vmatprep.subr.mxu0 0.0
        %2693 = vmatpush1.msra.mxu0 %v2687
        %2694 = vmatprep.subr.mxu0 0.0
        %2695 = vmatpush1.msra.mxu0 0.0
        %2696 = vmatprep.subr.mxu0 0.0
        %2697 = vmatpush1.msra.mxu0 0.0
        %2698 = vmatprep.subr.mxu0 0.0
        %2699 = vmatpush1.msra.mxu0 0.0
        %2700 = vmatprep.subr.mxu0 0.0
        %2701 = vmatpush1.msra.mxu0 0.0
        %2702 = vmatprep.subr.mxu0 0.0
        %2703 = vmatpush1.msra.mxu0 0.0
        %2704 = vmatprep.subr.mxu0 0.0
        %2705 = vmatpush1.msra.mxu0 0.0
        %2706 = vmatprep.subr.mxu0 0.0
        %2707 = vmatpush1.msra.mxu0 0.0
        %2708 = vmatprep.subr.mxu0 0.0
        %2709 = vmatpush1.msra.mxu0 0.0
        %2710 = vmatprep.subr.mxu0 0.0
        %2711 = vmatpush1.msra.mxu0 0.0
        %2712 = vmatprep.subr.mxu0 0.0
        %2713 = vmatpush1.msra.mxu0 0.0
        %2714 = vmatprep.subr.mxu0 0.0
        %2715 = vmatpush1.msra.mxu0 0.0
        %2716 = vmatprep.subr.mxu0 0.0
        %2717 = vmatpush1.msra.mxu0 0.0
        %2718 = vmatprep.subr.mxu0 0.0
        %2719 = vmatpush1.msra.mxu0 0.0
        %2720 = vmatprep.subr.mxu0 0.0
        %2721 = vmatpush1.msra.mxu0 0.0
        %2722 = vmatprep.subr.mxu0 0.0
        %2723 = vmatpush1.msra.mxu0 0.0
        %2724 = vmatprep.subr.mxu0 0.0
        %2725 = vmatpush1.msra.mxu0 0.0
        %2726 = vmatprep.subr.mxu0 0.0
        %2727 = vmatpush1.msra.mxu0 0.0
        %2728 = vmatprep.subr.mxu0 0.0
        %2729 = vmatpush1.msra.mxu0 0.0
        %2730 = vmatprep.subr.mxu0 0.0
        %2731 = vmatpush1.msra.mxu0 0.0
        %2732 = vmatprep.subr.mxu0 0.0
        %2733 = vmatpush1.msra.mxu0 0.0
        %2734 = vmatprep.subr.mxu0 0.0
        %2735 = vmatpush1.msra.mxu0 0.0
        %2736 = vmatprep.subr.mxu0 0.0
        %2737 = vmatpush1.msra.mxu0 0.0
        %2738 = vmatprep.subr.mxu0 0.0
        %2739 = vmatpush1.msra.mxu0 0.0
        %2740 = vmatprep.subr.mxu0 0.0
        %2741 = vmatpush1.msra.mxu0 0.0
        %2742 = vmatprep.subr.mxu0 0.0
        %2743 = vmatpush1.msra.mxu0 0.0
        %2744 = vmatprep.subr.mxu0 0.0
        %2745 = vmatpush1.msra.mxu0 0.0
        %2746 = vmatprep.subr.mxu0 0.0
        %2747 = vmatpush1.msra.mxu0 0.0
        %2748 = vmatprep.subr.mxu0 0.0
        %2749 = vmatpush1.msra.mxu0 0.0
        %2750 = vmatprep.subr.mxu0 0.0
        %2751 = vmatpush1.msra.mxu0 0.0
        %2752 = vmatprep.subr.mxu0 0.0
        %2753 = vmatpush1.msra.mxu0 0.0
        %2754 = vmatprep.subr.mxu0 0.0
        %2755 = vmatpush1.msra.mxu0 0.0
        %2756 = vmatprep.mubr.f32.mxu0 0.0
        %2757 = vmatmul.mubr.f32.gmra.mrb[0].mxu0 %v2690
        %v2758 = vpop.f32.mrb[0].mxu0
        %v2759 = vadd.f32 0.0, %v2758
        %v2760 = vpop.f32.mrb[0].mxu0
        %2761 = vdwg.mxu0
        %2762 = vrot.lane.b32.xlu0 %v810, 112
        %v2763 = vpop.permute.xlu0 %2762
        %v2766 = vsel %vm813, %v2533, 0
        %2768 = vmatprep.subr.mxu0 0.0
        %2769 = vmatpush1.msra.mxu0 %v2763
        %2770 = vmatprep.subr.mxu0 0.0
        %2771 = vmatpush1.msra.mxu0 0.0
        %2772 = vmatprep.subr.mxu0 0.0
        %2773 = vmatpush1.msra.mxu0 0.0
        %2774 = vmatprep.subr.mxu0 0.0
        %2775 = vmatpush1.msra.mxu0 0.0
        %2776 = vmatprep.subr.mxu0 0.0
        %2777 = vmatpush1.msra.mxu0 0.0
        %2778 = vmatprep.subr.mxu0 0.0
        %2779 = vmatpush1.msra.mxu0 0.0
        %2780 = vmatprep.subr.mxu0 0.0
        %2781 = vmatpush1.msra.mxu0 0.0
        %2782 = vmatprep.subr.mxu0 0.0
        %2783 = vmatpush1.msra.mxu0 0.0
        %2784 = vmatprep.subr.mxu0 0.0
        %2785 = vmatpush1.msra.mxu0 0.0
        %2786 = vmatprep.subr.mxu0 0.0
        %2787 = vmatpush1.msra.mxu0 0.0
        %2788 = vmatprep.subr.mxu0 0.0
        %2789 = vmatpush1.msra.mxu0 0.0
        %2790 = vmatprep.subr.mxu0 0.0
        %2791 = vmatpush1.msra.mxu0 0.0
        %2792 = vmatprep.subr.mxu0 0.0
        %2793 = vmatpush1.msra.mxu0 0.0
        %2794 = vmatprep.subr.mxu0 0.0
        %2795 = vmatpush1.msra.mxu0 0.0
        %2796 = vmatprep.subr.mxu0 0.0
        %2797 = vmatpush1.msra.mxu0 0.0
        %2798 = vmatprep.subr.mxu0 0.0
        %2799 = vmatpush1.msra.mxu0 0.0
        %2800 = vmatprep.subr.mxu0 0.0
        %2801 = vmatpush1.msra.mxu0 0.0
        %2802 = vmatprep.subr.mxu0 0.0
        %2803 = vmatpush1.msra.mxu0 0.0
        %2804 = vmatprep.subr.mxu0 0.0
        %2805 = vmatpush1.msra.mxu0 0.0
        %2806 = vmatprep.subr.mxu0 0.0
        %2807 = vmatpush1.msra.mxu0 0.0
        %2808 = vmatprep.subr.mxu0 0.0
        %2809 = vmatpush1.msra.mxu0 0.0
        %2810 = vmatprep.subr.mxu0 0.0
        %2811 = vmatpush1.msra.mxu0 0.0
        %2812 = vmatprep.subr.mxu0 0.0
        %2813 = vmatpush1.msra.mxu0 0.0
        %2814 = vmatprep.subr.mxu0 0.0
        %2815 = vmatpush1.msra.mxu0 0.0
        %2816 = vmatprep.subr.mxu0 0.0
        %2817 = vmatpush1.msra.mxu0 0.0
        %2818 = vmatprep.subr.mxu0 0.0
        %2819 = vmatpush1.msra.mxu0 0.0
        %2820 = vmatprep.subr.mxu0 0.0
        %2821 = vmatpush1.msra.mxu0 0.0
        %2822 = vmatprep.subr.mxu0 0.0
        %2823 = vmatpush1.msra.mxu0 0.0
        %2824 = vmatprep.subr.mxu0 0.0
        %2825 = vmatpush1.msra.mxu0 0.0
        %2826 = vmatprep.subr.mxu0 0.0
        %2827 = vmatpush1.msra.mxu0 0.0
        %2828 = vmatprep.subr.mxu0 0.0
        %2829 = vmatpush1.msra.mxu0 0.0
        %2830 = vmatprep.subr.mxu0 0.0
        %2831 = vmatpush1.msra.mxu0 0.0
        %2832 = vmatprep.mubr.f32.mxu0 0.0
        %2833 = vmatmul.mubr.f32.gmra.mrb[0].mxu0 %v2766
        %v2834 = vpop.f32.mrb[0].mxu0
        %v2835 = vadd.f32 0.0, %v2834
        %v2836 = vpop.f32.mrb[0].mxu0
        %2837 = vdwg.mxu0
        %2838 = vrot.lane.b32.xlu0 %v579, 104
        %v2839 = vpop.permute.xlu0 %2838
        %2840 = vrot.lane.b32.xlu0 %v687, 104
        %v2841 = vpop.permute.xlu0 %2840
        %v2842 = vsel %vm813, %v2839, 0
        %v2844 = vsel %vm813, %v2841, 0
        %2846 = vmatprep.subr.mxu0 0.0
        %2847 = vmatpush1.xpose.msra.mxu0 %v2844
        %2848 = vmatprep.subr.mxu0 0.0
        %2849 = vmatpush1.xpose.msra.mxu0 0.0
        %2850 = vmatprep.subr.mxu0 0.0
        %2851 = vmatpush1.xpose.msra.mxu0 0.0
        %2852 = vmatprep.subr.mxu0 0.0
        %2853 = vmatpush1.xpose.msra.mxu0 0.0
        %2854 = vmatprep.subr.mxu0 0.0
        %2855 = vmatpush1.xpose.msra.mxu0 0.0
        %2856 = vmatprep.subr.mxu0 0.0
        %2857 = vmatpush1.xpose.msra.mxu0 0.0
        %2858 = vmatprep.subr.mxu0 0.0
        %2859 = vmatpush1.xpose.msra.mxu0 0.0
        %2860 = vmatprep.subr.mxu0 0.0
        %2861 = vmatpush1.xpose.msra.mxu0 0.0
        %2862 = vmatprep.subr.mxu0 0.0
        %2863 = vmatpush1.xpose.msra.mxu0 0.0
        %2864 = vmatprep.subr.mxu0 0.0
        %2865 = vmatpush1.xpose.msra.mxu0 0.0
        %2866 = vmatprep.subr.mxu0 0.0
        %2867 = vmatpush1.xpose.msra.mxu0 0.0
        %2868 = vmatprep.subr.mxu0 0.0
        %2869 = vmatpush1.xpose.msra.mxu0 0.0
        %2870 = vmatprep.subr.mxu0 0.0
        %2871 = vmatpush1.xpose.msra.mxu0 0.0
        %2872 = vmatprep.subr.mxu0 0.0
        %2873 = vmatpush1.xpose.msra.mxu0 0.0
        %2874 = vmatprep.subr.mxu0 0.0
        %2875 = vmatpush1.xpose.msra.mxu0 0.0
        %2876 = vmatprep.subr.mxu0 0.0
        %2877 = vmatpush1.xpose.msra.mxu0 0.0
        %2878 = vmatprep.subr.mxu0 0.0
        %2879 = vmatpush1.xpose.msra.mxu0 0.0
        %2880 = vmatprep.subr.mxu0 0.0
        %2881 = vmatpush1.xpose.msra.mxu0 0.0
        %2882 = vmatprep.subr.mxu0 0.0
        %2883 = vmatpush1.xpose.msra.mxu0 0.0
        %2884 = vmatprep.subr.mxu0 0.0
        %2885 = vmatpush1.xpose.msra.mxu0 0.0
        %2886 = vmatprep.subr.mxu0 0.0
        %2887 = vmatpush1.xpose.msra.mxu0 0.0
        %2888 = vmatprep.subr.mxu0 0.0
        %2889 = vmatpush1.xpose.msra.mxu0 0.0
        %2890 = vmatprep.subr.mxu0 0.0
        %2891 = vmatpush1.xpose.msra.mxu0 0.0
        %2892 = vmatprep.subr.mxu0 0.0
        %2893 = vmatpush1.xpose.msra.mxu0 0.0
        %2894 = vmatprep.subr.mxu0 0.0
        %2895 = vmatpush1.xpose.msra.mxu0 0.0
        %2896 = vmatprep.subr.mxu0 0.0
        %2897 = vmatpush1.xpose.msra.mxu0 0.0
        %2898 = vmatprep.subr.mxu0 0.0
        %2899 = vmatpush1.xpose.msra.mxu0 0.0
        %2900 = vmatprep.subr.mxu0 0.0
        %2901 = vmatpush1.xpose.msra.mxu0 0.0
        %2902 = vmatprep.subr.mxu0 0.0
        %2903 = vmatpush1.xpose.msra.mxu0 0.0
        %2904 = vmatprep.subr.mxu0 0.0
        %2905 = vmatpush1.xpose.msra.mxu0 0.0
        %2906 = vmatprep.subr.mxu0 0.0
        %2907 = vmatpush1.xpose.msra.mxu0 0.0
        %2908 = vmatprep.subr.mxu0 0.0
        %2909 = vmatpush1.xpose.msra.mxu0 0.0
        %2910 = vmatprep.mubr.f32.mxu0 0.0
        %2911 = vmatmul.mubr.f32.gmra.mrb[0].mxu0 %v2842
        %v2912 = vpop.f32.mrb[0].mxu0
        %v2913 = vadd.f32 0.0, %v2912
        %v2914 = vpop.f32.mrb[0].mxu0
        %2915 = vdwg.mxu0
        %2916 = vrot.lane.b32.xlu0 %v584, 104
        %v2917 = vpop.permute.xlu0 %2916
        %2918 = vrot.lane.b32.xlu0 %v692, 104
        %v2919 = vpop.permute.xlu0 %2918
        %v2920 = vsel %vm813, %v2917, 0
        %v2922 = vsel %vm813, %v2919, 0
        %2924 = vmatprep.subr.mxu0 0.0
        %2925 = vmatpush1.xpose.msra.mxu0 %v2922
        %2926 = vmatprep.subr.mxu0 0.0
        %2927 = vmatpush1.xpose.msra.mxu0 0.0
        %2928 = vmatprep.subr.mxu0 0.0
        %2929 = vmatpush1.xpose.msra.mxu0 0.0
        %2930 = vmatprep.subr.mxu0 0.0
        %2931 = vmatpush1.xpose.msra.mxu0 0.0
        %2932 = vmatprep.subr.mxu0 0.0
        %2933 = vmatpush1.xpose.msra.mxu0 0.0
        %2934 = vmatprep.subr.mxu0 0.0
        %2935 = vmatpush1.xpose.msra.mxu0 0.0
        %2936 = vmatprep.subr.mxu0 0.0
        %2937 = vmatpush1.xpose.msra.mxu0 0.0
        %2938 = vmatprep.subr.mxu0 0.0
        %2939 = vmatpush1.xpose.msra.mxu0 0.0
        %2940 = vmatprep.subr.mxu0 0.0
        %2941 = vmatpush1.xpose.msra.mxu0 0.0
        %2942 = vmatprep.subr.mxu0 0.0
        %2943 = vmatpush1.xpose.msra.mxu0 0.0
        %2944 = vmatprep.subr.mxu0 0.0
        %2945 = vmatpush1.xpose.msra.mxu0 0.0
        %2946 = vmatprep.subr.mxu0 0.0
        %2947 = vmatpush1.xpose.msra.mxu0 0.0
        %2948 = vmatprep.subr.mxu0 0.0
        %2949 = vmatpush1.xpose.msra.mxu0 0.0
        %2950 = vmatprep.subr.mxu0 0.0
        %2951 = vmatpush1.xpose.msra.mxu0 0.0
        %2952 = vmatprep.subr.mxu0 0.0
        %2953 = vmatpush1.xpose.msra.mxu0 0.0
        %2954 = vmatprep.subr.mxu0 0.0
        %2955 = vmatpush1.xpose.msra.mxu0 0.0
        %2956 = vmatprep.subr.mxu0 0.0
        %2957 = vmatpush1.xpose.msra.mxu0 0.0
        %2958 = vmatprep.subr.mxu0 0.0
        %2959 = vmatpush1.xpose.msra.mxu0 0.0
        %2960 = vmatprep.subr.mxu0 0.0
        %2961 = vmatpush1.xpose.msra.mxu0 0.0
        %2962 = vmatprep.subr.mxu0 0.0
        %2963 = vmatpush1.xpose.msra.mxu0 0.0
        %2964 = vmatprep.subr.mxu0 0.0
        %2965 = vmatpush1.xpose.msra.mxu0 0.0
        %2966 = vmatprep.subr.mxu0 0.0
        %2967 = vmatpush1.xpose.msra.mxu0 0.0
        %2968 = vmatprep.subr.mxu0 0.0
        %2969 = vmatpush1.xpose.msra.mxu0 0.0
        %2970 = vmatprep.subr.mxu0 0.0
        %2971 = vmatpush1.xpose.msra.mxu0 0.0
        %2972 = vmatprep.subr.mxu0 0.0
        %2973 = vmatpush1.xpose.msra.mxu0 0.0
        %2974 = vmatprep.subr.mxu0 0.0
        %2975 = vmatpush1.xpose.msra.mxu0 0.0
        %2976 = vmatprep.subr.mxu0 0.0
        %2977 = vmatpush1.xpose.msra.mxu0 0.0
        %2978 = vmatprep.subr.mxu0 0.0
        %2979 = vmatpush1.xpose.msra.mxu0 0.0
        %2980 = vmatprep.subr.mxu0 0.0
        %2981 = vmatpush1.xpose.msra.mxu0 0.0
        %2982 = vmatprep.subr.mxu0 0.0
        %2983 = vmatpush1.xpose.msra.mxu0 0.0
        %2984 = vmatprep.subr.mxu0 0.0
        %2985 = vmatpush1.xpose.msra.mxu0 0.0
        %2986 = vmatprep.subr.mxu0 0.0
        %2987 = vmatpush1.xpose.msra.mxu0 0.0
        %2988 = vmatprep.mubr.f32.mxu0 0.0
        %2989 = vmatmul.mubr.f32.gmra.mrb[0].mxu0 %v2920
        %v2990 = vpop.f32.mrb[0].mxu0
        %v2991 = vadd.f32 0.0, %v2990
        %v2992 = vpop.f32.mrb[0].mxu0
        %2993 = vdwg.mxu0
        %2994 = vrot.lane.b32.xlu0 %v589, 104
        %v2995 = vpop.permute.xlu0 %2994
        %2996 = vrot.lane.b32.xlu0 %v697, 104
        %v2997 = vpop.permute.xlu0 %2996
        %v2998 = vsel %vm813, %v2995, 0
        %v3000 = vsel %vm813, %v2997, 0
        %3002 = vmatprep.subr.mxu0 0.0
        %3003 = vmatpush1.xpose.msra.mxu0 %v3000
        %3004 = vmatprep.subr.mxu0 0.0
        %3005 = vmatpush1.xpose.msra.mxu0 0.0
        %3006 = vmatprep.subr.mxu0 0.0
        %3007 = vmatpush1.xpose.msra.mxu0 0.0
        %3008 = vmatprep.subr.mxu0 0.0
        %3009 = vmatpush1.xpose.msra.mxu0 0.0
        %3010 = vmatprep.subr.mxu0 0.0
        %3011 = vmatpush1.xpose.msra.mxu0 0.0
        %3012 = vmatprep.subr.mxu0 0.0
        %3013 = vmatpush1.xpose.msra.mxu0 0.0
        %3014 = vmatprep.subr.mxu0 0.0
        %3015 = vmatpush1.xpose.msra.mxu0 0.0
        %3016 = vmatprep.subr.mxu0 0.0
        %3017 = vmatpush1.xpose.msra.mxu0 0.0
        %3018 = vmatprep.subr.mxu0 0.0
        %3019 = vmatpush1.xpose.msra.mxu0 0.0
        %3020 = vmatprep.subr.mxu0 0.0
        %3021 = vmatpush1.xpose.msra.mxu0 0.0
        %3022 = vmatprep.subr.mxu0 0.0
        %3023 = vmatpush1.xpose.msra.mxu0 0.0
        %3024 = vmatprep.subr.mxu0 0.0
        %3025 = vmatpush1.xpose.msra.mxu0 0.0
        %3026 = vmatprep.subr.mxu0 0.0
        %3027 = vmatpush1.xpose.msra.mxu0 0.0
        %3028 = vmatprep.subr.mxu0 0.0
        %3029 = vmatpush1.xpose.msra.mxu0 0.0
        %3030 = vmatprep.subr.mxu0 0.0
        %3031 = vmatpush1.xpose.msra.mxu0 0.0
        %3032 = vmatprep.subr.mxu0 0.0
        %3033 = vmatpush1.xpose.msra.mxu0 0.0
        %3034 = vmatprep.subr.mxu0 0.0
        %3035 = vmatpush1.xpose.msra.mxu0 0.0
        %3036 = vmatprep.subr.mxu0 0.0
        %3037 = vmatpush1.xpose.msra.mxu0 0.0
        %3038 = vmatprep.subr.mxu0 0.0
        %3039 = vmatpush1.xpose.msra.mxu0 0.0
        %3040 = vmatprep.subr.mxu0 0.0
        %3041 = vmatpush1.xpose.msra.mxu0 0.0
        %3042 = vmatprep.subr.mxu0 0.0
        %3043 = vmatpush1.xpose.msra.mxu0 0.0
        %3044 = vmatprep.subr.mxu0 0.0
        %3045 = vmatpush1.xpose.msra.mxu0 0.0
        %3046 = vmatprep.subr.mxu0 0.0
        %3047 = vmatpush1.xpose.msra.mxu0 0.0
        %3048 = vmatprep.subr.mxu0 0.0
        %3049 = vmatpush1.xpose.msra.mxu0 0.0
        %3050 = vmatprep.subr.mxu0 0.0
        %3051 = vmatpush1.xpose.msra.mxu0 0.0
        %3052 = vmatprep.subr.mxu0 0.0
        %3053 = vmatpush1.xpose.msra.mxu0 0.0
        %3054 = vmatprep.subr.mxu0 0.0
        %3055 = vmatpush1.xpose.msra.mxu0 0.0
        %3056 = vmatprep.subr.mxu0 0.0
        %3057 = vmatpush1.xpose.msra.mxu0 0.0
        %3058 = vmatprep.subr.mxu0 0.0
        %3059 = vmatpush1.xpose.msra.mxu0 0.0
        %3060 = vmatprep.subr.mxu0 0.0
        %3061 = vmatpush1.xpose.msra.mxu0 0.0
        %3062 = vmatprep.subr.mxu0 0.0
        %3063 = vmatpush1.xpose.msra.mxu0 0.0
        %3064 = vmatprep.subr.mxu0 0.0
        %3065 = vmatpush1.xpose.msra.mxu0 0.0
        %3066 = vmatprep.mubr.f32.mxu0 0.0
        %3067 = vmatmul.mubr.f32.gmra.mrb[0].mxu0 %v2998
        %v3068 = vpop.f32.mrb[0].mxu0
        %v3069 = vadd.f32 0.0, %v3068
        %v3070 = vpop.f32.mrb[0].mxu0
        %3071 = vdwg.mxu0
        %3072 = vrot.lane.b32.xlu0 %v594, 104
        %v3073 = vpop.permute.xlu0 %3072
        %3074 = vrot.lane.b32.xlu0 %v702, 104
        %v3075 = vpop.permute.xlu0 %3074
        %v3076 = vsel %vm813, %v3073, 0
        %v3078 = vsel %vm813, %v3075, 0
        %3080 = vmatprep.subr.mxu0 0.0
        %3081 = vmatpush1.xpose.msra.mxu0 %v3078
        %3082 = vmatprep.subr.mxu0 0.0
        %3083 = vmatpush1.xpose.msra.mxu0 0.0
        %3084 = vmatprep.subr.mxu0 0.0
        %3085 = vmatpush1.xpose.msra.mxu0 0.0
        %3086 = vmatprep.subr.mxu0 0.0
        %3087 = vmatpush1.xpose.msra.mxu0 0.0
        %3088 = vmatprep.subr.mxu0 0.0
        %3089 = vmatpush1.xpose.msra.mxu0 0.0
        %3090 = vmatprep.subr.mxu0 0.0
        %3091 = vmatpush1.xpose.msra.mxu0 0.0
        %3092 = vmatprep.subr.mxu0 0.0
        %3093 = vmatpush1.xpose.msra.mxu0 0.0
        %3094 = vmatprep.subr.mxu0 0.0
        %3095 = vmatpush1.xpose.msra.mxu0 0.0
        %3096 = vmatprep.subr.mxu0 0.0
        %3097 = vmatpush1.xpose.msra.mxu0 0.0
        %3098 = vmatprep.subr.mxu0 0.0
        %3099 = vmatpush1.xpose.msra.mxu0 0.0
        %3100 = vmatprep.subr.mxu0 0.0
        %3101 = vmatpush1.xpose.msra.mxu0 0.0
        %3102 = vmatprep.subr.mxu0 0.0
        %3103 = vmatpush1.xpose.msra.mxu0 0.0
        %3104 = vmatprep.subr.mxu0 0.0
        %3105 = vmatpush1.xpose.msra.mxu0 0.0
        %3106 = vmatprep.subr.mxu0 0.0
        %3107 = vmatpush1.xpose.msra.mxu0 0.0
        %3108 = vmatprep.subr.mxu0 0.0
        %3109 = vmatpush1.xpose.msra.mxu0 0.0
        %3110 = vmatprep.subr.mxu0 0.0
        %3111 = vmatpush1.xpose.msra.mxu0 0.0
        %3112 = vmatprep.subr.mxu0 0.0
        %3113 = vmatpush1.xpose.msra.mxu0 0.0
        %3114 = vmatprep.subr.mxu0 0.0
        %3115 = vmatpush1.xpose.msra.mxu0 0.0
        %3116 = vmatprep.subr.mxu0 0.0
        %3117 = vmatpush1.xpose.msra.mxu0 0.0
        %3118 = vmatprep.subr.mxu0 0.0
        %3119 = vmatpush1.xpose.msra.mxu0 0.0
        %3120 = vmatprep.subr.mxu0 0.0
        %3121 = vmatpush1.xpose.msra.mxu0 0.0
        %3122 = vmatprep.subr.mxu0 0.0
        %3123 = vmatpush1.xpose.msra.mxu0 0.0
        %3124 = vmatprep.subr.mxu0 0.0
        %3125 = vmatpush1.xpose.msra.mxu0 0.0
        %3126 = vmatprep.subr.mxu0 0.0
        %3127 = vmatpush1.xpose.msra.mxu0 0.0
        %3128 = vmatprep.subr.mxu0 0.0
        %3129 = vmatpush1.xpose.msra.mxu0 0.0
        %3130 = vmatprep.subr.mxu0 0.0
        %3131 = vmatpush1.xpose.msra.mxu0 0.0
        %3132 = vmatprep.subr.mxu0 0.0
        %3133 = vmatpush1.xpose.msra.mxu0 0.0
        %3134 = vmatprep.subr.mxu0 0.0
        %3135 = vmatpush1.xpose.msra.mxu0 0.0
        %3136 = vmatprep.subr.mxu0 0.0
        %3137 = vmatpush1.xpose.msra.mxu0 0.0
        %3138 = vmatprep.subr.mxu0 0.0
        %3139 = vmatpush1.xpose.msra.mxu0 0.0
        %3140 = vmatprep.subr.mxu0 0.0
        %3141 = vmatpush1.xpose.msra.mxu0 0.0
        %3142 = vmatprep.subr.mxu0 0.0
        %3143 = vmatpush1.xpose.msra.mxu0 0.0
        %3144 = vmatprep.mubr.f32.mxu0 0.0
        %3145 = vmatmul.mubr.f32.gmra.mrb[0].mxu0 %v3076
        %v3146 = vpop.f32.mrb[0].mxu0
        %v3147 = vadd.f32 0.0, %v3146
        %v3148 = vpop.f32.mrb[0].mxu0
        %3149 = vdwg.mxu0
        %v3150 = vsel %vm813, %v2913, -inf
        %3151 = vmax.xlane.f32.xlu0 %v3150
        %v3152 = vpop.xlane.xlu0 %3151
        %v3153 = vsel %vm813, %v2991, -inf
        %3154 = vmax.xlane.f32.xlu0 %v3153
        %v3155 = vpop.xlane.xlu0 %3154
        %v3156 = vsel %vm813, %v3069, -inf
        %3157 = vmax.xlane.f32.xlu0 %v3156
        %v3158 = vpop.xlane.xlu0 %3157
        %v3159 = vsel %vm813, %v3147, -inf
        %3160 = vmax.xlane.f32.xlu0 %v3159
        %v3161 = vpop.xlane.xlu0 %3160
        %v3162 = vmax.f32 %v3152, 0.0
        %v3163 = vmax.f32 %v3155, 0.0
        %v3164 = vmax.f32 %v3158, 0.0
        %v3165 = vmax.f32 %v3161, 0.0
        %v3166 = vsub.f32 %v2913, %v3162
        %v3167 = vsub.f32 %v2991, %v3163
        %v3168 = vsub.f32 %v3069, %v3164
        %v3169 = vsub.f32 %v3147, %v3165
        %v3170 = vmul.f32 %v3166, 1.442695
        %v3171 = vpow.pop %v3170
        %v3172 = vmul.f32 %v3167, 1.442695
        %v3173 = vpow.pop %v3172
        %v3174 = vmul.f32 %v3168, 1.442695
        %v3175 = vpow.pop %v3174
        %v3176 = vmul.f32 %v3169, 1.442695
        %v3177 = vpow.pop %v3176
        %v3178 = vsel %vm813, %v3171, 0.0
        %3179 = vadd.xlane.f32.xlu0 %v3178
        %v3180 = vpop.xlane.xlu0 %3179
        %v3181 = vsel %vm813, %v3173, 0.0
        %3182 = vadd.xlane.f32.xlu0 %v3181
        %v3183 = vpop.xlane.xlu0 %3182
        %v3184 = vsel %vm813, %v3175, 0.0
        %3185 = vadd.xlane.f32.xlu0 %v3184
        %v3186 = vpop.xlane.xlu0 %3185
        %v3187 = vsel %vm813, %v3177, 0.0
        %3188 = vadd.xlane.f32.xlu0 %v3187
        %v3189 = vpop.xlane.xlu0 %3188
        %v3190 = vsub.f32 0.0, %v3162
        %v3191 = vsub.f32 0.0, %v3163
        %v3192 = vsub.f32 0.0, %v3164
        %v3193 = vsub.f32 0.0, %v3165
        %v3194 = vmul.f32 %v3190, 1.442695
        %v3195 = vpow.pop %v3194
        %v3196 = vmul.f32 %v3191, 1.442695
        %v3197 = vpow.pop %v3196
        %v3198 = vmul.f32 %v3192, 1.442695
        %v3199 = vpow.pop %v3198
        %v3200 = vmul.f32 %v3193, 1.442695
        %v3201 = vpow.pop %v3200
        %v3202 = vadd.f32 %v3180, %v3195
        %v3203 = vadd.f32 %v3183, %v3197
        %v3204 = vadd.f32 %v3186, %v3199
        %v3205 = vadd.f32 %v3189, %v3201
        %v3206 = vrcp.pop %v3202
        %v3207 = vrcp.pop %v3203
        %v3208 = vrcp.pop %v3204
        %v3209 = vrcp.pop %v3205
        %v3210 = vmul.f32 %v3171, %v3206
        %v3211 = vmul.f32 %v3173, %v3207
        %v3212 = vmul.f32 %v3175, %v3208
        %v3213 = vmul.f32 %v3177, %v3209
        %3214 = vrot.lane.b32.xlu0 %v795, 104
        %v3215 = vpop.permute.xlu0 %3214
        %v3218 = vsel %vm813, %v3210, 0
        %3220 = vmatprep.subr.mxu0 0.0
        %3221 = vmatpush1.msra.mxu0 %v3215
        %3222 = vmatprep.subr.mxu0 0.0
        %3223 = vmatpush1.msra.mxu0 0.0
        %3224 = vmatprep.subr.mxu0 0.0
        %3225 = vmatpush1.msra.mxu0 0.0
        %3226 = vmatprep.subr.mxu0 0.0
        %3227 = vmatpush1.msra.mxu0 0.0
        %3228 = vmatprep.subr.mxu0 0.0
        %3229 = vmatpush1.msra.mxu0 0.0
        %3230 = vmatprep.subr.mxu0 0.0
        %3231 = vmatpush1.msra.mxu0 0.0
        %3232 = vmatprep.subr.mxu0 0.0
        %3233 = vmatpush1.msra.mxu0 0.0
        %3234 = vmatprep.subr.mxu0 0.0
        %3235 = vmatpush1.msra.mxu0 0.0
        %3236 = vmatprep.subr.mxu0 0.0
        %3237 = vmatpush1.msra.mxu0 0.0
        %3238 = vmatprep.subr.mxu0 0.0
        %3239 = vmatpush1.msra.mxu0 0.0
        %3240 = vmatprep.subr.mxu0 0.0
        %3241 = vmatpush1.msra.mxu0 0.0
        %3242 = vmatprep.subr.mxu0 0.0
        %3243 = vmatpush1.msra.mxu0 0.0
        %3244 = vmatprep.subr.mxu0 0.0
        %3245 = vmatpush1.msra.mxu0 0.0
        %3246 = vmatprep.subr.mxu0 0.0
        %3247 = vmatpush1.msra.mxu0 0.0
        %3248 = vmatprep.subr.mxu0 0.0
        %3249 = vmatpush1.msra.mxu0 0.0
        %3250 = vmatprep.subr.mxu0 0.0
        %3251 = vmatpush1.msra.mxu0 0.0
        %3252 = vmatprep.subr.mxu0 0.0
        %3253 = vmatpush1.msra.mxu0 0.0
        %3254 = vmatprep.subr.mxu0 0.0
        %3255 = vmatpush1.msra.mxu0 0.0
        %3256 = vmatprep.subr.mxu0 0.0
        %3257 = vmatpush1.msra.mxu0 0.0
        %3258 = vmatprep.subr.mxu0 0.0
        %3259 = vmatpush1.msra.mxu0 0.0
        %3260 = vmatprep.subr.mxu0 0.0
        %3261 = vmatpush1.msra.mxu0 0.0
        %3262 = vmatprep.subr.mxu0 0.0
        %3263 = vmatpush1.msra.mxu0 0.0
        %3264 = vmatprep.subr.mxu0 0.0
        %3265 = vmatpush1.msra.mxu0 0.0
        %3266 = vmatprep.subr.mxu0 0.0
        %3267 = vmatpush1.msra.mxu0 0.0
        %3268 = vmatprep.subr.mxu0 0.0
        %3269 = vmatpush1.msra.mxu0 0.0
        %3270 = vmatprep.subr.mxu0 0.0
        %3271 = vmatpush1.msra.mxu0 0.0
        %3272 = vmatprep.subr.mxu0 0.0
        %3273 = vmatpush1.msra.mxu0 0.0
        %3274 = vmatprep.subr.mxu0 0.0
        %3275 = vmatpush1.msra.mxu0 0.0
        %3276 = vmatprep.subr.mxu0 0.0
        %3277 = vmatpush1.msra.mxu0 0.0
        %3278 = vmatprep.subr.mxu0 0.0
        %3279 = vmatpush1.msra.mxu0 0.0
        %3280 = vmatprep.subr.mxu0 0.0
        %3281 = vmatpush1.msra.mxu0 0.0
        %3282 = vmatprep.subr.mxu0 0.0
        %3283 = vmatpush1.msra.mxu0 0.0
        %3284 = vmatprep.mubr.f32.mxu0 0.0
        %3285 = vmatmul.mubr.f32.gmra.mrb[0].mxu0 %v3218
        %v3286 = vpop.f32.mrb[0].mxu0
        %v3287 = vadd.f32 0.0, %v3286
        %v3288 = vpop.f32.mrb[0].mxu0
        %3289 = vdwg.mxu0
        %3290 = vrot.lane.b32.xlu0 %v800, 104
        %v3291 = vpop.permute.xlu0 %3290
        %v3294 = vsel %vm813, %v3211, 0
        %3296 = vmatprep.subr.mxu0 0.0
        %3297 = vmatpush1.msra.mxu0 %v3291
        %3298 = vmatprep.subr.mxu0 0.0
        %3299 = vmatpush1.msra.mxu0 0.0
        %3300 = vmatprep.subr.mxu0 0.0
        %3301 = vmatpush1.msra.mxu0 0.0
        %3302 = vmatprep.subr.mxu0 0.0
        %3303 = vmatpush1.msra.mxu0 0.0
        %3304 = vmatprep.subr.mxu0 0.0
        %3305 = vmatpush1.msra.mxu0 0.0
        %3306 = vmatprep.subr.mxu0 0.0
        %3307 = vmatpush1.msra.mxu0 0.0
        %3308 = vmatprep.subr.mxu0 0.0
        %3309 = vmatpush1.msra.mxu0 0.0
        %3310 = vmatprep.subr.mxu0 0.0
        %3311 = vmatpush1.msra.mxu0 0.0
        %3312 = vmatprep.subr.mxu0 0.0
        %3313 = vmatpush1.msra.mxu0 0.0
        %3314 = vmatprep.subr.mxu0 0.0
        %3315 = vmatpush1.msra.mxu0 0.0
        %3316 = vmatprep.subr.mxu0 0.0
        %3317 = vmatpush1.msra.mxu0 0.0
        %3318 = vmatprep.subr.mxu0 0.0
        %3319 = vmatpush1.msra.mxu0 0.0
        %3320 = vmatprep.subr.mxu0 0.0
        %3321 = vmatpush1.msra.mxu0 0.0
        %3322 = vmatprep.subr.mxu0 0.0
        %3323 = vmatpush1.msra.mxu0 0.0
        %3324 = vmatprep.subr.mxu0 0.0
        %3325 = vmatpush1.msra.mxu0 0.0
        %3326 = vmatprep.subr.mxu0 0.0
        %3327 = vmatpush1.msra.mxu0 0.0
        %3328 = vmatprep.subr.mxu0 0.0
        %3329 = vmatpush1.msra.mxu0 0.0
        %3330 = vmatprep.subr.mxu0 0.0
        %3331 = vmatpush1.msra.mxu0 0.0
        %3332 = vmatprep.subr.mxu0 0.0
        %3333 = vmatpush1.msra.mxu0 0.0
        %3334 = vmatprep.subr.mxu0 0.0
        %3335 = vmatpush1.msra.mxu0 0.0
        %3336 = vmatprep.subr.mxu0 0.0
        %3337 = vmatpush1.msra.mxu0 0.0
        %3338 = vmatprep.subr.mxu0 0.0
        %3339 = vmatpush1.msra.mxu0 0.0
        %3340 = vmatprep.subr.mxu0 0.0
        %3341 = vmatpush1.msra.mxu0 0.0
        %3342 = vmatprep.subr.mxu0 0.0
        %3343 = vmatpush1.msra.mxu0 0.0
        %3344 = vmatprep.subr.mxu0 0.0
        %3345 = vmatpush1.msra.mxu0 0.0
        %3346 = vmatprep.subr.mxu0 0.0
        %3347 = vmatpush1.msra.mxu0 0.0
        %3348 = vmatprep.subr.mxu0 0.0
        %3349 = vmatpush1.msra.mxu0 0.0
        %3350 = vmatprep.subr.mxu0 0.0
        %3351 = vmatpush1.msra.mxu0 0.0
        %3352 = vmatprep.subr.mxu0 0.0
        %3353 = vmatpush1.msra.mxu0 0.0
        %3354 = vmatprep.subr.mxu0 0.0
        %3355 = vmatpush1.msra.mxu0 0.0
        %3356 = vmatprep.subr.mxu0 0.0
        %3357 = vmatpush1.msra.mxu0 0.0
        %3358 = vmatprep.subr.mxu0 0.0
        %3359 = vmatpush1.msra.mxu0 0.0
        %3360 = vmatprep.mubr.f32.mxu0 0.0
        %3361 = vmatmul.mubr.f32.gmra.mrb[0].mxu0 %v3294
        %v3362 = vpop.f32.mrb[0].mxu0
        %v3363 = vadd.f32 0.0, %v3362
        %v3364 = vpop.f32.mrb[0].mxu0
        %3365 = vdwg.mxu0
        %3366 = vrot.lane.b32.xlu0 %v805, 104
        %v3367 = vpop.permute.xlu0 %3366
        %v3370 = vsel %vm813, %v3212, 0
        %3372 = vmatprep.subr.mxu0 0.0
        %3373 = vmatpush1.msra.mxu0 %v3367
        %3374 = vmatprep.subr.mxu0 0.0
        %3375 = vmatpush1.msra.mxu0 0.0
        %3376 = vmatprep.subr.mxu0 0.0
        %3377 = vmatpush1.msra.mxu0 0.0
        %3378 = vmatprep.subr.mxu0 0.0
        %3379 = vmatpush1.msra.mxu0 0.0
        %3380 = vmatprep.subr.mxu0 0.0
        %3381 = vmatpush1.msra.mxu0 0.0
        %3382 = vmatprep.subr.mxu0 0.0
        %3383 = vmatpush1.msra.mxu0 0.0
        %3384 = vmatprep.subr.mxu0 0.0
        %3385 = vmatpush1.msra.mxu0 0.0
        %3386 = vmatprep.subr.mxu0 0.0
        %3387 = vmatpush1.msra.mxu0 0.0
        %3388 = vmatprep.subr.mxu0 0.0
        %3389 = vmatpush1.msra.mxu0 0.0
        %3390 = vmatprep.subr.mxu0 0.0
        %3391 = vmatpush1.msra.mxu0 0.0
        %3392 = vmatprep.subr.mxu0 0.0
        %3393 = vmatpush1.msra.mxu0 0.0
        %3394 = vmatprep.subr.mxu0 0.0
        %3395 = vmatpush1.msra.mxu0 0.0
        %3396 = vmatprep.subr.mxu0 0.0
        %3397 = vmatpush1.msra.mxu0 0.0
        %3398 = vmatprep.subr.mxu0 0.0
        %3399 = vmatpush1.msra.mxu0 0.0
        %3400 = vmatprep.subr.mxu0 0.0
        %3401 = vmatpush1.msra.mxu0 0.0
        %3402 = vmatprep.subr.mxu0 0.0
        %3403 = vmatpush1.msra.mxu0 0.0
        %3404 = vmatprep.subr.mxu0 0.0
        %3405 = vmatpush1.msra.mxu0 0.0
        %3406 = vmatprep.subr.mxu0 0.0
        %3407 = vmatpush1.msra.mxu0 0.0
        %3408 = vmatprep.subr.mxu0 0.0
        %3409 = vmatpush1.msra.mxu0 0.0
        %3410 = vmatprep.subr.mxu0 0.0
        %3411 = vmatpush1.msra.mxu0 0.0
        %3412 = vmatprep.subr.mxu0 0.0
        %3413 = vmatpush1.msra.mxu0 0.0
        %3414 = vmatprep.subr.mxu0 0.0
        %3415 = vmatpush1.msra.mxu0 0.0
        %3416 = vmatprep.subr.mxu0 0.0
        %3417 = vmatpush1.msra.mxu0 0.0
        %3418 = vmatprep.subr.mxu0 0.0
        %3419 = vmatpush1.msra.mxu0 0.0
        %3420 = vmatprep.subr.mxu0 0.0
        %3421 = vmatpush1.msra.mxu0 0.0
        %3422 = vmatprep.subr.mxu0 0.0
        %3423 = vmatpush1.msra.mxu0 0.0
        %3424 = vmatprep.subr.mxu0 0.0
        %3425 = vmatpush1.msra.mxu0 0.0
        %3426 = vmatprep.subr.mxu0 0.0
        %3427 = vmatpush1.msra.mxu0 0.0
        %3428 = vmatprep.subr.mxu0 0.0
        %3429 = vmatpush1.msra.mxu0 0.0
        %3430 = vmatprep.subr.mxu0 0.0
        %3431 = vmatpush1.msra.mxu0 0.0
        %3432 = vmatprep.subr.mxu0 0.0
        %3433 = vmatpush1.msra.mxu0 0.0
        %3434 = vmatprep.subr.mxu0 0.0
        %3435 = vmatpush1.msra.mxu0 0.0
        %3436 = vmatprep.mubr.f32.mxu0 0.0
        %3437 = vmatmul.mubr.f32.gmra.mrb[0].mxu0 %v3370
        %v3438 = vpop.f32.mrb[0].mxu0
        %v3439 = vadd.f32 0.0, %v3438
        %v3440 = vpop.f32.mrb[0].mxu0
        %3441 = vdwg.mxu0
        %3442 = vrot.lane.b32.xlu0 %v810, 104
        %v3443 = vpop.permute.xlu0 %3442
        %v3446 = vsel %vm813, %v3213, 0
        %3448 = vmatprep.subr.mxu0 0.0
        %3449 = vmatpush1.msra.mxu0 %v3443
        %3450 = vmatprep.subr.mxu0 0.0
        %3451 = vmatpush1.msra.mxu0 0.0
        %3452 = vmatprep.subr.mxu0 0.0
        %3453 = vmatpush1.msra.mxu0 0.0
        %3454 = vmatprep.subr.mxu0 0.0
        %3455 = vmatpush1.msra.mxu0 0.0
        %3456 = vmatprep.subr.mxu0 0.0
        %3457 = vmatpush1.msra.mxu0 0.0
        %3458 = vmatprep.subr.mxu0 0.0
        %3459 = vmatpush1.msra.mxu0 0.0
        %3460 = vmatprep.subr.mxu0 0.0
        %3461 = vmatpush1.msra.mxu0 0.0
        %3462 = vmatprep.subr.mxu0 0.0
        %3463 = vmatpush1.msra.mxu0 0.0
        %3464 = vmatprep.subr.mxu0 0.0
        %3465 = vmatpush1.msra.mxu0 0.0
        %3466 = vmatprep.subr.mxu0 0.0
        %3467 = vmatpush1.msra.mxu0 0.0
        %3468 = vmatprep.subr.mxu0 0.0
        %3469 = vmatpush1.msra.mxu0 0.0
        %3470 = vmatprep.subr.mxu0 0.0
        %3471 = vmatpush1.msra.mxu0 0.0
        %3472 = vmatprep.subr.mxu0 0.0
        %3473 = vmatpush1.msra.mxu0 0.0
        %3474 = vmatprep.subr.mxu0 0.0
        %3475 = vmatpush1.msra.mxu0 0.0
        %3476 = vmatprep.subr.mxu0 0.0
        %3477 = vmatpush1.msra.mxu0 0.0
        %3478 = vmatprep.subr.mxu0 0.0
        %3479 = vmatpush1.msra.mxu0 0.0
        %3480 = vmatprep.subr.mxu0 0.0
        %3481 = vmatpush1.msra.mxu0 0.0
        %3482 = vmatprep.subr.mxu0 0.0
        %3483 = vmatpush1.msra.mxu0 0.0
        %3484 = vmatprep.subr.mxu0 0.0
        %3485 = vmatpush1.msra.mxu0 0.0
        %3486 = vmatprep.subr.mxu0 0.0
        %3487 = vmatpush1.msra.mxu0 0.0
        %3488 = vmatprep.subr.mxu0 0.0
        %3489 = vmatpush1.msra.mxu0 0.0
        %3490 = vmatprep.subr.mxu0 0.0
        %3491 = vmatpush1.msra.mxu0 0.0
        %3492 = vmatprep.subr.mxu0 0.0
        %3493 = vmatpush1.msra.mxu0 0.0
        %3494 = vmatprep.subr.mxu0 0.0
        %3495 = vmatpush1.msra.mxu0 0.0
        %3496 = vmatprep.subr.mxu0 0.0
        %3497 = vmatpush1.msra.mxu0 0.0
        %3498 = vmatprep.subr.mxu0 0.0
        %3499 = vmatpush1.msra.mxu0 0.0
        %3500 = vmatprep.subr.mxu0 0.0
        %3501 = vmatpush1.msra.mxu0 0.0
        %3502 = vmatprep.subr.mxu0 0.0
        %3503 = vmatpush1.msra.mxu0 0.0
        %3504 = vmatprep.subr.mxu0 0.0
        %3505 = vmatpush1.msra.mxu0 0.0
        %3506 = vmatprep.subr.mxu0 0.0
        %3507 = vmatpush1.msra.mxu0 0.0
        %3508 = vmatprep.subr.mxu0 0.0
        %3509 = vmatpush1.msra.mxu0 0.0
        %3510 = vmatprep.subr.mxu0 0.0
        %3511 = vmatpush1.msra.mxu0 0.0
        %3512 = vmatprep.mubr.f32.mxu0 0.0
        %3513 = vmatmul.mubr.f32.gmra.mrb[0].mxu0 %v3446
        %v3514 = vpop.f32.mrb[0].mxu0
        %v3515 = vadd.f32 0.0, %v3514
        %v3516 = vpop.f32.mrb[0].mxu0
        %3517 = vdwg.mxu0
        %3522 = vrot.lane.b32.xlu0 %v1924, 8
        %v3523 = vpop.permute.xlu0 %3522
        %3524 = vrot.lane.b32.xlu0 %v2001, 8
        %v3525 = vpop.permute.xlu0 %3524
        %3526 = vrot.lane.b32.xlu0 %v2078, 8
        %v3527 = vpop.permute.xlu0 %3526
        %3528 = vrot.lane.b32.xlu0 %v2155, 8
        %v3529 = vpop.permute.xlu0 %3528
        %3538 = vrot.lane.b32.xlu0 %v2607, 16
        %v3539 = vpop.permute.xlu0 %3538
        %3540 = vrot.lane.b32.xlu0 %v2683, 16
        %v3541 = vpop.permute.xlu0 %3540
        %3542 = vrot.lane.b32.xlu0 %v2759, 16
        %v3543 = vpop.permute.xlu0 %3542
        %3544 = vrot.lane.b32.xlu0 %v2835, 16
        %v3545 = vpop.permute.xlu0 %3544
        %3554 = vrot.lane.b32.xlu0 %v3287, 24
        %v3555 = vpop.permute.xlu0 %3554
        %3556 = vrot.lane.b32.xlu0 %v3363, 24
        %v3557 = vpop.permute.xlu0 %3556
        %3558 = vrot.lane.b32.xlu0 %v3439, 24
        %v3559 = vpop.permute.xlu0 %3558
        %3560 = vrot.lane.b32.xlu0 %v3515, 24
        %v3561 = vpop.permute.xlu0 %3560
        %v3566 = vsel %vm813, %v1252, %v3523
        %v3567 = vsel %vm813, %v1325, %v3525
        %v3568 = vsel %vm813, %v1398, %v3527
        %v3569 = vsel %vm813, %v1471, %v3529
        %vm3570 = vcmask 130048
        %v3571 = vsel %vm3570, %v3566, %v3539
        %v3572 = vsel %vm3570, %v3567, %v3541
        %v3573 = vsel %vm3570, %v3568, %v3543
        %v3574 = vsel %vm3570, %v3569, %v3545
        %vm3575 = vcmask 195584
        %v3576 = vsel %vm3575, %v3571, %v3555
        %v3577 = vsel %vm3575, %v3572, %v3557
        %v3578 = vsel %vm3575, %v3573, %v3559
        %v3579 = vsel %vm3575, %v3574, %v3561
        %3580 = vst.msk [vmem:[%s471] sm:$0xff] %vm499, %v3576
        %3581 = vst.msk [vmem:[%s471 + $0x8] sm:$0xff] %vm499, %v3577
        %3582 = vst.msk [vmem:[%s471 + $0x10] sm:$0xff] %vm499, %v3578
        %3583 = vst.msk [vmem:[%s471 + $0x18] sm:$0xff] %vm499, %v3579
        %s3584 = sand.u32 %s243, 1
        %s3585 = scalar_lea.sflag [#allocation4], %s3584
        %s3586 = sand.u32 %s243, 1
        %s3587 = smul.addr %s3586, 32
        %s3588 = scalar_lea.vmem [#allocation13], %s3587
        // Predicated region
        $region81: #{tpu_custom_call.1} parent=55 // pred_check
          %p3589 = pneg %p253
        $region82: #{tpu_custom_call.1} parent=55 // pred_check_branch
          %3591 = sbr.rel (%p3589) target = $region84
        $region83: #{tpu_custom_call.1} parent=55 // pred_region
          %s3592 = smul.u32 4, %s31
          %s3594 = ssub.s32 512, 512
          %3595 = vsyncadd %s3585, %s3594
          %s3596 = smul.addr %s3592, 128
          %s3597 = scalar_lea.hbm %s9, %s3596
          %s3598 = sshll.u32 %s3588, 4
          %s3599 = int_to_ptr.vmem [resolvable:$true] %s3598
          %3604 = dma.vmem_to_hbm [thread:$0]  %s3599, 512, %s3597, %s3585, 128, 128, 8
        $region84: #{tpu_custom_call.1} parent=55 // pred_fallthru
          _
      $region56: #{tpu_custom_call.1} parent=5 // pred_fallthru
        _
      %p3605 = scmp.le.s32.totalorder 2, %s26
      // Predicated region
      $region85: #{tpu_custom_call.1} parent=5 // pred_check
        %p3606 = pneg %p3605
      $region86: #{tpu_custom_call.1} parent=5 // pred_check_branch
        %3608 = sbr.rel (%p3606) target = $region88
      $region87: #{tpu_custom_call.1} parent=5 // pred_region
        %s3609 = ssub.s32 %s26, 2
        // Predicated region
        $region89: #{tpu_custom_call.1} parent=87 // pred_check
          %p3610 = pneg %p259
        $region90: #{tpu_custom_call.1} parent=87 // pred_check_branch
          %3612 = sbr.rel (%p3610) target = $region92
        $region91: #{tpu_custom_call.1} parent=87 // pred_region
          %s3613 = sand.u32 %s244, 1
          %s3614 = scalar_lea.sflag [#allocation4], %s3613
          %s3615 = sand.u32 %s244, 1
          %s3616 = smul.addr %s3615, 32
          %s3617 = scalar_lea.vmem [#allocation13], %s3616
          %3618 = dma.done %s3614, 512
        $region92: #{tpu_custom_call.1} parent=87 // pred_fallthru
          _
      $region88: #{tpu_custom_call.1} parent=5 // pred_fallthru
        _
    $region6: #{tpu_custom_call.1} parent=1 // loop_footer
      %s30 = sadd.s32 1, %s26
    $region7: #{tpu_custom_call.1} parent=1 // loop_footer_branch
      %25 = sbr.rel target = $region3
    $region8: #{tpu_custom_call.1} parent=1 // loop_exit
      _
    %3619 = vsyncpa [#allocation3], 1
    %s3620 = scalar_lea.sflag [#allocation3], 1
    %3621 = vsyncpa %s3620, 1
    %3622 = vsyncpa [#allocation6], 1
    %s3623 = scalar_lea.sflag [#allocation6], 1
    %3624 = vsyncpa %s3623, 1
    %3625 = vsyncpa [#allocation9], 1
    %3626 = vsyncpa [#allocation12], 1
    %3627 = vsyncpa [#allocation4], 1
    %s3628 = scalar_lea.sflag [#allocation4], 1
    %3629 = vsyncpa %s3628, 1

</llo_original>
